<compile_context>
chip_gen: v5e
topology: v5e:2x2
jax: 0.10.0
libtpu: 0.0.40
codegen_flags: <defaults>
</compile_context>

<pallas_src>
import functools
import math

import jax
import jax.numpy as jnp
from jax import lax
from jax.experimental import pallas as pl
from jax.experimental.pallas import tpu as pltpu


# --------------------------- in-kernel helpers ------------------------------

_GELU_C = math.sqrt(2.0 / math.pi)


def _gelu_tanh(x):
    # tanh-approximate GELU -> transcendental goes to the EUP slot.
    return 0.5 * x * (1.0 + jnp.tanh(_GELU_C * (x + 0.044715 * x * x * x)))


def _layernorm(x, g, b, eps=1e-5):            # torch LayerNorm (eps=1e-5)
    mean = jnp.mean(x, axis=-1, keepdims=True)
    var = jnp.mean((x - mean) ** 2, axis=-1, keepdims=True)
    return (x - mean) * lax.rsqrt(var + eps) * g + b


def _softmax_rows(s):
    m = jnp.max(s, axis=-1, keepdims=True)
    p = jnp.exp(s - m)
    return p * pl.reciprocal(jnp.sum(p, axis=-1, keepdims=True), approx=True)


def _mh_attention(q, k, v, n_heads, scale):
    """Multi-head attention core.  q: [L, D], k/v: [S, D] -> [L, D].

    Per-head score/PV matmuls; head outputs are concatenated on the lane axis
    (they already live on contiguous lane slices).  The output projection is
    applied by the caller as ONE [*, D] x [D, D] matmul over all rows.
    kT is never materialized: dot_general contracts the last dims directly.
    """
    D = q.shape[-1]
    E = D // n_heads
    dn = (((1,), (1,)), ((), ()))
    outs = []
    for h in range(n_heads):
        lo = h * E
        qh, kh, vh = q[:, lo:lo + E], k[:, lo:lo + E], v[:, lo:lo + E]
        s = lax.dot_general(qh, kh, dn, preferred_element_type=jnp.float32) * scale
        p = _softmax_rows(s)
        outs.append(jnp.dot(p, vh, preferred_element_type=jnp.float32))
    return jnp.concatenate(outs, axis=1)


# ------------------------------ fused kernel --------------------------------

def _decoder_layer_kernel(
        x_ref, cross_ref,
        wqkv_s_ref, bqkv_s_ref, wo_s_ref, bo_s_ref,
        wq_c_ref, bq_c_ref, wkv_c_ref, bkv_c_ref, wo_c_ref, bo_c_ref,
        n1_g_ref, n1_b_ref, n2_g_ref, n2_b_ref, n3_g_ref, n3_b_ref,
        w1_ref, b1_ref, w2_ref, b2_ref,
        out_ref, *, b_blk, T, S, n_heads, activation):
    """One grid step = one layer applied to one batch block (all of it)."""
    layer = pl.program_id(1)

    # Seed the layer-carried activation from the input on the first layer.
    @pl.when(layer == 0)
    def _():
        out_ref[...] = x_ref[...]

    x = out_ref[...]                               # [b_blk*T, D]
    N, D = x.shape
    E = D // n_heads
    scale = 1.0 / math.sqrt(E)                     # FullAttention default scale
    act = _gelu_tanh if activation == 'gelu' else (lambda v: jnp.maximum(v, 0.0))

    # ---- self-attention: one fused [D, 3D] QKV matmul over all batch rows ----
    qkv = jnp.dot(x, wqkv_s_ref[0],
                  preferred_element_type=jnp.float32) + bqkv_s_ref[0]   # [N, 3D]
    per_batch = []
    for b in range(b_blk):                         # batches must not mix
        r0 = b * T
        per_batch.append(_mh_attention(qkv[r0:r0 + T, 0:D],
                                       qkv[r0:r0 + T, D:2 * D],
                                       qkv[r0:r0 + T, 2 * D:3 * D],
                                       n_heads, scale))
    o = jnp.concatenate(per_batch, axis=0)                               # [N, D]
    sa = jnp.dot(o, wo_s_ref[0], preferred_element_type=jnp.float32) + bo_s_ref[0]
    x = _layernorm(x + sa, n1_g_ref[0], n1_b_ref[0])

    # ---- cross-attention on the global (last) token of every batch ----
    x_glb = jnp.concatenate(
        [x[b * T + T - 1:b * T + T, :] for b in range(b_blk)], axis=0)   # [b_blk, D]
    qg = jnp.dot(x_glb, wq_c_ref[0],
                 preferred_element_type=jnp.float32) + bq_c_ref[0]       # [b_blk, D]
    kv = jnp.dot(cross_ref[...], wkv_c_ref[0],
                 preferred_element_type=jnp.float32) + bkv_c_ref[0]      # [b_blk*S, 2D]
    glb_heads = []
    for b in range(b_blk):
        s0 = b * S
        glb_heads.append(_mh_attention(qg[b:b + 1, :],
                                       kv[s0:s0 + S, 0:D],
                                       kv[s0:s0 + S, D:2 * D],
                                       n_heads, scale))
    og = jnp.concatenate(glb_heads, axis=0)                              # [b_blk, D]
    ca = jnp.dot(og, wo_c_ref[0], preferred_element_type=jnp.float32) + bo_c_ref[0]
    glb_new = x_glb + ca                                                 # [b_blk, D]

    # torch.cat([x[:, :-1, :], x_glb_ori + x_glb_attn], dim=1)  -> masked write-back
    row = lax.broadcasted_iota(jnp.int32, (N, D), 0)
    for b in range(b_blk):
        x = jnp.where(row == b * T + T - 1, glb_new[b:b + 1, :], x)
    x = _layernorm(x, n2_g_ref[0], n2_b_ref[0])

    # ---- position-wise FFN: Conv1d(k=1) -> activation -> Conv1d(k=1) ----
    h = act(jnp.dot(x, w1_ref[0], preferred_element_type=jnp.float32) + b1_ref[0])
    y = jnp.dot(h, w2_ref[0], preferred_element_type=jnp.float32) + b2_ref[0]
    x = _layernorm(x + y, n3_g_ref[0], n3_b_ref[0])

    out_ref[...] = x           # carried to next layer; HBM write-back at grid end


_PARAM_ORDER = ('wqkv_s', 'bqkv_s', 'wo_s', 'bo_s',
                'wq_c', 'bq_c', 'wkv_c', 'bkv_c', 'wo_c', 'bo_c',
                'n1_g', 'n1_b', 'n2_g', 'n2_b', 'n3_g', 'n3_b',
                'w1', 'b1', 'w2', 'b2')


def decoder_stack(params, x, cross, *, n_heads, activation='gelu',
                  batch_block=None):
    """Runs n_layers fused TimeXer DecoderLayers.  x: [B,T,D], cross: [B,S,D].

    batch_block: rows of the batch handled per grid step (default: whole
    batch).  For v7x megacore at larger B use batch_block=B//2 (requires
    batch_block*T to be a multiple of 8).
    """
    B, T, D = x.shape
    S = cross.shape[1]
    n_layers = params['wqkv_s'].shape[0]
    b_blk = B if batch_block is None else batch_block
    assert B % b_blk == 0
    nb = B // b_blk
    weights = [params[k] for k in _PARAM_ORDER]   # already float32, no re-casts

    # Lane-dense 2-D slabs: one big DMA, taller MXU operands, fewer vst.msk.
    x2 = x.reshape(B * T, D)
    c2 = cross.reshape(B * S, D)

    def w_spec(a):                                # stream one layer of weights
        nd = a.ndim
        return pl.BlockSpec((1,) + a.shape[1:],
                            lambda b, l, _nd=nd: (l,) + (0,) * (_nd - 1))

    kernel = functools.partial(_decoder_layer_kernel, b_blk=b_blk, T=T, S=S,
                               n_heads=n_heads, activation=activation)

    # Explicit VMEM budget (v5e default scoped limit is only 16 MiB):
    # one layer of double-buffered weights + io blocks + headroom.
    w_layer_bytes = sum(int(w[0].size) * w.dtype.itemsize for w in weights)
    io_bytes = (2 * b_blk * T * D + b_blk * S * D) * 4
    vmem_limit = int(min(96 << 20,
                         max(32 << 20, 2 * w_layer_bytes + 2 * io_bytes + (8 << 20))))

    out = pl.pallas_call(
        kernel,
        out_shape=jax.ShapeDtypeStruct((B * T, D), jnp.float32),
        grid=(nb, n_layers),
        in_specs=([pl.BlockSpec((b_blk * T, D), lambda b, l: (b, 0)),
                   pl.BlockSpec((b_blk * S, D), lambda b, l: (b, 0))]
                  + [w_spec(w) for w in weights]),
        out_specs=pl.BlockSpec((b_blk * T, D), lambda b, l: (b, 0)),
        compiler_params=pltpu.CompilerParams(
            dimension_semantics=("parallel", "arbitrary"),
            vmem_limit_bytes=vmem_limit),
    )(x2, c2, *weights)
    return out.reshape(B, T, D)


# ------------------------------- parameters ---------------------------------

def init_params(key, *, d_model, d_ff, n_heads, n_layers):
    """PyTorch-style uniform(+-1/sqrt(fan_in)) init, pre-packed & pre-cast f32."""
    D, F = d_model, d_ff
    keys = iter(jax.random.split(key, 32 * n_layers + 8))

    def u(shape, fan_in):
        s = 1.0 / math.sqrt(fan_in)
        return jax.random.uniform(next(keys), shape, jnp.float32, -s, s)

    def per_layer(make):
        return jnp.stack([make() for _ in range(n_layers)], axis=0)

    return dict(
        # self-attention: q/k/v projections fused into one [D, 3D] weight
        wqkv_s=per_layer(lambda: jnp.concatenate(
            [u((D, D), D) for _ in range(3)], axis=1)),
        bqkv_s=per_layer(lambda: jnp.concatenate(
            [u((1, D), D) for _ in range(3)], axis=1)),
        wo_s=per_layer(lambda: u((D, D), D)),
        bo_s=per_layer(lambda: u((1, D), D)),
        # cross-attention: q separate, k/v fused into one [D, 2D] weight
        wq_c=per_layer(lambda: u((D, D), D)),
        bq_c=per_layer(lambda: u((1, D), D)),
        wkv_c=per_layer(lambda: jnp.concatenate(
            [u((D, D), D) for _ in range(2)], axis=1)),
        bkv_c=per_layer(lambda: jnp.concatenate(
            [u((1, D), D) for _ in range(2)], axis=1)),
        wo_c=per_layer(lambda: u((D, D), D)),
        bo_c=per_layer(lambda: u((1, D), D)),
        # LayerNorms
        n1_g=jnp.ones((n_layers, 1, D), jnp.float32),
        n1_b=jnp.zeros((n_layers, 1, D), jnp.float32),
        n2_g=jnp.ones((n_layers, 1, D), jnp.float32),
        n2_b=jnp.zeros((n_layers, 1, D), jnp.float32),
        n3_g=jnp.ones((n_layers, 1, D), jnp.float32),
        n3_b=jnp.zeros((n_layers, 1, D), jnp.float32),
        # FFN (Conv1d kernel_size=1 == per-token Linear)
        w1=per_layer(lambda: u((D, F), D)),
        b1=per_layer(lambda: u((1, F), D)),
        w2=per_layer(lambda: u((F, D), F)),
        b2=per_layer(lambda: u((1, D), F)),
    )


# ---------------------------- pure-JAX reference ----------------------------

def decoder_stack_reference(params, x, cross, *, n_heads, activation='gelu'):
    B, T, D = x.shape
    E = D // n_heads
    scale = 1.0 / math.sqrt(E)
    act = ((lambda v: jax.nn.gelu(v, approximate=False))
           if activation == 'gelu' else jax.nn.relu)

    def mha(q, k, v, wo, bo):
        L, S = q.shape[1], k.shape[1]
        qh = q.reshape(B, L, n_heads, E)
        kh = k.reshape(B, S, n_heads, E)
        vh = v.reshape(B, S, n_heads, E)
        s = jnp.einsum('blhe,bshe->bhls', qh, kh) * scale
        p = jax.nn.softmax(s, axis=-1)
        o = jnp.einsum('bhls,bshe->blhe', p, vh).reshape(B, L, D)
        return o @ wo + bo

    def ln(v, g, b):
        m = v.mean(-1, keepdims=True)
        var = ((v - m) ** 2).mean(-1, keepdims=True)
        return (v - m) / jnp.sqrt(var + 1e-5) * g + b

    n_layers = params['wqkv_s'].shape[0]
    for l in range(n_layers):
        qkv = x @ params['wqkv_s'][l] + params['bqkv_s'][l]
        sa = mha(qkv[..., :D], qkv[..., D:2 * D], qkv[..., 2 * D:],
                 params['wo_s'][l], params['bo_s'][l])
        x = ln(x + sa, params['n1_g'][l], params['n1_b'][l])
        x_glb = x[:, -1:, :]
        qg = x_glb @ params['wq_c'][l] + params['bq_c'][l]
        kv = cross @ params['wkv_c'][l] + params['bkv_c'][l]
        ca = mha(qg, kv[..., :D], kv[..., D:],
                 params['wo_c'][l], params['bo_c'][l])
        x = jnp.concatenate([x[:, :-1, :], x_glb + ca], axis=1)
        x = ln(x, params['n2_g'][l], params['n2_b'][l])
        h = act(x @ params['w1'][l] + params['b1'][l])
        y = h @ params['w2'][l] + params['b2'][l]
        x = ln(x + y, params['n3_g'][l], params['n3_b'][l])
    return x


# ---------------------------------- main -------------------------------------

if __name__ == "__main__":
    # Shapes consistent with TimeXer usage of DecoderLayer:
    #   x:     [B, patch_num + 1 (global token), d_model] = [2, 3, 32]
    #   cross: [B, n_covariate_tokens, d_model]           = [2, 7, 32]
    B, T, S = 2, 3, 7
    D, H, F, NL = 32, 4, 64, 2
    activation = 'gelu'    # TimeXer passes configs.activation; 'relu' also supported

    key = jax.random.PRNGKey(0)
    kx, kc, kp = jax.random.split(key, 3)
    x = jax.random.normal(kx, (B, T, D), jnp.float32)
    cross = jax.random.normal(kc, (B, S, D), jnp.float32)
    params = init_params(kp, d_model=D, d_ff=F, n_heads=H, n_layers=NL)

    out = decoder_stack(params, x, cross, n_heads=H, activation=activation)
    out = jax.block_until_ready(out)
    assert out.shape == (B, T, D), out.shape
    assert bool(jnp.all(jnp.isfinite(out)))

    ref = decoder_stack_reference(params, x, cross, n_heads=H,
                                  activation=activation)
    assert bool(jnp.allclose(out, ref, atol=3e-2, rtol=3e-2)), \
        float(jnp.max(jnp.abs(out - ref)))
    print("KERNEL_OK")
</pallas_src>

<mosaic_0001>
module attributes {stable_mosaic.version = 11 : i64} {
  func.func @_decoder_layer_kernel(%arg0: i32, %arg1: i32, %arg2: memref<6x32xf32, #tpu.memory_space<vmem>>, %arg3: memref<14x32xf32, #tpu.memory_space<vmem>>, %arg4: memref<1x32x96xf32, #tpu.memory_space<vmem>>, %arg5: memref<1x1x96xf32, #tpu.memory_space<vmem>>, %arg6: memref<1x32x32xf32, #tpu.memory_space<vmem>>, %arg7: memref<1x1x32xf32, #tpu.memory_space<vmem>>, %arg8: memref<1x32x32xf32, #tpu.memory_space<vmem>>, %arg9: memref<1x1x32xf32, #tpu.memory_space<vmem>>, %arg10: memref<1x32x64xf32, #tpu.memory_space<vmem>>, %arg11: memref<1x1x64xf32, #tpu.memory_space<vmem>>, %arg12: memref<1x32x32xf32, #tpu.memory_space<vmem>>, %arg13: memref<1x1x32xf32, #tpu.memory_space<vmem>>, %arg14: memref<1x1x32xf32, #tpu.memory_space<vmem>>, %arg15: memref<1x1x32xf32, #tpu.memory_space<vmem>>, %arg16: memref<1x1x32xf32, #tpu.memory_space<vmem>>, %arg17: memref<1x1x32xf32, #tpu.memory_space<vmem>>, %arg18: memref<1x1x32xf32, #tpu.memory_space<vmem>>, %arg19: memref<1x1x32xf32, #tpu.memory_space<vmem>>, %arg20: memref<1x32x64xf32, #tpu.memory_space<vmem>>, %arg21: memref<1x1x64xf32, #tpu.memory_space<vmem>>, %arg22: memref<1x64x32xf32, #tpu.memory_space<vmem>>, %arg23: memref<1x1x32xf32, #tpu.memory_space<vmem>>, %arg24: memref<6x32xf32, #tpu.memory_space<vmem>>) attributes {dimension_semantics = [#tpu.dimension_semantics<parallel>, #tpu.dimension_semantics<arbitrary>], iteration_bounds = array<i64: 1, 2>, scalar_prefetch = 0 : i64, scratch_operands = 0 : i64, tpu.core_type = #tpu.core_type<tc>, window_params = [{transform_indices = @transform_0, window_bounds = array<i64: 6, 32>}, {transform_indices = @transform_1, window_bounds = array<i64: 14, 32>}, {transform_indices = @transform_2, window_bounds = array<i64: 1, 32, 96>}, {transform_indices = @transform_3, window_bounds = array<i64: 1, 1, 96>}, {transform_indices = @transform_4, window_bounds = array<i64: 1, 32, 32>}, {transform_indices = @transform_5, window_bounds = array<i64: 1, 1, 32>}, {transform_indices = @transform_6, window_bounds = array<i64: 1, 32, 32>}, {transform_indices = @transform_7, window_bounds = array<i64: 1, 1, 32>}, {transform_indices = @transform_8, window_bounds = array<i64: 1, 32, 64>}, {transform_indices = @transform_9, window_bounds = array<i64: 1, 1, 64>}, {transform_indices = @transform_10, window_bounds = array<i64: 1, 32, 32>}, {transform_indices = @transform_11, window_bounds = array<i64: 1, 1, 32>}, {transform_indices = @transform_12, window_bounds = array<i64: 1, 1, 32>}, {transform_indices = @transform_13, window_bounds = array<i64: 1, 1, 32>}, {transform_indices = @transform_14, window_bounds = array<i64: 1, 1, 32>}, {transform_indices = @transform_15, window_bounds = array<i64: 1, 1, 32>}, {transform_indices = @transform_16, window_bounds = array<i64: 1, 1, 32>}, {transform_indices = @transform_17, window_bounds = array<i64: 1, 1, 32>}, {transform_indices = @transform_18, window_bounds = array<i64: 1, 32, 64>}, {transform_indices = @transform_19, window_bounds = array<i64: 1, 1, 64>}, {transform_indices = @transform_20, window_bounds = array<i64: 1, 64, 32>}, {transform_indices = @transform_21, window_bounds = array<i64: 1, 1, 32>}, {transform_indices = @transform_22, window_bounds = array<i64: 6, 32>}]} {
    %c0_i32 = arith.constant 0 : i32
    %0 = arith.cmpi eq, %arg1, %c0_i32 : i32
    %1 = arith.extui %0 : i1 to i32
    %c0_i32_0 = arith.constant 0 : i32
    %2 = arith.cmpi ne, %1, %c0_i32_0 : i32
    scf.if %2 {
      %c0_171 = arith.constant 0 : index
      %c0_172 = arith.constant 0 : index
      %455 = vector.load %arg2[%c0_171, %c0_172] : memref<6x32xf32, #tpu.memory_space<vmem>>, vector<6x32xf32>
      %c0_173 = arith.constant 0 : index
      %c0_174 = arith.constant 0 : index
      %456 = vector.load %arg24[%c0_173, %c0_174] : memref<6x32xf32, #tpu.memory_space<vmem>>, vector<6x32xf32>
      tpu.vector_store %arg24[%c0_173, %c0_174], %455 {strides = array<i32>} : memref<6x32xf32, #tpu.memory_space<vmem>>, vector<6x32xf32>,
    } else {
    }
    %c0 = arith.constant 0 : index
    %c0_1 = arith.constant 0 : index
    %3 = vector.load %arg24[%c0, %c0_1] : memref<6x32xf32, #tpu.memory_space<vmem>>, vector<6x32xf32>
    %c0_2 = arith.constant 0 : index
    %c0_3 = arith.constant 0 : index
    %c0_4 = arith.constant 0 : index
    %4 = vector.load %arg4[%c0_2, %c0_3, %c0_4] : memref<1x32x96xf32, #tpu.memory_space<vmem>>, vector<1x32x96xf32>
    %5 = vector.shape_cast %4 : vector<1x32x96xf32> to vector<32x96xf32>
    %cst = arith.constant dense<0.000000e+00> : vector<6x96xf32>
    %6 = tpu.matmul %3, %5, %cst {dimension_numbers = #tpu.dot_dimension_numbers<[1], [0], [0], [1], [0, 0, 1, 1], [], []>} : vector<6x32xf32>, vector<32x96xf32>, vector<6x96xf32> -> vector<6x96xf32>
    %c0_5 = arith.constant 0 : index
    %c0_6 = arith.constant 0 : index
    %c0_7 = arith.constant 0 : index
    %7 = vector.load %arg5[%c0_5, %c0_6, %c0_7] : memref<1x1x96xf32, #tpu.memory_space<vmem>>, vector<1x1x96xf32>
    %8 = vector.shape_cast %7 : vector<1x1x96xf32> to vector<1x96xf32>
    %9 = vector.broadcast %8 : vector<1x96xf32> to vector<6x96xf32>
    %10 = arith.addf %6, %9 : vector<6x96xf32>
    %11 = vector.extract_strided_slice %10 {offsets = [0, 0], sizes = [3, 32], strides = [1, 1]} : vector<6x96xf32> to vector<3x32xf32>
    %12 = vector.extract_strided_slice %10 {offsets = [0, 32], sizes = [3, 32], strides = [1, 1]} : vector<6x96xf32> to vector<3x32xf32>
    %13 = vector.extract_strided_slice %10 {offsets = [0, 64], sizes = [3, 32], strides = [1, 1]} : vector<6x96xf32> to vector<3x32xf32>
    %14 = vector.extract_strided_slice %11 {offsets = [0, 0], sizes = [3, 8], strides = [1, 1]} : vector<3x32xf32> to vector<3x8xf32>
    %15 = vector.extract_strided_slice %12 {offsets = [0, 0], sizes = [3, 8], strides = [1, 1]} : vector<3x32xf32> to vector<3x8xf32>
    %16 = vector.extract_strided_slice %13 {offsets = [0, 0], sizes = [3, 8], strides = [1, 1]} : vector<3x32xf32> to vector<3x8xf32>
    %cst_8 = arith.constant dense<0.000000e+00> : vector<3x3xf32>
    %17 = tpu.matmul %14, %15, %cst_8 {dimension_numbers = #tpu.dot_dimension_numbers<[1], [1], [0], [0], [0, 0, 1, 0], [], []>} : vector<3x8xf32>, vector<3x8xf32>, vector<3x3xf32> -> vector<3x3xf32>
    %cst_9 = arith.constant 0.353553385 : f32
    %18 = vector.broadcast %cst_9 : f32 to vector<3x3xf32>
    %19 = arith.mulf %17, %18 : vector<3x3xf32>
    %cst_10 = arith.constant dense<0xFF800000> : vector<3xf32>
    %20 = vector.multi_reduction <maximumf>, %19, %cst_10 [1] : vector<3x3xf32> to vector<3xf32>
    %21 = vector.shape_cast %20 : vector<3xf32> to vector<3x1xf32>
    %22 = vector.broadcast %21 : vector<3x1xf32> to vector<3x3xf32>
    %23 = arith.subf %19, %22 : vector<3x3xf32>
    %24 = math.exp %23 : vector<3x3xf32>
    %cst_11 = arith.constant dense<0.000000e+00> : vector<3xf32>
    %25 = vector.multi_reduction <add>, %24, %cst_11 [1] : vector<3x3xf32> to vector<3xf32>
    %26 = vector.shape_cast %25 : vector<3xf32> to vector<3x1xf32>
    %27 = tpu.reciprocal %26 {approx = true} : vector<3x1xf32> -> vector<3x1xf32>
    %28 = vector.broadcast %27 : vector<3x1xf32> to vector<3x3xf32>
    %29 = arith.mulf %24, %28 : vector<3x3xf32>
    %cst_12 = arith.constant dense<0.000000e+00> : vector<3x8xf32>
    %30 = tpu.matmul %29, %16, %cst_12 {dimension_numbers = #tpu.dot_dimension_numbers<[1], [0], [0], [1], [0, 0, 1, 1], [], []>} : vector<3x3xf32>, vector<3x8xf32>, vector<3x8xf32> -> vector<3x8xf32>
    %31 = vector.extract_strided_slice %11 {offsets = [0, 8], sizes = [3, 8], strides = [1, 1]} : vector<3x32xf32> to vector<3x8xf32>
    %32 = vector.extract_strided_slice %12 {offsets = [0, 8], sizes = [3, 8], strides = [1, 1]} : vector<3x32xf32> to vector<3x8xf32>
    %33 = vector.extract_strided_slice %13 {offsets = [0, 8], sizes = [3, 8], strides = [1, 1]} : vector<3x32xf32> to vector<3x8xf32>
    %cst_13 = arith.constant dense<0.000000e+00> : vector<3x3xf32>
    %34 = tpu.matmul %31, %32, %cst_13 {dimension_numbers = #tpu.dot_dimension_numbers<[1], [1], [0], [0], [0, 0, 1, 0], [], []>} : vector<3x8xf32>, vector<3x8xf32>, vector<3x3xf32> -> vector<3x3xf32>
    %cst_14 = arith.constant 0.353553385 : f32
    %35 = vector.broadcast %cst_14 : f32 to vector<3x3xf32>
    %36 = arith.mulf %34, %35 : vector<3x3xf32>
    %cst_15 = arith.constant dense<0xFF800000> : vector<3xf32>
    %37 = vector.multi_reduction <maximumf>, %36, %cst_15 [1] : vector<3x3xf32> to vector<3xf32>
    %38 = vector.shape_cast %37 : vector<3xf32> to vector<3x1xf32>
    %39 = vector.broadcast %38 : vector<3x1xf32> to vector<3x3xf32>
    %40 = arith.subf %36, %39 : vector<3x3xf32>
    %41 = math.exp %40 : vector<3x3xf32>
    %cst_16 = arith.constant dense<0.000000e+00> : vector<3xf32>
    %42 = vector.multi_reduction <add>, %41, %cst_16 [1] : vector<3x3xf32> to vector<3xf32>
    %43 = vector.shape_cast %42 : vector<3xf32> to vector<3x1xf32>
    %44 = tpu.reciprocal %43 {approx = true} : vector<3x1xf32> -> vector<3x1xf32>
    %45 = vector.broadcast %44 : vector<3x1xf32> to vector<3x3xf32>
    %46 = arith.mulf %41, %45 : vector<3x3xf32>
    %cst_17 = arith.constant dense<0.000000e+00> : vector<3x8xf32>
    %47 = tpu.matmul %46, %33, %cst_17 {dimension_numbers = #tpu.dot_dimension_numbers<[1], [0], [0], [1], [0, 0, 1, 1], [], []>} : vector<3x3xf32>, vector<3x8xf32>, vector<3x8xf32> -> vector<3x8xf32>
    %48 = vector.extract_strided_slice %11 {offsets = [0, 16], sizes = [3, 8], strides = [1, 1]} : vector<3x32xf32> to vector<3x8xf32>
    %49 = vector.extract_strided_slice %12 {offsets = [0, 16], sizes = [3, 8], strides = [1, 1]} : vector<3x32xf32> to vector<3x8xf32>
    %50 = vector.extract_strided_slice %13 {offsets = [0, 16], sizes = [3, 8], strides = [1, 1]} : vector<3x32xf32> to vector<3x8xf32>
    %cst_18 = arith.constant dense<0.000000e+00> : vector<3x3xf32>
    %51 = tpu.matmul %48, %49, %cst_18 {dimension_numbers = #tpu.dot_dimension_numbers<[1], [1], [0], [0], [0, 0, 1, 0], [], []>} : vector<3x8xf32>, vector<3x8xf32>, vector<3x3xf32> -> vector<3x3xf32>
    %cst_19 = arith.constant 0.353553385 : f32
    %52 = vector.broadcast %cst_19 : f32 to vector<3x3xf32>
    %53 = arith.mulf %51, %52 : vector<3x3xf32>
    %cst_20 = arith.constant dense<0xFF800000> : vector<3xf32>
    %54 = vector.multi_reduction <maximumf>, %53, %cst_20 [1] : vector<3x3xf32> to vector<3xf32>
    %55 = vector.shape_cast %54 : vector<3xf32> to vector<3x1xf32>
    %56 = vector.broadcast %55 : vector<3x1xf32> to vector<3x3xf32>
    %57 = arith.subf %53, %56 : vector<3x3xf32>
    %58 = math.exp %57 : vector<3x3xf32>
    %cst_21 = arith.constant dense<0.000000e+00> : vector<3xf32>
    %59 = vector.multi_reduction <add>, %58, %cst_21 [1] : vector<3x3xf32> to vector<3xf32>
    %60 = vector.shape_cast %59 : vector<3xf32> to vector<3x1xf32>
    %61 = tpu.reciprocal %60 {approx = true} : vector<3x1xf32> -> vector<3x1xf32>
    %62 = vector.broadcast %61 : vector<3x1xf32> to vector<3x3xf32>
    %63 = arith.mulf %58, %62 : vector<3x3xf32>
    %cst_22 = arith.constant dense<0.000000e+00> : vector<3x8xf32>
    %64 = tpu.matmul %63, %50, %cst_22 {dimension_numbers = #tpu.dot_dimension_numbers<[1], [0], [0], [1], [0, 0, 1, 1], [], []>} : vector<3x3xf32>, vector<3x8xf32>, vector<3x8xf32> -> vector<3x8xf32>
    %65 = vector.extract_strided_slice %11 {offsets = [0, 24], sizes = [3, 8], strides = [1, 1]} : vector<3x32xf32> to vector<3x8xf32>
    %66 = vector.extract_strided_slice %12 {offsets = [0, 24], sizes = [3, 8], strides = [1, 1]} : vector<3x32xf32> to vector<3x8xf32>
    %67 = vector.extract_strided_slice %13 {offsets = [0, 24], sizes = [3, 8], strides = [1, 1]} : vector<3x32xf32> to vector<3x8xf32>
    %cst_23 = arith.constant dense<0.000000e+00> : vector<3x3xf32>
    %68 = tpu.matmul %65, %66, %cst_23 {dimension_numbers = #tpu.dot_dimension_numbers<[1], [1], [0], [0], [0, 0, 1, 0], [], []>} : vector<3x8xf32>, vector<3x8xf32>, vector<3x3xf32> -> vector<3x3xf32>
    %cst_24 = arith.constant 0.353553385 : f32
    %69 = vector.broadcast %cst_24 : f32 to vector<3x3xf32>
    %70 = arith.mulf %68, %69 : vector<3x3xf32>
    %cst_25 = arith.constant dense<0xFF800000> : vector<3xf32>
    %71 = vector.multi_reduction <maximumf>, %70, %cst_25 [1] : vector<3x3xf32> to vector<3xf32>
    %72 = vector.shape_cast %71 : vector<3xf32> to vector<3x1xf32>
    %73 = vector.broadcast %72 : vector<3x1xf32> to vector<3x3xf32>
    %74 = arith.subf %70, %73 : vector<3x3xf32>
    %75 = math.exp %74 : vector<3x3xf32>
    %cst_26 = arith.constant dense<0.000000e+00> : vector<3xf32>
    %76 = vector.multi_reduction <add>, %75, %cst_26 [1] : vector<3x3xf32> to vector<3xf32>
    %77 = vector.shape_cast %76 : vector<3xf32> to vector<3x1xf32>
    %78 = tpu.reciprocal %77 {approx = true} : vector<3x1xf32> -> vector<3x1xf32>
    %79 = vector.broadcast %78 : vector<3x1xf32> to vector<3x3xf32>
    %80 = arith.mulf %75, %79 : vector<3x3xf32>
    %cst_27 = arith.constant dense<0.000000e+00> : vector<3x8xf32>
    %81 = tpu.matmul %80, %67, %cst_27 {dimension_numbers = #tpu.dot_dimension_numbers<[1], [0], [0], [1], [0, 0, 1, 1], [], []>} : vector<3x3xf32>, vector<3x8xf32>, vector<3x8xf32> -> vector<3x8xf32>
    %82 = tpu.concatenate %30, %47, %64, %81 in 1 : vector<3x8xf32>, vector<3x8xf32>, vector<3x8xf32>, vector<3x8xf32> -> vector<3x32xf32>
    %83 = vector.extract_strided_slice %10 {offsets = [3, 0], sizes = [3, 32], strides = [1, 1]} : vector<6x96xf32> to vector<3x32xf32>
    %84 = vector.extract_strided_slice %10 {offsets = [3, 32], sizes = [3, 32], strides = [1, 1]} : vector<6x96xf32> to vector<3x32xf32>
    %85 = vector.extract_strided_slice %10 {offsets = [3, 64], sizes = [3, 32], strides = [1, 1]} : vector<6x96xf32> to vector<3x32xf32>
    %86 = vector.extract_strided_slice %83 {offsets = [0, 0], sizes = [3, 8], strides = [1, 1]} : vector<3x32xf32> to vector<3x8xf32>
    %87 = vector.extract_strided_slice %84 {offsets = [0, 0], sizes = [3, 8], strides = [1, 1]} : vector<3x32xf32> to vector<3x8xf32>
    %88 = vector.extract_strided_slice %85 {offsets = [0, 0], sizes = [3, 8], strides = [1, 1]} : vector<3x32xf32> to vector<3x8xf32>
    %cst_28 = arith.constant dense<0.000000e+00> : vector<3x3xf32>
    %89 = tpu.matmul %86, %87, %cst_28 {dimension_numbers = #tpu.dot_dimension_numbers<[1], [1], [0], [0], [0, 0, 1, 0], [], []>} : vector<3x8xf32>, vector<3x8xf32>, vector<3x3xf32> -> vector<3x3xf32>
    %cst_29 = arith.constant 0.353553385 : f32
    %90 = vector.broadcast %cst_29 : f32 to vector<3x3xf32>
    %91 = arith.mulf %89, %90 : vector<3x3xf32>
    %cst_30 = arith.constant dense<0xFF800000> : vector<3xf32>
    %92 = vector.multi_reduction <maximumf>, %91, %cst_30 [1] : vector<3x3xf32> to vector<3xf32>
    %93 = vector.shape_cast %92 : vector<3xf32> to vector<3x1xf32>
    %94 = vector.broadcast %93 : vector<3x1xf32> to vector<3x3xf32>
    %95 = arith.subf %91, %94 : vector<3x3xf32>
    %96 = math.exp %95 : vector<3x3xf32>
    %cst_31 = arith.constant dense<0.000000e+00> : vector<3xf32>
    %97 = vector.multi_reduction <add>, %96, %cst_31 [1] : vector<3x3xf32> to vector<3xf32>
    %98 = vector.shape_cast %97 : vector<3xf32> to vector<3x1xf32>
    %99 = tpu.reciprocal %98 {approx = true} : vector<3x1xf32> -> vector<3x1xf32>
    %100 = vector.broadcast %99 : vector<3x1xf32> to vector<3x3xf32>
    %101 = arith.mulf %96, %100 : vector<3x3xf32>
    %cst_32 = arith.constant dense<0.000000e+00> : vector<3x8xf32>
    %102 = tpu.matmul %101, %88, %cst_32 {dimension_numbers = #tpu.dot_dimension_numbers<[1], [0], [0], [1], [0, 0, 1, 1], [], []>} : vector<3x3xf32>, vector<3x8xf32>, vector<3x8xf32> -> vector<3x8xf32>
    %103 = vector.extract_strided_slice %83 {offsets = [0, 8], sizes = [3, 8], strides = [1, 1]} : vector<3x32xf32> to vector<3x8xf32>
    %104 = vector.extract_strided_slice %84 {offsets = [0, 8], sizes = [3, 8], strides = [1, 1]} : vector<3x32xf32> to vector<3x8xf32>
    %105 = vector.extract_strided_slice %85 {offsets = [0, 8], sizes = [3, 8], strides = [1, 1]} : vector<3x32xf32> to vector<3x8xf32>
    %cst_33 = arith.constant dense<0.000000e+00> : vector<3x3xf32>
    %106 = tpu.matmul %103, %104, %cst_33 {dimension_numbers = #tpu.dot_dimension_numbers<[1], [1], [0], [0], [0, 0, 1, 0], [], []>} : vector<3x8xf32>, vector<3x8xf32>, vector<3x3xf32> -> vector<3x3xf32>
    %cst_34 = arith.constant 0.353553385 : f32
    %107 = vector.broadcast %cst_34 : f32 to vector<3x3xf32>
    %108 = arith.mulf %106, %107 : vector<3x3xf32>
    %cst_35 = arith.constant dense<0xFF800000> : vector<3xf32>
    %109 = vector.multi_reduction <maximumf>, %108, %cst_35 [1] : vector<3x3xf32> to vector<3xf32>
    %110 = vector.shape_cast %109 : vector<3xf32> to vector<3x1xf32>
    %111 = vector.broadcast %110 : vector<3x1xf32> to vector<3x3xf32>
    %112 = arith.subf %108, %111 : vector<3x3xf32>
    %113 = math.exp %112 : vector<3x3xf32>
    %cst_36 = arith.constant dense<0.000000e+00> : vector<3xf32>
    %114 = vector.multi_reduction <add>, %113, %cst_36 [1] : vector<3x3xf32> to vector<3xf32>
    %115 = vector.shape_cast %114 : vector<3xf32> to vector<3x1xf32>
    %116 = tpu.reciprocal %115 {approx = true} : vector<3x1xf32> -> vector<3x1xf32>
    %117 = vector.broadcast %116 : vector<3x1xf32> to vector<3x3xf32>
    %118 = arith.mulf %113, %117 : vector<3x3xf32>
    %cst_37 = arith.constant dense<0.000000e+00> : vector<3x8xf32>
    %119 = tpu.matmul %118, %105, %cst_37 {dimension_numbers = #tpu.dot_dimension_numbers<[1], [0], [0], [1], [0, 0, 1, 1], [], []>} : vector<3x3xf32>, vector<3x8xf32>, vector<3x8xf32> -> vector<3x8xf32>
    %120 = vector.extract_strided_slice %83 {offsets = [0, 16], sizes = [3, 8], strides = [1, 1]} : vector<3x32xf32> to vector<3x8xf32>
    %121 = vector.extract_strided_slice %84 {offsets = [0, 16], sizes = [3, 8], strides = [1, 1]} : vector<3x32xf32> to vector<3x8xf32>
    %122 = vector.extract_strided_slice %85 {offsets = [0, 16], sizes = [3, 8], strides = [1, 1]} : vector<3x32xf32> to vector<3x8xf32>
    %cst_38 = arith.constant dense<0.000000e+00> : vector<3x3xf32>
    %123 = tpu.matmul %120, %121, %cst_38 {dimension_numbers = #tpu.dot_dimension_numbers<[1], [1], [0], [0], [0, 0, 1, 0], [], []>} : vector<3x8xf32>, vector<3x8xf32>, vector<3x3xf32> -> vector<3x3xf32>
    %cst_39 = arith.constant 0.353553385 : f32
    %124 = vector.broadcast %cst_39 : f32 to vector<3x3xf32>
    %125 = arith.mulf %123, %124 : vector<3x3xf32>
    %cst_40 = arith.constant dense<0xFF800000> : vector<3xf32>
    %126 = vector.multi_reduction <maximumf>, %125, %cst_40 [1] : vector<3x3xf32> to vector<3xf32>
    %127 = vector.shape_cast %126 : vector<3xf32> to vector<3x1xf32>
    %128 = vector.broadcast %127 : vector<3x1xf32> to vector<3x3xf32>
    %129 = arith.subf %125, %128 : vector<3x3xf32>
    %130 = math.exp %129 : vector<3x3xf32>
    %cst_41 = arith.constant dense<0.000000e+00> : vector<3xf32>
    %131 = vector.multi_reduction <add>, %130, %cst_41 [1] : vector<3x3xf32> to vector<3xf32>
    %132 = vector.shape_cast %131 : vector<3xf32> to vector<3x1xf32>
    %133 = tpu.reciprocal %132 {approx = true} : vector<3x1xf32> -> vector<3x1xf32>
    %134 = vector.broadcast %133 : vector<3x1xf32> to vector<3x3xf32>
    %135 = arith.mulf %130, %134 : vector<3x3xf32>
    %cst_42 = arith.constant dense<0.000000e+00> : vector<3x8xf32>
    %136 = tpu.matmul %135, %122, %cst_42 {dimension_numbers = #tpu.dot_dimension_numbers<[1], [0], [0], [1], [0, 0, 1, 1], [], []>} : vector<3x3xf32>, vector<3x8xf32>, vector<3x8xf32> -> vector<3x8xf32>
    %137 = vector.extract_strided_slice %83 {offsets = [0, 24], sizes = [3, 8], strides = [1, 1]} : vector<3x32xf32> to vector<3x8xf32>
    %138 = vector.extract_strided_slice %84 {offsets = [0, 24], sizes = [3, 8], strides = [1, 1]} : vector<3x32xf32> to vector<3x8xf32>
    %139 = vector.extract_strided_slice %85 {offsets = [0, 24], sizes = [3, 8], strides = [1, 1]} : vector<3x32xf32> to vector<3x8xf32>
    %cst_43 = arith.constant dense<0.000000e+00> : vector<3x3xf32>
    %140 = tpu.matmul %137, %138, %cst_43 {dimension_numbers = #tpu.dot_dimension_numbers<[1], [1], [0], [0], [0, 0, 1, 0], [], []>} : vector<3x8xf32>, vector<3x8xf32>, vector<3x3xf32> -> vector<3x3xf32>
    %cst_44 = arith.constant 0.353553385 : f32
    %141 = vector.broadcast %cst_44 : f32 to vector<3x3xf32>
    %142 = arith.mulf %140, %141 : vector<3x3xf32>
    %cst_45 = arith.constant dense<0xFF800000> : vector<3xf32>
    %143 = vector.multi_reduction <maximumf>, %142, %cst_45 [1] : vector<3x3xf32> to vector<3xf32>
    %144 = vector.shape_cast %143 : vector<3xf32> to vector<3x1xf32>
    %145 = vector.broadcast %144 : vector<3x1xf32> to vector<3x3xf32>
    %146 = arith.subf %142, %145 : vector<3x3xf32>
    %147 = math.exp %146 : vector<3x3xf32>
    %cst_46 = arith.constant dense<0.000000e+00> : vector<3xf32>
    %148 = vector.multi_reduction <add>, %147, %cst_46 [1] : vector<3x3xf32> to vector<3xf32>
    %149 = vector.shape_cast %148 : vector<3xf32> to vector<3x1xf32>
    %150 = tpu.reciprocal %149 {approx = true} : vector<3x1xf32> -> vector<3x1xf32>
    %151 = vector.broadcast %150 : vector<3x1xf32> to vector<3x3xf32>
    %152 = arith.mulf %147, %151 : vector<3x3xf32>
    %cst_47 = arith.constant dense<0.000000e+00> : vector<3x8xf32>
    %153 = tpu.matmul %152, %139, %cst_47 {dimension_numbers = #tpu.dot_dimension_numbers<[1], [0], [0], [1], [0, 0, 1, 1], [], []>} : vector<3x3xf32>, vector<3x8xf32>, vector<3x8xf32> -> vector<3x8xf32>
    %154 = tpu.concatenate %102, %119, %136, %153 in 1 : vector<3x8xf32>, vector<3x8xf32>, vector<3x8xf32>, vector<3x8xf32> -> vector<3x32xf32>
    %155 = tpu.concatenate %82, %154 in 0 : vector<3x32xf32>, vector<3x32xf32> -> vector<6x32xf32>
    %c0_48 = arith.constant 0 : index
    %c0_49 = arith.constant 0 : index
    %c0_50 = arith.constant 0 : index
    %156 = vector.load %arg6[%c0_48, %c0_49, %c0_50] : memref<1x32x32xf32, #tpu.memory_space<vmem>>, vector<1x32x32xf32>
    %157 = vector.shape_cast %156 : vector<1x32x32xf32> to vector<32x32xf32>
    %cst_51 = arith.constant dense<0.000000e+00> : vector<6x32xf32>
    %158 = tpu.matmul %155, %157, %cst_51 {dimension_numbers = #tpu.dot_dimension_numbers<[1], [0], [0], [1], [0, 0, 1, 1], [], []>} : vector<6x32xf32>, vector<32x32xf32>, vector<6x32xf32> -> vector<6x32xf32>
    %c0_52 = arith.constant 0 : index
    %c0_53 = arith.constant 0 : index
    %c0_54 = arith.constant 0 : index
    %159 = vector.load %arg7[%c0_52, %c0_53, %c0_54] : memref<1x1x32xf32, #tpu.memory_space<vmem>>, vector<1x1x32xf32>
    %160 = vector.shape_cast %159 : vector<1x1x32xf32> to vector<1x32xf32>
    %161 = vector.broadcast %160 : vector<1x32xf32> to vector<6x32xf32>
    %162 = arith.addf %158, %161 : vector<6x32xf32>
    %163 = arith.addf %3, %162 : vector<6x32xf32>
    %c0_55 = arith.constant 0 : index
    %c0_56 = arith.constant 0 : index
    %c0_57 = arith.constant 0 : index
    %164 = vector.load %arg14[%c0_55, %c0_56, %c0_57] : memref<1x1x32xf32, #tpu.memory_space<vmem>>, vector<1x1x32xf32>
    %165 = vector.shape_cast %164 : vector<1x1x32xf32> to vector<1x32xf32>
    %c0_58 = arith.constant 0 : index
    %c0_59 = arith.constant 0 : index
    %c0_60 = arith.constant 0 : index
    %166 = vector.load %arg15[%c0_58, %c0_59, %c0_60] : memref<1x1x32xf32, #tpu.memory_space<vmem>>, vector<1x1x32xf32>
    %167 = vector.shape_cast %166 : vector<1x1x32xf32> to vector<1x32xf32>
    %cst_61 = arith.constant dense<0.000000e+00> : vector<6xf32>
    %168 = vector.multi_reduction <add>, %163, %cst_61 [1] : vector<6x32xf32> to vector<6xf32>
    %169 = vector.shape_cast %168 : vector<6xf32> to vector<6x1xf32>
    %cst_62 = arith.constant 3.200000e+01 : f32
    %170 = vector.broadcast %cst_62 : f32 to vector<6x1xf32>
    %171 = arith.divf %169, %170 : vector<6x1xf32>
    %172 = vector.broadcast %171 : vector<6x1xf32> to vector<6x32xf32>
    %173 = arith.subf %163, %172 : vector<6x32xf32>
    %174 = arith.mulf %173, %173 : vector<6x32xf32>
    %cst_63 = arith.constant dense<0.000000e+00> : vector<6xf32>
    %175 = vector.multi_reduction <add>, %174, %cst_63 [1] : vector<6x32xf32> to vector<6xf32>
    %176 = vector.shape_cast %175 : vector<6xf32> to vector<6x1xf32>
    %cst_64 = arith.constant 3.200000e+01 : f32
    %177 = vector.broadcast %cst_64 : f32 to vector<6x1xf32>
    %178 = arith.divf %176, %177 : vector<6x1xf32>
    %179 = vector.broadcast %171 : vector<6x1xf32> to vector<6x32xf32>
    %180 = arith.subf %163, %179 : vector<6x32xf32>
    %cst_65 = arith.constant 9.99999974E-6 : f32
    %181 = vector.broadcast %cst_65 : f32 to vector<6x1xf32>
    %182 = arith.addf %178, %181 : vector<6x1xf32>
    %183 = math.rsqrt %182 : vector<6x1xf32>
    %184 = vector.broadcast %183 : vector<6x1xf32> to vector<6x32xf32>
    %185 = arith.mulf %180, %184 : vector<6x32xf32>
    %186 = vector.broadcast %165 : vector<1x32xf32> to vector<6x32xf32>
    %187 = arith.mulf %185, %186 : vector<6x32xf32>
    %188 = vector.broadcast %167 : vector<1x32xf32> to vector<6x32xf32>
    %189 = arith.addf %187, %188 : vector<6x32xf32>
    %190 = vector.extract_strided_slice %189 {offsets = [2, 0], sizes = [1, 32], strides = [1, 1]} : vector<6x32xf32> to vector<1x32xf32>
    %191 = vector.extract_strided_slice %189 {offsets = [5, 0], sizes = [1, 32], strides = [1, 1]} : vector<6x32xf32> to vector<1x32xf32>
    %192 = tpu.concatenate %190, %191 in 0 : vector<1x32xf32>, vector<1x32xf32> -> vector<2x32xf32>
    %c0_66 = arith.constant 0 : index
    %c0_67 = arith.constant 0 : index
    %c0_68 = arith.constant 0 : index
    %193 = vector.load %arg8[%c0_66, %c0_67, %c0_68] : memref<1x32x32xf32, #tpu.memory_space<vmem>>, vector<1x32x32xf32>
    %194 = vector.shape_cast %193 : vector<1x32x32xf32> to vector<32x32xf32>
    %cst_69 = arith.constant dense<0.000000e+00> : vector<2x32xf32>
    %195 = tpu.matmul %192, %194, %cst_69 {dimension_numbers = #tpu.dot_dimension_numbers<[1], [0], [0], [1], [0, 0, 1, 1], [], []>} : vector<2x32xf32>, vector<32x32xf32>, vector<2x32xf32> -> vector<2x32xf32>
    %c0_70 = arith.constant 0 : index
    %c0_71 = arith.constant 0 : index
    %c0_72 = arith.constant 0 : index
    %196 = vector.load %arg9[%c0_70, %c0_71, %c0_72] : memref<1x1x32xf32, #tpu.memory_space<vmem>>, vector<1x1x32xf32>
    %197 = vector.shape_cast %196 : vector<1x1x32xf32> to vector<1x32xf32>
    %198 = vector.broadcast %197 : vector<1x32xf32> to vector<2x32xf32>
    %199 = arith.addf %195, %198 : vector<2x32xf32>
    %c0_73 = arith.constant 0 : index
    %c0_74 = arith.constant 0 : index
    %200 = vector.load %arg3[%c0_73, %c0_74] : memref<14x32xf32, #tpu.memory_space<vmem>>, vector<14x32xf32>
    %c0_75 = arith.constant 0 : index
    %c0_76 = arith.constant 0 : index
    %c0_77 = arith.constant 0 : index
    %201 = vector.load %arg10[%c0_75, %c0_76, %c0_77] : memref<1x32x64xf32, #tpu.memory_space<vmem>>, vector<1x32x64xf32>
    %202 = vector.shape_cast %201 : vector<1x32x64xf32> to vector<32x64xf32>
    %cst_78 = arith.constant dense<0.000000e+00> : vector<14x64xf32>
    %203 = tpu.matmul %200, %202, %cst_78 {dimension_numbers = #tpu.dot_dimension_numbers<[1], [0], [0], [1], [0, 0, 1, 1], [], []>} : vector<14x32xf32>, vector<32x64xf32>, vector<14x64xf32> -> vector<14x64xf32>
    %c0_79 = arith.constant 0 : index
    %c0_80 = arith.constant 0 : index
    %c0_81 = arith.constant 0 : index
    %204 = vector.load %arg11[%c0_79, %c0_80, %c0_81] : memref<1x1x64xf32, #tpu.memory_space<vmem>>, vector<1x1x64xf32>
    %205 = vector.shape_cast %204 : vector<1x1x64xf32> to vector<1x64xf32>
    %206 = vector.broadcast %205 : vector<1x64xf32> to vector<14x64xf32>
    %207 = arith.addf %203, %206 : vector<14x64xf32>
    %208 = vector.extract_strided_slice %199 {offsets = [0, 0], sizes = [1, 32], strides = [1, 1]} : vector<2x32xf32> to vector<1x32xf32>
    %209 = vector.extract_strided_slice %207 {offsets = [0, 0], sizes = [7, 32], strides = [1, 1]} : vector<14x64xf32> to vector<7x32xf32>
    %210 = vector.extract_strided_slice %207 {offsets = [0, 32], sizes = [7, 32], strides = [1, 1]} : vector<14x64xf32> to vector<7x32xf32>
    %211 = vector.extract_strided_slice %208 {offsets = [0, 0], sizes = [1, 8], strides = [1, 1]} : vector<1x32xf32> to vector<1x8xf32>
    %212 = vector.extract_strided_slice %209 {offsets = [0, 0], sizes = [7, 8], strides = [1, 1]} : vector<7x32xf32> to vector<7x8xf32>
    %213 = vector.extract_strided_slice %210 {offsets = [0, 0], sizes = [7, 8], strides = [1, 1]} : vector<7x32xf32> to vector<7x8xf32>
    %cst_82 = arith.constant dense<0.000000e+00> : vector<1x7xf32>
    %214 = tpu.matmul %211, %212, %cst_82 {dimension_numbers = #tpu.dot_dimension_numbers<[1], [1], [0], [0], [0, 0, 1, 0], [], []>} : vector<1x8xf32>, vector<7x8xf32>, vector<1x7xf32> -> vector<1x7xf32>
    %cst_83 = arith.constant 0.353553385 : f32
    %215 = vector.broadcast %cst_83 : f32 to vector<1x7xf32>
    %216 = arith.mulf %214, %215 : vector<1x7xf32>
    %cst_84 = arith.constant dense<0xFF800000> : vector<1xf32>
    %217 = vector.multi_reduction <maximumf>, %216, %cst_84 [1] : vector<1x7xf32> to vector<1xf32>
    %218 = vector.shape_cast %217 : vector<1xf32> to vector<1x1xf32>
    %219 = vector.broadcast %218 : vector<1x1xf32> to vector<1x7xf32>
    %220 = arith.subf %216, %219 : vector<1x7xf32>
    %221 = math.exp %220 : vector<1x7xf32>
    %cst_85 = arith.constant dense<0.000000e+00> : vector<1xf32>
    %222 = vector.multi_reduction <add>, %221, %cst_85 [1] : vector<1x7xf32> to vector<1xf32>
    %223 = vector.shape_cast %222 : vector<1xf32> to vector<1x1xf32>
    %224 = tpu.reciprocal %223 {approx = true} : vector<1x1xf32> -> vector<1x1xf32>
    %225 = vector.broadcast %224 : vector<1x1xf32> to vector<1x7xf32>
    %226 = arith.mulf %221, %225 : vector<1x7xf32>
    %cst_86 = arith.constant dense<0.000000e+00> : vector<1x8xf32>
    %227 = tpu.matmul %226, %213, %cst_86 {dimension_numbers = #tpu.dot_dimension_numbers<[1], [0], [0], [1], [0, 0, 1, 1], [], []>} : vector<1x7xf32>, vector<7x8xf32>, vector<1x8xf32> -> vector<1x8xf32>
    %228 = vector.extract_strided_slice %208 {offsets = [0, 8], sizes = [1, 8], strides = [1, 1]} : vector<1x32xf32> to vector<1x8xf32>
    %229 = vector.extract_strided_slice %209 {offsets = [0, 8], sizes = [7, 8], strides = [1, 1]} : vector<7x32xf32> to vector<7x8xf32>
    %230 = vector.extract_strided_slice %210 {offsets = [0, 8], sizes = [7, 8], strides = [1, 1]} : vector<7x32xf32> to vector<7x8xf32>
    %cst_87 = arith.constant dense<0.000000e+00> : vector<1x7xf32>
    %231 = tpu.matmul %228, %229, %cst_87 {dimension_numbers = #tpu.dot_dimension_numbers<[1], [1], [0], [0], [0, 0, 1, 0], [], []>} : vector<1x8xf32>, vector<7x8xf32>, vector<1x7xf32> -> vector<1x7xf32>
    %cst_88 = arith.constant 0.353553385 : f32
    %232 = vector.broadcast %cst_88 : f32 to vector<1x7xf32>
    %233 = arith.mulf %231, %232 : vector<1x7xf32>
    %cst_89 = arith.constant dense<0xFF800000> : vector<1xf32>
    %234 = vector.multi_reduction <maximumf>, %233, %cst_89 [1] : vector<1x7xf32> to vector<1xf32>
    %235 = vector.shape_cast %234 : vector<1xf32> to vector<1x1xf32>
    %236 = vector.broadcast %235 : vector<1x1xf32> to vector<1x7xf32>
    %237 = arith.subf %233, %236 : vector<1x7xf32>
    %238 = math.exp %237 : vector<1x7xf32>
    %cst_90 = arith.constant dense<0.000000e+00> : vector<1xf32>
    %239 = vector.multi_reduction <add>, %238, %cst_90 [1] : vector<1x7xf32> to vector<1xf32>
    %240 = vector.shape_cast %239 : vector<1xf32> to vector<1x1xf32>
    %241 = tpu.reciprocal %240 {approx = true} : vector<1x1xf32> -> vector<1x1xf32>
    %242 = vector.broadcast %241 : vector<1x1xf32> to vector<1x7xf32>
    %243 = arith.mulf %238, %242 : vector<1x7xf32>
    %cst_91 = arith.constant dense<0.000000e+00> : vector<1x8xf32>
    %244 = tpu.matmul %243, %230, %cst_91 {dimension_numbers = #tpu.dot_dimension_numbers<[1], [0], [0], [1], [0, 0, 1, 1], [], []>} : vector<1x7xf32>, vector<7x8xf32>, vector<1x8xf32> -> vector<1x8xf32>
    %245 = vector.extract_strided_slice %208 {offsets = [0, 16], sizes = [1, 8], strides = [1, 1]} : vector<1x32xf32> to vector<1x8xf32>
    %246 = vector.extract_strided_slice %209 {offsets = [0, 16], sizes = [7, 8], strides = [1, 1]} : vector<7x32xf32> to vector<7x8xf32>
    %247 = vector.extract_strided_slice %210 {offsets = [0, 16], sizes = [7, 8], strides = [1, 1]} : vector<7x32xf32> to vector<7x8xf32>
    %cst_92 = arith.constant dense<0.000000e+00> : vector<1x7xf32>
    %248 = tpu.matmul %245, %246, %cst_92 {dimension_numbers = #tpu.dot_dimension_numbers<[1], [1], [0], [0], [0, 0, 1, 0], [], []>} : vector<1x8xf32>, vector<7x8xf32>, vector<1x7xf32> -> vector<1x7xf32>
    %cst_93 = arith.constant 0.353553385 : f32
    %249 = vector.broadcast %cst_93 : f32 to vector<1x7xf32>
    %250 = arith.mulf %248, %249 : vector<1x7xf32>
    %cst_94 = arith.constant dense<0xFF800000> : vector<1xf32>
    %251 = vector.multi_reduction <maximumf>, %250, %cst_94 [1] : vector<1x7xf32> to vector<1xf32>
    %252 = vector.shape_cast %251 : vector<1xf32> to vector<1x1xf32>
    %253 = vector.broadcast %252 : vector<1x1xf32> to vector<1x7xf32>
    %254 = arith.subf %250, %253 : vector<1x7xf32>
    %255 = math.exp %254 : vector<1x7xf32>
    %cst_95 = arith.constant dense<0.000000e+00> : vector<1xf32>
    %256 = vector.multi_reduction <add>, %255, %cst_95 [1] : vector<1x7xf32> to vector<1xf32>
    %257 = vector.shape_cast %256 : vector<1xf32> to vector<1x1xf32>
    %258 = tpu.reciprocal %257 {approx = true} : vector<1x1xf32> -> vector<1x1xf32>
    %259 = vector.broadcast %258 : vector<1x1xf32> to vector<1x7xf32>
    %260 = arith.mulf %255, %259 : vector<1x7xf32>
    %cst_96 = arith.constant dense<0.000000e+00> : vector<1x8xf32>
    %261 = tpu.matmul %260, %247, %cst_96 {dimension_numbers = #tpu.dot_dimension_numbers<[1], [0], [0], [1], [0, 0, 1, 1], [], []>} : vector<1x7xf32>, vector<7x8xf32>, vector<1x8xf32> -> vector<1x8xf32>
    %262 = vector.extract_strided_slice %208 {offsets = [0, 24], sizes = [1, 8], strides = [1, 1]} : vector<1x32xf32> to vector<1x8xf32>
    %263 = vector.extract_strided_slice %209 {offsets = [0, 24], sizes = [7, 8], strides = [1, 1]} : vector<7x32xf32> to vector<7x8xf32>
    %264 = vector.extract_strided_slice %210 {offsets = [0, 24], sizes = [7, 8], strides = [1, 1]} : vector<7x32xf32> to vector<7x8xf32>
    %cst_97 = arith.constant dense<0.000000e+00> : vector<1x7xf32>
    %265 = tpu.matmul %262, %263, %cst_97 {dimension_numbers = #tpu.dot_dimension_numbers<[1], [1], [0], [0], [0, 0, 1, 0], [], []>} : vector<1x8xf32>, vector<7x8xf32>, vector<1x7xf32> -> vector<1x7xf32>
    %cst_98 = arith.constant 0.353553385 : f32
    %266 = vector.broadcast %cst_98 : f32 to vector<1x7xf32>
    %267 = arith.mulf %265, %266 : vector<1x7xf32>
    %cst_99 = arith.constant dense<0xFF800000> : vector<1xf32>
    %268 = vector.multi_reduction <maximumf>, %267, %cst_99 [1] : vector<1x7xf32> to vector<1xf32>
    %269 = vector.shape_cast %268 : vector<1xf32> to vector<1x1xf32>
    %270 = vector.broadcast %269 : vector<1x1xf32> to vector<1x7xf32>
    %271 = arith.subf %267, %270 : vector<1x7xf32>
    %272 = math.exp %271 : vector<1x7xf32>
    %cst_100 = arith.constant dense<0.000000e+00> : vector<1xf32>
    %273 = vector.multi_reduction <add>, %272, %cst_100 [1] : vector<1x7xf32> to vector<1xf32>
    %274 = vector.shape_cast %273 : vector<1xf32> to vector<1x1xf32>
    %275 = tpu.reciprocal %274 {approx = true} : vector<1x1xf32> -> vector<1x1xf32>
    %276 = vector.broadcast %275 : vector<1x1xf32> to vector<1x7xf32>
    %277 = arith.mulf %272, %276 : vector<1x7xf32>
    %cst_101 = arith.constant dense<0.000000e+00> : vector<1x8xf32>
    %278 = tpu.matmul %277, %264, %cst_101 {dimension_numbers = #tpu.dot_dimension_numbers<[1], [0], [0], [1], [0, 0, 1, 1], [], []>} : vector<1x7xf32>, vector<7x8xf32>, vector<1x8xf32> -> vector<1x8xf32>
    %279 = tpu.concatenate %227, %244, %261, %278 in 1 : vector<1x8xf32>, vector<1x8xf32>, vector<1x8xf32>, vector<1x8xf32> -> vector<1x32xf32>
    %280 = vector.extract_strided_slice %199 {offsets = [1, 0], sizes = [1, 32], strides = [1, 1]} : vector<2x32xf32> to vector<1x32xf32>
    %281 = vector.extract_strided_slice %207 {offsets = [7, 0], sizes = [7, 32], strides = [1, 1]} : vector<14x64xf32> to vector<7x32xf32>
    %282 = vector.extract_strided_slice %207 {offsets = [7, 32], sizes = [7, 32], strides = [1, 1]} : vector<14x64xf32> to vector<7x32xf32>
    %283 = vector.extract_strided_slice %280 {offsets = [0, 0], sizes = [1, 8], strides = [1, 1]} : vector<1x32xf32> to vector<1x8xf32>
    %284 = vector.extract_strided_slice %281 {offsets = [0, 0], sizes = [7, 8], strides = [1, 1]} : vector<7x32xf32> to vector<7x8xf32>
    %285 = vector.extract_strided_slice %282 {offsets = [0, 0], sizes = [7, 8], strides = [1, 1]} : vector<7x32xf32> to vector<7x8xf32>
    %cst_102 = arith.constant dense<0.000000e+00> : vector<1x7xf32>
    %286 = tpu.matmul %283, %284, %cst_102 {dimension_numbers = #tpu.dot_dimension_numbers<[1], [1], [0], [0], [0, 0, 1, 0], [], []>} : vector<1x8xf32>, vector<7x8xf32>, vector<1x7xf32> -> vector<1x7xf32>
    %cst_103 = arith.constant 0.353553385 : f32
    %287 = vector.broadcast %cst_103 : f32 to vector<1x7xf32>
    %288 = arith.mulf %286, %287 : vector<1x7xf32>
    %cst_104 = arith.constant dense<0xFF800000> : vector<1xf32>
    %289 = vector.multi_reduction <maximumf>, %288, %cst_104 [1] : vector<1x7xf32> to vector<1xf32>
    %290 = vector.shape_cast %289 : vector<1xf32> to vector<1x1xf32>
    %291 = vector.broadcast %290 : vector<1x1xf32> to vector<1x7xf32>
    %292 = arith.subf %288, %291 : vector<1x7xf32>
    %293 = math.exp %292 : vector<1x7xf32>
    %cst_105 = arith.constant dense<0.000000e+00> : vector<1xf32>
    %294 = vector.multi_reduction <add>, %293, %cst_105 [1] : vector<1x7xf32> to vector<1xf32>
    %295 = vector.shape_cast %294 : vector<1xf32> to vector<1x1xf32>
    %296 = tpu.reciprocal %295 {approx = true} : vector<1x1xf32> -> vector<1x1xf32>
    %297 = vector.broadcast %296 : vector<1x1xf32> to vector<1x7xf32>
    %298 = arith.mulf %293, %297 : vector<1x7xf32>
    %cst_106 = arith.constant dense<0.000000e+00> : vector<1x8xf32>
    %299 = tpu.matmul %298, %285, %cst_106 {dimension_numbers = #tpu.dot_dimension_numbers<[1], [0], [0], [1], [0, 0, 1, 1], [], []>} : vector<1x7xf32>, vector<7x8xf32>, vector<1x8xf32> -> vector<1x8xf32>
    %300 = vector.extract_strided_slice %280 {offsets = [0, 8], sizes = [1, 8], strides = [1, 1]} : vector<1x32xf32> to vector<1x8xf32>
    %301 = vector.extract_strided_slice %281 {offsets = [0, 8], sizes = [7, 8], strides = [1, 1]} : vector<7x32xf32> to vector<7x8xf32>
    %302 = vector.extract_strided_slice %282 {offsets = [0, 8], sizes = [7, 8], strides = [1, 1]} : vector<7x32xf32> to vector<7x8xf32>
    %cst_107 = arith.constant dense<0.000000e+00> : vector<1x7xf32>
    %303 = tpu.matmul %300, %301, %cst_107 {dimension_numbers = #tpu.dot_dimension_numbers<[1], [1], [0], [0], [0, 0, 1, 0], [], []>} : vector<1x8xf32>, vector<7x8xf32>, vector<1x7xf32> -> vector<1x7xf32>
    %cst_108 = arith.constant 0.353553385 : f32
    %304 = vector.broadcast %cst_108 : f32 to vector<1x7xf32>
    %305 = arith.mulf %303, %304 : vector<1x7xf32>
    %cst_109 = arith.constant dense<0xFF800000> : vector<1xf32>
    %306 = vector.multi_reduction <maximumf>, %305, %cst_109 [1] : vector<1x7xf32> to vector<1xf32>
    %307 = vector.shape_cast %306 : vector<1xf32> to vector<1x1xf32>
    %308 = vector.broadcast %307 : vector<1x1xf32> to vector<1x7xf32>
    %309 = arith.subf %305, %308 : vector<1x7xf32>
    %310 = math.exp %309 : vector<1x7xf32>
    %cst_110 = arith.constant dense<0.000000e+00> : vector<1xf32>
    %311 = vector.multi_reduction <add>, %310, %cst_110 [1] : vector<1x7xf32> to vector<1xf32>
    %312 = vector.shape_cast %311 : vector<1xf32> to vector<1x1xf32>
    %313 = tpu.reciprocal %312 {approx = true} : vector<1x1xf32> -> vector<1x1xf32>
    %314 = vector.broadcast %313 : vector<1x1xf32> to vector<1x7xf32>
    %315 = arith.mulf %310, %314 : vector<1x7xf32>
    %cst_111 = arith.constant dense<0.000000e+00> : vector<1x8xf32>
    %316 = tpu.matmul %315, %302, %cst_111 {dimension_numbers = #tpu.dot_dimension_numbers<[1], [0], [0], [1], [0, 0, 1, 1], [], []>} : vector<1x7xf32>, vector<7x8xf32>, vector<1x8xf32> -> vector<1x8xf32>
    %317 = vector.extract_strided_slice %280 {offsets = [0, 16], sizes = [1, 8], strides = [1, 1]} : vector<1x32xf32> to vector<1x8xf32>
    %318 = vector.extract_strided_slice %281 {offsets = [0, 16], sizes = [7, 8], strides = [1, 1]} : vector<7x32xf32> to vector<7x8xf32>
    %319 = vector.extract_strided_slice %282 {offsets = [0, 16], sizes = [7, 8], strides = [1, 1]} : vector<7x32xf32> to vector<7x8xf32>
    %cst_112 = arith.constant dense<0.000000e+00> : vector<1x7xf32>
    %320 = tpu.matmul %317, %318, %cst_112 {dimension_numbers = #tpu.dot_dimension_numbers<[1], [1], [0], [0], [0, 0, 1, 0], [], []>} : vector<1x8xf32>, vector<7x8xf32>, vector<1x7xf32> -> vector<1x7xf32>
    %cst_113 = arith.constant 0.353553385 : f32
    %321 = vector.broadcast %cst_113 : f32 to vector<1x7xf32>
    %322 = arith.mulf %320, %321 : vector<1x7xf32>
    %cst_114 = arith.constant dense<0xFF800000> : vector<1xf32>
    %323 = vector.multi_reduction <maximumf>, %322, %cst_114 [1] : vector<1x7xf32> to vector<1xf32>
    %324 = vector.shape_cast %323 : vector<1xf32> to vector<1x1xf32>
    %325 = vector.broadcast %324 : vector<1x1xf32> to vector<1x7xf32>
    %326 = arith.subf %322, %325 : vector<1x7xf32>
    %327 = math.exp %326 : vector<1x7xf32>
    %cst_115 = arith.constant dense<0.000000e+00> : vector<1xf32>
    %328 = vector.multi_reduction <add>, %327, %cst_115 [1] : vector<1x7xf32> to vector<1xf32>
    %329 = vector.shape_cast %328 : vector<1xf32> to vector<1x1xf32>
    %330 = tpu.reciprocal %329 {approx = true} : vector<1x1xf32> -> vector<1x1xf32>
    %331 = vector.broadcast %330 : vector<1x1xf32> to vector<1x7xf32>
    %332 = arith.mulf %327, %331 : vector<1x7xf32>
    %cst_116 = arith.constant dense<0.000000e+00> : vector<1x8xf32>
    %333 = tpu.matmul %332, %319, %cst_116 {dimension_numbers = #tpu.dot_dimension_numbers<[1], [0], [0], [1], [0, 0, 1, 1], [], []>} : vector<1x7xf32>, vector<7x8xf32>, vector<1x8xf32> -> vector<1x8xf32>
    %334 = vector.extract_strided_slice %280 {offsets = [0, 24], sizes = [1, 8], strides = [1, 1]} : vector<1x32xf32> to vector<1x8xf32>
    %335 = vector.extract_strided_slice %281 {offsets = [0, 24], sizes = [7, 8], strides = [1, 1]} : vector<7x32xf32> to vector<7x8xf32>
    %336 = vector.extract_strided_slice %282 {offsets = [0, 24], sizes = [7, 8], strides = [1, 1]} : vector<7x32xf32> to vector<7x8xf32>
    %cst_117 = arith.constant dense<0.000000e+00> : vector<1x7xf32>
    %337 = tpu.matmul %334, %335, %cst_117 {dimension_numbers = #tpu.dot_dimension_numbers<[1], [1], [0], [0], [0, 0, 1, 0], [], []>} : vector<1x8xf32>, vector<7x8xf32>, vector<1x7xf32> -> vector<1x7xf32>
    %cst_118 = arith.constant 0.353553385 : f32
    %338 = vector.broadcast %cst_118 : f32 to vector<1x7xf32>
    %339 = arith.mulf %337, %338 : vector<1x7xf32>
    %cst_119 = arith.constant dense<0xFF800000> : vector<1xf32>
    %340 = vector.multi_reduction <maximumf>, %339, %cst_119 [1] : vector<1x7xf32> to vector<1xf32>
    %341 = vector.shape_cast %340 : vector<1xf32> to vector<1x1xf32>
    %342 = vector.broadcast %341 : vector<1x1xf32> to vector<1x7xf32>
    %343 = arith.subf %339, %342 : vector<1x7xf32>
    %344 = math.exp %343 : vector<1x7xf32>
    %cst_120 = arith.constant dense<0.000000e+00> : vector<1xf32>
    %345 = vector.multi_reduction <add>, %344, %cst_120 [1] : vector<1x7xf32> to vector<1xf32>
    %346 = vector.shape_cast %345 : vector<1xf32> to vector<1x1xf32>
    %347 = tpu.reciprocal %346 {approx = true} : vector<1x1xf32> -> vector<1x1xf32>
    %348 = vector.broadcast %347 : vector<1x1xf32> to vector<1x7xf32>
    %349 = arith.mulf %344, %348 : vector<1x7xf32>
    %cst_121 = arith.constant dense<0.000000e+00> : vector<1x8xf32>
    %350 = tpu.matmul %349, %336, %cst_121 {dimension_numbers = #tpu.dot_dimension_numbers<[1], [0], [0], [1], [0, 0, 1, 1], [], []>} : vector<1x7xf32>, vector<7x8xf32>, vector<1x8xf32> -> vector<1x8xf32>
    %351 = tpu.concatenate %299, %316, %333, %350 in 1 : vector<1x8xf32>, vector<1x8xf32>, vector<1x8xf32>, vector<1x8xf32> -> vector<1x32xf32>
    %352 = tpu.concatenate %279, %351 in 0 : vector<1x32xf32>, vector<1x32xf32> -> vector<2x32xf32>
    %c0_122 = arith.constant 0 : index
    %c0_123 = arith.constant 0 : index
    %c0_124 = arith.constant 0 : index
    %353 = vector.load %arg12[%c0_122, %c0_123, %c0_124] : memref<1x32x32xf32, #tpu.memory_space<vmem>>, vector<1x32x32xf32>
    %354 = vector.shape_cast %353 : vector<1x32x32xf32> to vector<32x32xf32>
    %cst_125 = arith.constant dense<0.000000e+00> : vector<2x32xf32>
    %355 = tpu.matmul %352, %354, %cst_125 {dimension_numbers = #tpu.dot_dimension_numbers<[1], [0], [0], [1], [0, 0, 1, 1], [], []>} : vector<2x32xf32>, vector<32x32xf32>, vector<2x32xf32> -> vector<2x32xf32>
    %c0_126 = arith.constant 0 : index
    %c0_127 = arith.constant 0 : index
    %c0_128 = arith.constant 0 : index
    %356 = vector.load %arg13[%c0_126, %c0_127, %c0_128] : memref<1x1x32xf32, #tpu.memory_space<vmem>>, vector<1x1x32xf32>
    %357 = vector.shape_cast %356 : vector<1x1x32xf32> to vector<1x32xf32>
    %358 = vector.broadcast %357 : vector<1x32xf32> to vector<2x32xf32>
    %359 = arith.addf %355, %358 : vector<2x32xf32>
    %360 = arith.addf %192, %359 : vector<2x32xf32>
    %361 = tpu.iota {dimensions = array<i32: 0>} : vector<6x32xi32>
    %c2_i32 = arith.constant 2 : i32
    %362 = vector.broadcast %c2_i32 : i32 to vector<6x32xi32>
    %363 = arith.cmpi eq, %361, %362 : vector<6x32xi32>
    %364 = vector.extract_strided_slice %360 {offsets = [0, 0], sizes = [1, 32], strides = [1, 1]} : vector<2x32xf32> to vector<1x32xf32>
    %365 = vector.shape_cast %364 : vector<1x32xf32> to vector<1x32xf32>
    %366 = vector.broadcast %365 : vector<1x32xf32> to vector<6x32xf32>
    %367 = arith.select %363, %366, %189 : vector<6x32xi1>, vector<6x32xf32>
    %c5_i32 = arith.constant 5 : i32
    %368 = vector.broadcast %c5_i32 : i32 to vector<6x32xi32>
    %369 = arith.cmpi eq, %361, %368 : vector<6x32xi32>
    %370 = vector.extract_strided_slice %360 {offsets = [1, 0], sizes = [1, 32], strides = [1, 1]} : vector<2x32xf32> to vector<1x32xf32>
    %371 = vector.shape_cast %370 : vector<1x32xf32> to vector<1x32xf32>
    %372 = vector.broadcast %371 : vector<1x32xf32> to vector<6x32xf32>
    %373 = arith.select %369, %372, %367 : vector<6x32xi1>, vector<6x32xf32>
    %c0_129 = arith.constant 0 : index
    %c0_130 = arith.constant 0 : index
    %c0_131 = arith.constant 0 : index
    %374 = vector.load %arg16[%c0_129, %c0_130, %c0_131] : memref<1x1x32xf32, #tpu.memory_space<vmem>>, vector<1x1x32xf32>
    %375 = vector.shape_cast %374 : vector<1x1x32xf32> to vector<1x32xf32>
    %c0_132 = arith.constant 0 : index
    %c0_133 = arith.constant 0 : index
    %c0_134 = arith.constant 0 : index
    %376 = vector.load %arg17[%c0_132, %c0_133, %c0_134] : memref<1x1x32xf32, #tpu.memory_space<vmem>>, vector<1x1x32xf32>
    %377 = vector.shape_cast %376 : vector<1x1x32xf32> to vector<1x32xf32>
    %cst_135 = arith.constant dense<0.000000e+00> : vector<6xf32>
    %378 = vector.multi_reduction <add>, %373, %cst_135 [1] : vector<6x32xf32> to vector<6xf32>
    %379 = vector.shape_cast %378 : vector<6xf32> to vector<6x1xf32>
    %cst_136 = arith.constant 3.200000e+01 : f32
    %380 = vector.broadcast %cst_136 : f32 to vector<6x1xf32>
    %381 = arith.divf %379, %380 : vector<6x1xf32>
    %382 = vector.broadcast %381 : vector<6x1xf32> to vector<6x32xf32>
    %383 = arith.subf %373, %382 : vector<6x32xf32>
    %384 = arith.mulf %383, %383 : vector<6x32xf32>
    %cst_137 = arith.constant dense<0.000000e+00> : vector<6xf32>
    %385 = vector.multi_reduction <add>, %384, %cst_137 [1] : vector<6x32xf32> to vector<6xf32>
    %386 = vector.shape_cast %385 : vector<6xf32> to vector<6x1xf32>
    %cst_138 = arith.constant 3.200000e+01 : f32
    %387 = vector.broadcast %cst_138 : f32 to vector<6x1xf32>
    %388 = arith.divf %386, %387 : vector<6x1xf32>
    %389 = vector.broadcast %381 : vector<6x1xf32> to vector<6x32xf32>
    %390 = arith.subf %373, %389 : vector<6x32xf32>
    %cst_139 = arith.constant 9.99999974E-6 : f32
    %391 = vector.broadcast %cst_139 : f32 to vector<6x1xf32>
    %392 = arith.addf %388, %391 : vector<6x1xf32>
    %393 = math.rsqrt %392 : vector<6x1xf32>
    %394 = vector.broadcast %393 : vector<6x1xf32> to vector<6x32xf32>
    %395 = arith.mulf %390, %394 : vector<6x32xf32>
    %396 = vector.broadcast %375 : vector<1x32xf32> to vector<6x32xf32>
    %397 = arith.mulf %395, %396 : vector<6x32xf32>
    %398 = vector.broadcast %377 : vector<1x32xf32> to vector<6x32xf32>
    %399 = arith.addf %397, %398 : vector<6x32xf32>
    %c0_140 = arith.constant 0 : index
    %c0_141 = arith.constant 0 : index
    %c0_142 = arith.constant 0 : index
    %400 = vector.load %arg20[%c0_140, %c0_141, %c0_142] : memref<1x32x64xf32, #tpu.memory_space<vmem>>, vector<1x32x64xf32>
    %401 = vector.shape_cast %400 : vector<1x32x64xf32> to vector<32x64xf32>
    %cst_143 = arith.constant dense<0.000000e+00> : vector<6x64xf32>
    %402 = tpu.matmul %399, %401, %cst_143 {dimension_numbers = #tpu.dot_dimension_numbers<[1], [0], [0], [1], [0, 0, 1, 1], [], []>} : vector<6x32xf32>, vector<32x64xf32>, vector<6x64xf32> -> vector<6x64xf32>
    %c0_144 = arith.constant 0 : index
    %c0_145 = arith.constant 0 : index
    %c0_146 = arith.constant 0 : index
    %403 = vector.load %arg21[%c0_144, %c0_145, %c0_146] : memref<1x1x64xf32, #tpu.memory_space<vmem>>, vector<1x1x64xf32>
    %404 = vector.shape_cast %403 : vector<1x1x64xf32> to vector<1x64xf32>
    %405 = vector.broadcast %404 : vector<1x64xf32> to vector<6x64xf32>
    %406 = arith.addf %402, %405 : vector<6x64xf32>
    %cst_147 = arith.constant 5.000000e-01 : f32
    %407 = vector.broadcast %cst_147 : f32 to vector<6x64xf32>
    %408 = arith.mulf %407, %406 : vector<6x64xf32>
    %cst_148 = arith.constant 4.471500e-02 : f32
    %409 = vector.broadcast %cst_148 : f32 to vector<6x64xf32>
    %410 = arith.mulf %409, %406 : vector<6x64xf32>
    %411 = arith.mulf %410, %406 : vector<6x64xf32>
    %412 = arith.mulf %411, %406 : vector<6x64xf32>
    %413 = arith.addf %406, %412 : vector<6x64xf32>
    %cst_149 = arith.constant 0.797884583 : f32
    %414 = vector.broadcast %cst_149 : f32 to vector<6x64xf32>
    %415 = arith.mulf %414, %413 : vector<6x64xf32>
    %416 = math.tanh %415 : vector<6x64xf32>
    %cst_150 = arith.constant 1.000000e+00 : f32
    %417 = vector.broadcast %cst_150 : f32 to vector<6x64xf32>
    %418 = arith.addf %417, %416 : vector<6x64xf32>
    %419 = arith.mulf %408, %418 : vector<6x64xf32>
    %c0_151 = arith.constant 0 : index
    %c0_152 = arith.constant 0 : index
    %c0_153 = arith.constant 0 : index
    %420 = vector.load %arg22[%c0_151, %c0_152, %c0_153] : memref<1x64x32xf32, #tpu.memory_space<vmem>>, vector<1x64x32xf32>
    %421 = vector.shape_cast %420 : vector<1x64x32xf32> to vector<64x32xf32>
    %cst_154 = arith.constant dense<0.000000e+00> : vector<6x32xf32>
    %422 = tpu.matmul %419, %421, %cst_154 {dimension_numbers = #tpu.dot_dimension_numbers<[1], [0], [0], [1], [0, 0, 1, 1], [], []>} : vector<6x64xf32>, vector<64x32xf32>, vector<6x32xf32> -> vector<6x32xf32>
    %c0_155 = arith.constant 0 : index
    %c0_156 = arith.constant 0 : index
    %c0_157 = arith.constant 0 : index
    %423 = vector.load %arg23[%c0_155, %c0_156, %c0_157] : memref<1x1x32xf32, #tpu.memory_space<vmem>>, vector<1x1x32xf32>
    %424 = vector.shape_cast %423 : vector<1x1x32xf32> to vector<1x32xf32>
    %425 = vector.broadcast %424 : vector<1x32xf32> to vector<6x32xf32>
    %426 = arith.addf %422, %425 : vector<6x32xf32>
    %427 = arith.addf %399, %426 : vector<6x32xf32>
    %c0_158 = arith.constant 0 : index
    %c0_159 = arith.constant 0 : index
    %c0_160 = arith.constant 0 : index
    %428 = vector.load %arg18[%c0_158, %c0_159, %c0_160] : memref<1x1x32xf32, #tpu.memory_space<vmem>>, vector<1x1x32xf32>
    %429 = vector.shape_cast %428 : vector<1x1x32xf32> to vector<1x32xf32>
    %c0_161 = arith.constant 0 : index
    %c0_162 = arith.constant 0 : index
    %c0_163 = arith.constant 0 : index
    %430 = vector.load %arg19[%c0_161, %c0_162, %c0_163] : memref<1x1x32xf32, #tpu.memory_space<vmem>>, vector<1x1x32xf32>
    %431 = vector.shape_cast %430 : vector<1x1x32xf32> to vector<1x32xf32>
    %cst_164 = arith.constant dense<0.000000e+00> : vector<6xf32>
    %432 = vector.multi_reduction <add>, %427, %cst_164 [1] : vector<6x32xf32> to vector<6xf32>
    %433 = vector.shape_cast %432 : vector<6xf32> to vector<6x1xf32>
    %cst_165 = arith.constant 3.200000e+01 : f32
    %434 = vector.broadcast %cst_165 : f32 to vector<6x1xf32>
    %435 = arith.divf %433, %434 : vector<6x1xf32>
    %436 = vector.broadcast %435 : vector<6x1xf32> to vector<6x32xf32>
    %437 = arith.subf %427, %436 : vector<6x32xf32>
    %438 = arith.mulf %437, %437 : vector<6x32xf32>
    %cst_166 = arith.constant dense<0.000000e+00> : vector<6xf32>
    %439 = vector.multi_reduction <add>, %438, %cst_166 [1] : vector<6x32xf32> to vector<6xf32>
    %440 = vector.shape_cast %439 : vector<6xf32> to vector<6x1xf32>
    %cst_167 = arith.constant 3.200000e+01 : f32
    %441 = vector.broadcast %cst_167 : f32 to vector<6x1xf32>
    %442 = arith.divf %440, %441 : vector<6x1xf32>
    %443 = vector.broadcast %435 : vector<6x1xf32> to vector<6x32xf32>
    %444 = arith.subf %427, %443 : vector<6x32xf32>
    %cst_168 = arith.constant 9.99999974E-6 : f32
    %445 = vector.broadcast %cst_168 : f32 to vector<6x1xf32>
    %446 = arith.addf %442, %445 : vector<6x1xf32>
    %447 = math.rsqrt %446 : vector<6x1xf32>
    %448 = vector.broadcast %447 : vector<6x1xf32> to vector<6x32xf32>
    %449 = arith.mulf %444, %448 : vector<6x32xf32>
    %450 = vector.broadcast %429 : vector<1x32xf32> to vector<6x32xf32>
    %451 = arith.mulf %449, %450 : vector<6x32xf32>
    %452 = vector.broadcast %431 : vector<1x32xf32> to vector<6x32xf32>
    %453 = arith.addf %451, %452 : vector<6x32xf32>
    %c0_169 = arith.constant 0 : index
    %c0_170 = arith.constant 0 : index
    %454 = vector.load %arg24[%c0_169, %c0_170] : memref<6x32xf32, #tpu.memory_space<vmem>>, vector<6x32xf32>
    tpu.vector_store %arg24[%c0_169, %c0_170], %453 {strides = array<i32>} : memref<6x32xf32, #tpu.memory_space<vmem>>, vector<6x32xf32>,
    return
  }
  func.func @transform_0(%arg0: i32, %arg1: i32) -> (i32, i32) {
    %c0_i32 = arith.constant 0 : i32
    %c0_i32_0 = arith.constant 0 : i32
    return %arg0, %c0_i32 : i32, i32
  }
  func.func @transform_1(%arg0: i32, %arg1: i32) -> (i32, i32) {
    %c0_i32 = arith.constant 0 : i32
    %c0_i32_0 = arith.constant 0 : i32
    return %arg0, %c0_i32 : i32, i32
  }
  func.func @transform_2(%arg0: i32, %arg1: i32) -> (i32, i32, i32) {
    %c0_i32 = arith.constant 0 : i32
    %c0_i32_0 = arith.constant 0 : i32
    %c0_i32_1 = arith.constant 0 : i32
    return %arg1, %c0_i32, %c0_i32_0 : i32, i32, i32
  }
  func.func @transform_3(%arg0: i32, %arg1: i32) -> (i32, i32, i32) {
    %c0_i32 = arith.constant 0 : i32
    %c0_i32_0 = arith.constant 0 : i32
    %c0_i32_1 = arith.constant 0 : i32
    return %arg1, %c0_i32, %c0_i32_0 : i32, i32, i32
  }
  func.func @transform_4(%arg0: i32, %arg1: i32) -> (i32, i32, i32) {
    %c0_i32 = arith.constant 0 : i32
    %c0_i32_0 = arith.constant 0 : i32
    %c0_i32_1 = arith.constant 0 : i32
    return %arg1, %c0_i32, %c0_i32_0 : i32, i32, i32
  }
  func.func @transform_5(%arg0: i32, %arg1: i32) -> (i32, i32, i32) {
    %c0_i32 = arith.constant 0 : i32
    %c0_i32_0 = arith.constant 0 : i32
    %c0_i32_1 = arith.constant 0 : i32
    return %arg1, %c0_i32, %c0_i32_0 : i32, i32, i32
  }
  func.func @transform_6(%arg0: i32, %arg1: i32) -> (i32, i32, i32) {
    %c0_i32 = arith.constant 0 : i32
    %c0_i32_0 = arith.constant 0 : i32
    %c0_i32_1 = arith.constant 0 : i32
    return %arg1, %c0_i32, %c0_i32_0 : i32, i32, i32
  }
  func.func @transform_7(%arg0: i32, %arg1: i32) -> (i32, i32, i32) {
    %c0_i32 = arith.constant 0 : i32
    %c0_i32_0 = arith.constant 0 : i32
    %c0_i32_1 = arith.constant 0 : i32
    return %arg1, %c0_i32, %c0_i32_0 : i32, i32, i32
  }
  func.func @transform_8(%arg0: i32, %arg1: i32) -> (i32, i32, i32) {
    %c0_i32 = arith.constant 0 : i32
    %c0_i32_0 = arith.constant 0 : i32
    %c0_i32_1 = arith.constant 0 : i32
    return %arg1, %c0_i32, %c0_i32_0 : i32, i32, i32
  }
  func.func @transform_9(%arg0: i32, %arg1: i32) -> (i32, i32, i32) {
    %c0_i32 = arith.constant 0 : i32
    %c0_i32_0 = arith.constant 0 : i32
    %c0_i32_1 = arith.constant 0 : i32
    return %arg1, %c0_i32, %c0_i32_0 : i32, i32, i32
  }
  func.func @transform_10(%arg0: i32, %arg1: i32) -> (i32, i32, i32) {
    %c0_i32 = arith.constant 0 : i32
    %c0_i32_0 = arith.constant 0 : i32
    %c0_i32_1 = arith.constant 0 : i32
    return %arg1, %c0_i32, %c0_i32_0 : i32, i32, i32
  }
  func.func @transform_11(%arg0: i32, %arg1: i32) -> (i32, i32, i32) {
    %c0_i32 = arith.constant 0 : i32
    %c0_i32_0 = arith.constant 0 : i32
    %c0_i32_1 = arith.constant 0 : i32
    return %arg1, %c0_i32, %c0_i32_0 : i32, i32, i32
  }
  func.func @transform_12(%arg0: i32, %arg1: i32) -> (i32, i32, i32) {
    %c0_i32 = arith.constant 0 : i32
    %c0_i32_0 = arith.constant 0 : i32
    %c0_i32_1 = arith.constant 0 : i32
    return %arg1, %c0_i32, %c0_i32_0 : i32, i32, i32
  }
  func.func @transform_13(%arg0: i32, %arg1: i32) -> (i32, i32, i32) {
    %c0_i32 = arith.constant 0 : i32
    %c0_i32_0 = arith.constant 0 : i32
    %c0_i32_1 = arith.constant 0 : i32
    return %arg1, %c0_i32, %c0_i32_0 : i32, i32, i32
  }
  func.func @transform_14(%arg0: i32, %arg1: i32) -> (i32, i32, i32) {
    %c0_i32 = arith.constant 0 : i32
    %c0_i32_0 = arith.constant 0 : i32
    %c0_i32_1 = arith.constant 0 : i32
    return %arg1, %c0_i32, %c0_i32_0 : i32, i32, i32
  }
  func.func @transform_15(%arg0: i32, %arg1: i32) -> (i32, i32, i32) {
    %c0_i32 = arith.constant 0 : i32
    %c0_i32_0 = arith.constant 0 : i32
    %c0_i32_1 = arith.constant 0 : i32
    return %arg1, %c0_i32, %c0_i32_0 : i32, i32, i32
  }
  func.func @transform_16(%arg0: i32, %arg1: i32) -> (i32, i32, i32) {
    %c0_i32 = arith.constant 0 : i32
    %c0_i32_0 = arith.constant 0 : i32
    %c0_i32_1 = arith.constant 0 : i32
    return %arg1, %c0_i32, %c0_i32_0 : i32, i32, i32
  }
  func.func @transform_17(%arg0: i32, %arg1: i32) -> (i32, i32, i32) {
    %c0_i32 = arith.constant 0 : i32
    %c0_i32_0 = arith.constant 0 : i32
    %c0_i32_1 = arith.constant 0 : i32
    return %arg1, %c0_i32, %c0_i32_0 : i32, i32, i32
  }
  func.func @transform_18(%arg0: i32, %arg1: i32) -> (i32, i32, i32) {
    %c0_i32 = arith.constant 0 : i32
    %c0_i32_0 = arith.constant 0 : i32
    %c0_i32_1 = arith.constant 0 : i32
    return %arg1, %c0_i32, %c0_i32_0 : i32, i32, i32
  }
  func.func @transform_19(%arg0: i32, %arg1: i32) -> (i32, i32, i32) {
    %c0_i32 = arith.constant 0 : i32
    %c0_i32_0 = arith.constant 0 : i32
    %c0_i32_1 = arith.constant 0 : i32
    return %arg1, %c0_i32, %c0_i32_0 : i32, i32, i32
  }
  func.func @transform_20(%arg0: i32, %arg1: i32) -> (i32, i32, i32) {
    %c0_i32 = arith.constant 0 : i32
    %c0_i32_0 = arith.constant 0 : i32
    %c0_i32_1 = arith.constant 0 : i32
    return %arg1, %c0_i32, %c0_i32_0 : i32, i32, i32
  }
  func.func @transform_21(%arg0: i32, %arg1: i32) -> (i32, i32, i32) {
    %c0_i32 = arith.constant 0 : i32
    %c0_i32_0 = arith.constant 0 : i32
    %c0_i32_1 = arith.constant 0 : i32
    return %arg1, %c0_i32, %c0_i32_0 : i32, i32, i32
  }
  func.func @transform_22(%arg0: i32, %arg1: i32) -> (i32, i32) {
    %c0_i32 = arith.constant 0 : i32
    %c0_i32_0 = arith.constant 0 : i32
    return %arg0, %c0_i32 : i32, i32
  }
}

</mosaic_0001>

<llo_original>
// kernel: tpu_custom_call.1
$region0: #{tpu_custom_call.1}
  #allocation0 [shape = 'u32[]', space=smem, size = 0x4, offset = 0x4, fixed_abs, tag = 'smem constant byte address 0x4 - core index']
  #allocation1 [shape = 'u32[72,128]{1,0:T(1,128)}', space=vmem, size = 0x9000, scoped, tag = 'internal scratch']
  %s0 = inlined_call_operand.hbm [shape: f32[6,32], index: 0, kind: input, shape index: {}]
  %s1 = inlined_call_operand.hbm [shape: f32[14,32], index: 1, kind: input, shape index: {}]
  %s2 = inlined_call_operand.vmem [shape: f32[2,32,96], index: 2, kind: input, shape index: {}]
  %s3 = inlined_call_operand.vmem [shape: f32[2,1,96], index: 3, kind: input, shape index: {}]
  %s4 = inlined_call_operand.vmem [shape: f32[2,32,32], index: 4, kind: input, shape index: {}]
  %s5 = inlined_call_operand.hbm [shape: f32[2,1,32], index: 5, kind: input, shape index: {}]
  %s6 = inlined_call_operand.vmem [shape: f32[2,32,32], index: 6, kind: input, shape index: {}]
  %s7 = inlined_call_operand.vmem [shape: f32[2,1,32], index: 7, kind: input, shape index: {}]
  %s8 = inlined_call_operand.hbm [shape: f32[2,32,64], index: 8, kind: input, shape index: {}]
  %s9 = inlined_call_operand.vmem [shape: f32[2,1,64], index: 9, kind: input, shape index: {}]
  %s10 = inlined_call_operand.hbm [shape: f32[2,32,32], index: 10, kind: input, shape index: {}]
  %s11 = inlined_call_operand.vmem [shape: f32[2,1,32], index: 11, kind: input, shape index: {}]
  %s12 = inlined_call_operand.vmem [shape: f32[2,1,32], index: 12, kind: input, shape index: {}]
  %s13 = inlined_call_operand.hbm [shape: f32[2,1,32], index: 13, kind: input, shape index: {}]
  %s14 = inlined_call_operand.hbm [shape: f32[2,1,32], index: 14, kind: input, shape index: {}]
  %s15 = inlined_call_operand.vmem [shape: f32[2,1,32], index: 15, kind: input, shape index: {}]
  %s16 = inlined_call_operand.vmem [shape: f32[2,1,32], index: 16, kind: input, shape index: {}]
  %s17 = inlined_call_operand.hbm [shape: f32[2,1,32], index: 17, kind: input, shape index: {}]
  %s18 = inlined_call_operand.hbm [shape: f32[2,32,64], index: 18, kind: input, shape index: {}]
  %s19 = inlined_call_operand.vmem [shape: f32[2,1,64], index: 19, kind: input, shape index: {}]
  %s20 = inlined_call_operand.vmem [shape: f32[2,64,32], index: 20, kind: input, shape index: {}]
  %s21 = inlined_call_operand.vmem [shape: f32[2,1,32], index: 21, kind: input, shape index: {}]
  %s22 = inlined_call_operand.hbm [shape: f32[6,32], index: 22, kind: output, shape index: {}]
  %s23 = sld [smem:[#allocation0]]
  $region161: #{tpu_custom_call.1} parent=0
    _
  %s25 = ssub.s32 1, %s23
  %s26 = scalar_select 0, %s25, %s23
  $region1: #{tpu_custom_call.1} parent=0
    #allocation2 [shape = 'u8[4096]{0}', space=vmem, size = 0x1000, scoped, tag = 'input window, operand 0, single buffered']
    #allocation3 [shape = 's32[2]{0}', space=sflag, size = 0x8, scoped, tag = 'scoped memory for tpu_custom_call.1']
    #allocation4 [shape = 's32[2]{0}', space=sflag, size = 0x8, scoped, tag = 'scoped memory for tpu_custom_call.1']
    #allocation5 [shape = 'u8[8192]{0}', space=vmem, size = 0x2000, scoped, tag = 'input window, operand 1, single buffered']
    #allocation6 [shape = 's32[1]{0}', space=sflag, size = 0x4, scoped, tag = 'scoped memory for tpu_custom_call.1']
    #allocation7 [shape = 'u8[1024]{0}', space=vmem, size = 0x400, scoped, tag = 'input window, operand 5']
    #allocation8 [shape = 'u8[32768]{0}', space=vmem, size = 0x8000, scoped, tag = 'input window, operand 8']
    #allocation9 [shape = 'u8[32768]{0}', space=vmem, size = 0x8000, scoped, tag = 'input window, operand 10']
    #allocation10 [shape = 'u8[1024]{0}', space=vmem, size = 0x400, scoped, tag = 'input window, operand 13']
    #allocation11 [shape = 'u8[1024]{0}', space=vmem, size = 0x400, scoped, tag = 'input window, operand 14']
    #allocation12 [shape = 'u8[1024]{0}', space=vmem, size = 0x400, scoped, tag = 'input window, operand 17']
    #allocation13 [shape = 'u8[32768]{0}', space=vmem, size = 0x8000, scoped, tag = 'input window, operand 18']
    #allocation14 [shape = 'u8[4096]{0}', space=vmem, size = 0x1000, scoped, tag = 'output window, operand 0, single buffered']
    %27 = vsyncpa [#allocation3], 0
    %28 = vsyncpa [#allocation6], 0
    %29 = vsyncpa [#allocation4], 0
    loop: start=0, step=1, limit=4
    $region2: #{tpu_custom_call.1} parent=1 // loop_pre_header
      _
    $region3: #{tpu_custom_call.1} parent=1 // loop_header
      %s31 = sphi 0, %s35
      %p32 = scmp.ge.s32.totalorder %s31, 4
      %s38 = sphi 0, %s50
      %s39 = sphi 0, %s46
      %s40 = sphi 0, %s38
      %s41 = sphi 0, %s39
      %s42 = sphi 0, %s40
      %s43 = sphi 0, %s41
      %s53 = sphi 0, %s55
      %s56 = sphi 0, %s53
      %s57 = sphi 0, %s56
      %s73 = sphi 0, %s57
      %s79 = sphi 0, %s81
      %s82 = sphi 0, %s79
      %s83 = sphi 0, %s82
      %s99 = sphi 0, %s83
      %s105 = sphi 0, %s107
      %s108 = sphi 0, %s105
      %s109 = sphi 0, %s108
      %s125 = sphi 0, %s109
      %s131 = sphi 0, %s133
      %s134 = sphi 0, %s131
      %s135 = sphi 0, %s134
      %s151 = sphi 0, %s135
      %s157 = sphi 0, %s159
      %s160 = sphi 0, %s157
      %s161 = sphi 0, %s160
      %s177 = sphi 0, %s161
      %s183 = sphi 0, %s185
      %s186 = sphi 0, %s183
      %s187 = sphi 0, %s186
      %s203 = sphi 0, %s187
      %s209 = sphi 0, %s211
      %s212 = sphi 0, %s209
      %s213 = sphi 0, %s212
      %s229 = sphi 0, %s213
      %s235 = sphi 0, %s237
      %s238 = sphi 0, %s235
      %s239 = sphi 0, %s238
      %s255 = sphi 0, %s239
      %s261 = sphi 0, %s263
      %s264 = sphi 0, %s261
      %s265 = sphi 0, %s264
      %s281 = sphi 0, %s265
      %s287 = sphi 0, %s289
      %s290 = sphi 0, %s287
      %s291 = sphi 0, %s290
      %s307 = sphi 0, %s291
      %s313 = sphi 0, %s315
      %s316 = sphi 0, %s313
      %s317 = sphi 0, %s316
      %s333 = sphi 0, %s317
      %s339 = sphi 0, %s341
      %s342 = sphi 0, %s339
      %s343 = sphi 0, %s342
      %s359 = sphi 0, %s343
      %s365 = sphi 0, %s367
      %s368 = sphi 0, %s365
      %s369 = sphi 0, %s368
      %s385 = sphi 0, %s369
      %s391 = sphi 0, %s393
      %s394 = sphi 0, %s391
      %s395 = sphi 0, %s394
      %s411 = sphi 0, %s395
      %s417 = sphi 0, %s419
      %s420 = sphi 0, %s417
      %s421 = sphi 0, %s420
      %s437 = sphi 0, %s421
      %s443 = sphi 0, %s445
      %s446 = sphi 0, %s443
      %s447 = sphi 0, %s446
      %s463 = sphi 0, %s447
      %s469 = sphi 0, %s471
      %s472 = sphi 0, %s469
      %s473 = sphi 0, %s472
      %s489 = sphi 0, %s473
      %s495 = sphi 0, %s497
      %s498 = sphi 0, %s495
      %s499 = sphi 0, %s498
      %s515 = sphi 0, %s499
      %s521 = sphi 0, %s523
      %s524 = sphi 0, %s521
      %s525 = sphi 0, %s524
      %s541 = sphi 0, %s525
      %s547 = sphi 0, %s549
      %s550 = sphi 0, %s547
      %s551 = sphi 0, %s550
      %s567 = sphi 0, %s551
      %s573 = sphi 0, %s575
      %s576 = sphi 0, %s573
      %s577 = sphi 0, %s576
      %s593 = sphi 0, %s577
      %s599 = sphi 0, %s601
      %s602 = sphi 0, %s599
      %s603 = sphi 0, %s602
      %s619 = sphi 0, %s603
      %s625 = sphi 0, %s627
      %s628 = sphi 0, %s625
      %s629 = sphi 0, %s628
      %s645 = sphi 0, %s629
    $region4: #{tpu_custom_call.1} parent=1 // loop_header_branch
      %34 = sbr.rel (%p32) target = $region8
    $region5: #{tpu_custom_call.1} parent=1 // loop_body
      %s36 = ssub.s32 %s31, 1
      %s37 = ssub.s32 %s31, 2
      %s44 = sadd.s32 1, %s39
      %p45 = scmp.ge.s32.totalorder %s44, 2
      %s46 = scalar_select %p45, 0, %s44
      %s47 = sadd.s32 1, %s38
      %s48 = scalar_select %p45, %s47, %s38
      %p49 = scmp.ge.s32.totalorder %s48, 1
      %s50 = scalar_select %p49, 0, %s48
      %s51 = ssub.s32 %s38, %s50
      %p52 = scmp.eq.s32.totalorder %s51, 0
      %s54 = sadd.s32 %s53, 1
      %s55 = scalar_select %p52, %s53, %s54
      %p58 = pneg %p52
      %p59 = scmp.eq.s32.totalorder %s31, 1
      %p60 = por %p58, %p59
      %p61 = scmp.ne.s32.totalorder %s53, %s56
      %p62 = scmp.eq.s32.totalorder %s31, 0
      %p63 = por %p61, %p62
      %p64 = scmp.ne.s32.totalorder %s53, %s56
      %p65 = scmp.eq.s32.totalorder %s36, 1
      %p66 = por %p64, %p65
      %p67 = scmp.ne.s32.totalorder %s56, %s57
      %p68 = scmp.eq.s32.totalorder %s36, 0
      %p69 = por %p67, %p68
      %p70 = scmp.ne.s32.totalorder %s56, %s57
      %p71 = scmp.eq.s32.totalorder %s37, 1
      %p72 = por %p70, %p71
      %p74 = scmp.ne.s32.totalorder %s57, %s73
      %p75 = scmp.eq.s32.totalorder %s37, 0
      %p76 = por %p74, %p75
      %s77 = ssub.s32 %s38, %s50
      %p78 = scmp.eq.s32.totalorder %s77, 0
      %s80 = sadd.s32 %s79, 1
      %s81 = scalar_select %p78, %s79, %s80
      %p84 = pneg %p78
      %p85 = scmp.eq.s32.totalorder %s31, 1
      %p86 = por %p84, %p85
      %p87 = scmp.ne.s32.totalorder %s79, %s82
      %p88 = scmp.eq.s32.totalorder %s31, 0
      %p89 = por %p87, %p88
      %p90 = scmp.ne.s32.totalorder %s79, %s82
      %p91 = scmp.eq.s32.totalorder %s36, 1
      %p92 = por %p90, %p91
      %p93 = scmp.ne.s32.totalorder %s82, %s83
      %p94 = scmp.eq.s32.totalorder %s36, 0
      %p95 = por %p93, %p94
      %p96 = scmp.ne.s32.totalorder %s82, %s83
      %p97 = scmp.eq.s32.totalorder %s37, 1
      %p98 = por %p96, %p97
      %p100 = scmp.ne.s32.totalorder %s83, %s99
      %p101 = scmp.eq.s32.totalorder %s37, 0
      %p102 = por %p100, %p101
      %s103 = ssub.s32 %s39, %s46
      %p104 = scmp.eq.s32.totalorder %s103, 0
      %s106 = sadd.s32 %s105, 1
      %s107 = scalar_select %p104, %s105, %s106
      %p110 = pneg %p104
      %p111 = scmp.eq.s32.totalorder %s31, 1
      %p112 = por %p110, %p111
      %p113 = scmp.ne.s32.totalorder %s105, %s108
      %p114 = scmp.eq.s32.totalorder %s31, 0
      %p115 = por %p113, %p114
      %p116 = scmp.ne.s32.totalorder %s105, %s108
      %p117 = scmp.eq.s32.totalorder %s36, 1
      %p118 = por %p116, %p117
      %p119 = scmp.ne.s32.totalorder %s108, %s109
      %p120 = scmp.eq.s32.totalorder %s36, 0
      %p121 = por %p119, %p120
      %p122 = scmp.ne.s32.totalorder %s108, %s109
      %p123 = scmp.eq.s32.totalorder %s37, 1
      %p124 = por %p122, %p123
      %p126 = scmp.ne.s32.totalorder %s109, %s125
      %p127 = scmp.eq.s32.totalorder %s37, 0
      %p128 = por %p126, %p127
      %s129 = ssub.s32 %s39, %s46
      %p130 = scmp.eq.s32.totalorder %s129, 0
      %s132 = sadd.s32 %s131, 1
      %s133 = scalar_select %p130, %s131, %s132
      %p136 = pneg %p130
      %p137 = scmp.eq.s32.totalorder %s31, 1
      %p138 = por %p136, %p137
      %p139 = scmp.ne.s32.totalorder %s131, %s134
      %p140 = scmp.eq.s32.totalorder %s31, 0
      %p141 = por %p139, %p140
      %p142 = scmp.ne.s32.totalorder %s131, %s134
      %p143 = scmp.eq.s32.totalorder %s36, 1
      %p144 = por %p142, %p143
      %p145 = scmp.ne.s32.totalorder %s134, %s135
      %p146 = scmp.eq.s32.totalorder %s36, 0
      %p147 = por %p145, %p146
      %p148 = scmp.ne.s32.totalorder %s134, %s135
      %p149 = scmp.eq.s32.totalorder %s37, 1
      %p150 = por %p148, %p149
      %p152 = scmp.ne.s32.totalorder %s135, %s151
      %p153 = scmp.eq.s32.totalorder %s37, 0
      %p154 = por %p152, %p153
      %s155 = ssub.s32 %s39, %s46
      %p156 = scmp.eq.s32.totalorder %s155, 0
      %s158 = sadd.s32 %s157, 1
      %s159 = scalar_select %p156, %s157, %s158
      %p162 = pneg %p156
      %p163 = scmp.eq.s32.totalorder %s31, 1
      %p164 = por %p162, %p163
      %p165 = scmp.ne.s32.totalorder %s157, %s160
      %p166 = scmp.eq.s32.totalorder %s31, 0
      %p167 = por %p165, %p166
      %p168 = scmp.ne.s32.totalorder %s157, %s160
      %p169 = scmp.eq.s32.totalorder %s36, 1
      %p170 = por %p168, %p169
      %p171 = scmp.ne.s32.totalorder %s160, %s161
      %p172 = scmp.eq.s32.totalorder %s36, 0
      %p173 = por %p171, %p172
      %p174 = scmp.ne.s32.totalorder %s160, %s161
      %p175 = scmp.eq.s32.totalorder %s37, 1
      %p176 = por %p174, %p175
      %p178 = scmp.ne.s32.totalorder %s161, %s177
      %p179 = scmp.eq.s32.totalorder %s37, 0
      %p180 = por %p178, %p179
      %s181 = ssub.s32 %s39, %s46
      %p182 = scmp.eq.s32.totalorder %s181, 0
      %s184 = sadd.s32 %s183, 1
      %s185 = scalar_select %p182, %s183, %s184
      %p188 = pneg %p182
      %p189 = scmp.eq.s32.totalorder %s31, 1
      %p190 = por %p188, %p189
      %p191 = scmp.ne.s32.totalorder %s183, %s186
      %p192 = scmp.eq.s32.totalorder %s31, 0
      %p193 = por %p191, %p192
      %p194 = scmp.ne.s32.totalorder %s183, %s186
      %p195 = scmp.eq.s32.totalorder %s36, 1
      %p196 = por %p194, %p195
      %p197 = scmp.ne.s32.totalorder %s186, %s187
      %p198 = scmp.eq.s32.totalorder %s36, 0
      %p199 = por %p197, %p198
      %p200 = scmp.ne.s32.totalorder %s186, %s187
      %p201 = scmp.eq.s32.totalorder %s37, 1
      %p202 = por %p200, %p201
      %p204 = scmp.ne.s32.totalorder %s187, %s203
      %p205 = scmp.eq.s32.totalorder %s37, 0
      %p206 = por %p204, %p205
      %s207 = ssub.s32 %s39, %s46
      %p208 = scmp.eq.s32.totalorder %s207, 0
      %s210 = sadd.s32 %s209, 1
      %s211 = scalar_select %p208, %s209, %s210
      %p214 = pneg %p208
      %p215 = scmp.eq.s32.totalorder %s31, 1
      %p216 = por %p214, %p215
      %p217 = scmp.ne.s32.totalorder %s209, %s212
      %p218 = scmp.eq.s32.totalorder %s31, 0
      %p219 = por %p217, %p218
      %p220 = scmp.ne.s32.totalorder %s209, %s212
      %p221 = scmp.eq.s32.totalorder %s36, 1
      %p222 = por %p220, %p221
      %p223 = scmp.ne.s32.totalorder %s212, %s213
      %p224 = scmp.eq.s32.totalorder %s36, 0
      %p225 = por %p223, %p224
      %p226 = scmp.ne.s32.totalorder %s212, %s213
      %p227 = scmp.eq.s32.totalorder %s37, 1
      %p228 = por %p226, %p227
      %p230 = scmp.ne.s32.totalorder %s213, %s229
      %p231 = scmp.eq.s32.totalorder %s37, 0
      %p232 = por %p230, %p231
      %s233 = ssub.s32 %s39, %s46
      %p234 = scmp.eq.s32.totalorder %s233, 0
      %s236 = sadd.s32 %s235, 1
      %s237 = scalar_select %p234, %s235, %s236
      %p240 = pneg %p234
      %p241 = scmp.eq.s32.totalorder %s31, 1
      %p242 = por %p240, %p241
      %p243 = scmp.ne.s32.totalorder %s235, %s238
      %p244 = scmp.eq.s32.totalorder %s31, 0
      %p245 = por %p243, %p244
      %p246 = scmp.ne.s32.totalorder %s235, %s238
      %p247 = scmp.eq.s32.totalorder %s36, 1
      %p248 = por %p246, %p247
      %p249 = scmp.ne.s32.totalorder %s238, %s239
      %p250 = scmp.eq.s32.totalorder %s36, 0
      %p251 = por %p249, %p250
      %p252 = scmp.ne.s32.totalorder %s238, %s239
      %p253 = scmp.eq.s32.totalorder %s37, 1
      %p254 = por %p252, %p253
      %p256 = scmp.ne.s32.totalorder %s239, %s255
      %p257 = scmp.eq.s32.totalorder %s37, 0
      %p258 = por %p256, %p257
      %s259 = ssub.s32 %s39, %s46
      %p260 = scmp.eq.s32.totalorder %s259, 0
      %s262 = sadd.s32 %s261, 1
      %s263 = scalar_select %p260, %s261, %s262
      %p266 = pneg %p260
      %p267 = scmp.eq.s32.totalorder %s31, 1
      %p268 = por %p266, %p267
      %p269 = scmp.ne.s32.totalorder %s261, %s264
      %p270 = scmp.eq.s32.totalorder %s31, 0
      %p271 = por %p269, %p270
      %p272 = scmp.ne.s32.totalorder %s261, %s264
      %p273 = scmp.eq.s32.totalorder %s36, 1
      %p274 = por %p272, %p273
      %p275 = scmp.ne.s32.totalorder %s264, %s265
      %p276 = scmp.eq.s32.totalorder %s36, 0
      %p277 = por %p275, %p276
      %p278 = scmp.ne.s32.totalorder %s264, %s265
      %p279 = scmp.eq.s32.totalorder %s37, 1
      %p280 = por %p278, %p279
      %p282 = scmp.ne.s32.totalorder %s265, %s281
      %p283 = scmp.eq.s32.totalorder %s37, 0
      %p284 = por %p282, %p283
      %s285 = ssub.s32 %s39, %s46
      %p286 = scmp.eq.s32.totalorder %s285, 0
      %s288 = sadd.s32 %s287, 1
      %s289 = scalar_select %p286, %s287, %s288
      %p292 = pneg %p286
      %p293 = scmp.eq.s32.totalorder %s31, 1
      %p294 = por %p292, %p293
      %p295 = scmp.ne.s32.totalorder %s287, %s290
      %p296 = scmp.eq.s32.totalorder %s31, 0
      %p297 = por %p295, %p296
      %p298 = scmp.ne.s32.totalorder %s287, %s290
      %p299 = scmp.eq.s32.totalorder %s36, 1
      %p300 = por %p298, %p299
      %p301 = scmp.ne.s32.totalorder %s290, %s291
      %p302 = scmp.eq.s32.totalorder %s36, 0
      %p303 = por %p301, %p302
      %p304 = scmp.ne.s32.totalorder %s290, %s291
      %p305 = scmp.eq.s32.totalorder %s37, 1
      %p306 = por %p304, %p305
      %p308 = scmp.ne.s32.totalorder %s291, %s307
      %p309 = scmp.eq.s32.totalorder %s37, 0
      %p310 = por %p308, %p309
      %s311 = ssub.s32 %s39, %s46
      %p312 = scmp.eq.s32.totalorder %s311, 0
      %s314 = sadd.s32 %s313, 1
      %s315 = scalar_select %p312, %s313, %s314
      %p318 = pneg %p312
      %p319 = scmp.eq.s32.totalorder %s31, 1
      %p320 = por %p318, %p319
      %p321 = scmp.ne.s32.totalorder %s313, %s316
      %p322 = scmp.eq.s32.totalorder %s31, 0
      %p323 = por %p321, %p322
      %p324 = scmp.ne.s32.totalorder %s313, %s316
      %p325 = scmp.eq.s32.totalorder %s36, 1
      %p326 = por %p324, %p325
      %p327 = scmp.ne.s32.totalorder %s316, %s317
      %p328 = scmp.eq.s32.totalorder %s36, 0
      %p329 = por %p327, %p328
      %p330 = scmp.ne.s32.totalorder %s316, %s317
      %p331 = scmp.eq.s32.totalorder %s37, 1
      %p332 = por %p330, %p331
      %p334 = scmp.ne.s32.totalorder %s317, %s333
      %p335 = scmp.eq.s32.totalorder %s37, 0
      %p336 = por %p334, %p335
      %s337 = ssub.s32 %s39, %s46
      %p338 = scmp.eq.s32.totalorder %s337, 0
      %s340 = sadd.s32 %s339, 1
      %s341 = scalar_select %p338, %s339, %s340
      %p344 = pneg %p338
      %p345 = scmp.eq.s32.totalorder %s31, 1
      %p346 = por %p344, %p345
      %p347 = scmp.ne.s32.totalorder %s339, %s342
      %p348 = scmp.eq.s32.totalorder %s31, 0
      %p349 = por %p347, %p348
      %p350 = scmp.ne.s32.totalorder %s339, %s342
      %p351 = scmp.eq.s32.totalorder %s36, 1
      %p352 = por %p350, %p351
      %p353 = scmp.ne.s32.totalorder %s342, %s343
      %p354 = scmp.eq.s32.totalorder %s36, 0
      %p355 = por %p353, %p354
      %p356 = scmp.ne.s32.totalorder %s342, %s343
      %p357 = scmp.eq.s32.totalorder %s37, 1
      %p358 = por %p356, %p357
      %p360 = scmp.ne.s32.totalorder %s343, %s359
      %p361 = scmp.eq.s32.totalorder %s37, 0
      %p362 = por %p360, %p361
      %s363 = ssub.s32 %s39, %s46
      %p364 = scmp.eq.s32.totalorder %s363, 0
      %s366 = sadd.s32 %s365, 1
      %s367 = scalar_select %p364, %s365, %s366
      %p370 = pneg %p364
      %p371 = scmp.eq.s32.totalorder %s31, 1
      %p372 = por %p370, %p371
      %p373 = scmp.ne.s32.totalorder %s365, %s368
      %p374 = scmp.eq.s32.totalorder %s31, 0
      %p375 = por %p373, %p374
      %p376 = scmp.ne.s32.totalorder %s365, %s368
      %p377 = scmp.eq.s32.totalorder %s36, 1
      %p378 = por %p376, %p377
      %p379 = scmp.ne.s32.totalorder %s368, %s369
      %p380 = scmp.eq.s32.totalorder %s36, 0
      %p381 = por %p379, %p380
      %p382 = scmp.ne.s32.totalorder %s368, %s369
      %p383 = scmp.eq.s32.totalorder %s37, 1
      %p384 = por %p382, %p383
      %p386 = scmp.ne.s32.totalorder %s369, %s385
      %p387 = scmp.eq.s32.totalorder %s37, 0
      %p388 = por %p386, %p387
      %s389 = ssub.s32 %s39, %s46
      %p390 = scmp.eq.s32.totalorder %s389, 0
      %s392 = sadd.s32 %s391, 1
      %s393 = scalar_select %p390, %s391, %s392
      %p396 = pneg %p390
      %p397 = scmp.eq.s32.totalorder %s31, 1
      %p398 = por %p396, %p397
      %p399 = scmp.ne.s32.totalorder %s391, %s394
      %p400 = scmp.eq.s32.totalorder %s31, 0
      %p401 = por %p399, %p400
      %p402 = scmp.ne.s32.totalorder %s391, %s394
      %p403 = scmp.eq.s32.totalorder %s36, 1
      %p404 = por %p402, %p403
      %p405 = scmp.ne.s32.totalorder %s394, %s395
      %p406 = scmp.eq.s32.totalorder %s36, 0
      %p407 = por %p405, %p406
      %p408 = scmp.ne.s32.totalorder %s394, %s395
      %p409 = scmp.eq.s32.totalorder %s37, 1
      %p410 = por %p408, %p409
      %p412 = scmp.ne.s32.totalorder %s395, %s411
      %p413 = scmp.eq.s32.totalorder %s37, 0
      %p414 = por %p412, %p413
      %s415 = ssub.s32 %s39, %s46
      %p416 = scmp.eq.s32.totalorder %s415, 0
      %s418 = sadd.s32 %s417, 1
      %s419 = scalar_select %p416, %s417, %s418
      %p422 = pneg %p416
      %p423 = scmp.eq.s32.totalorder %s31, 1
      %p424 = por %p422, %p423
      %p425 = scmp.ne.s32.totalorder %s417, %s420
      %p426 = scmp.eq.s32.totalorder %s31, 0
      %p427 = por %p425, %p426
      %p428 = scmp.ne.s32.totalorder %s417, %s420
      %p429 = scmp.eq.s32.totalorder %s36, 1
      %p430 = por %p428, %p429
      %p431 = scmp.ne.s32.totalorder %s420, %s421
      %p432 = scmp.eq.s32.totalorder %s36, 0
      %p433 = por %p431, %p432
      %p434 = scmp.ne.s32.totalorder %s420, %s421
      %p435 = scmp.eq.s32.totalorder %s37, 1
      %p436 = por %p434, %p435
      %p438 = scmp.ne.s32.totalorder %s421, %s437
      %p439 = scmp.eq.s32.totalorder %s37, 0
      %p440 = por %p438, %p439
      %s441 = ssub.s32 %s39, %s46
      %p442 = scmp.eq.s32.totalorder %s441, 0
      %s444 = sadd.s32 %s443, 1
      %s445 = scalar_select %p442, %s443, %s444
      %p448 = pneg %p442
      %p449 = scmp.eq.s32.totalorder %s31, 1
      %p450 = por %p448, %p449
      %p451 = scmp.ne.s32.totalorder %s443, %s446
      %p452 = scmp.eq.s32.totalorder %s31, 0
      %p453 = por %p451, %p452
      %p454 = scmp.ne.s32.totalorder %s443, %s446
      %p455 = scmp.eq.s32.totalorder %s36, 1
      %p456 = por %p454, %p455
      %p457 = scmp.ne.s32.totalorder %s446, %s447
      %p458 = scmp.eq.s32.totalorder %s36, 0
      %p459 = por %p457, %p458
      %p460 = scmp.ne.s32.totalorder %s446, %s447
      %p461 = scmp.eq.s32.totalorder %s37, 1
      %p462 = por %p460, %p461
      %p464 = scmp.ne.s32.totalorder %s447, %s463
      %p465 = scmp.eq.s32.totalorder %s37, 0
      %p466 = por %p464, %p465
      %s467 = ssub.s32 %s39, %s46
      %p468 = scmp.eq.s32.totalorder %s467, 0
      %s470 = sadd.s32 %s469, 1
      %s471 = scalar_select %p468, %s469, %s470
      %p474 = pneg %p468
      %p475 = scmp.eq.s32.totalorder %s31, 1
      %p476 = por %p474, %p475
      %p477 = scmp.ne.s32.totalorder %s469, %s472
      %p478 = scmp.eq.s32.totalorder %s31, 0
      %p479 = por %p477, %p478
      %p480 = scmp.ne.s32.totalorder %s469, %s472
      %p481 = scmp.eq.s32.totalorder %s36, 1
      %p482 = por %p480, %p481
      %p483 = scmp.ne.s32.totalorder %s472, %s473
      %p484 = scmp.eq.s32.totalorder %s36, 0
      %p485 = por %p483, %p484
      %p486 = scmp.ne.s32.totalorder %s472, %s473
      %p487 = scmp.eq.s32.totalorder %s37, 1
      %p488 = por %p486, %p487
      %p490 = scmp.ne.s32.totalorder %s473, %s489
      %p491 = scmp.eq.s32.totalorder %s37, 0
      %p492 = por %p490, %p491
      %s493 = ssub.s32 %s39, %s46
      %p494 = scmp.eq.s32.totalorder %s493, 0
      %s496 = sadd.s32 %s495, 1
      %s497 = scalar_select %p494, %s495, %s496
      %p500 = pneg %p494
      %p501 = scmp.eq.s32.totalorder %s31, 1
      %p502 = por %p500, %p501
      %p503 = scmp.ne.s32.totalorder %s495, %s498
      %p504 = scmp.eq.s32.totalorder %s31, 0
      %p505 = por %p503, %p504
      %p506 = scmp.ne.s32.totalorder %s495, %s498
      %p507 = scmp.eq.s32.totalorder %s36, 1
      %p508 = por %p506, %p507
      %p509 = scmp.ne.s32.totalorder %s498, %s499
      %p510 = scmp.eq.s32.totalorder %s36, 0
      %p511 = por %p509, %p510
      %p512 = scmp.ne.s32.totalorder %s498, %s499
      %p513 = scmp.eq.s32.totalorder %s37, 1
      %p514 = por %p512, %p513
      %p516 = scmp.ne.s32.totalorder %s499, %s515
      %p517 = scmp.eq.s32.totalorder %s37, 0
      %p518 = por %p516, %p517
      %s519 = ssub.s32 %s39, %s46
      %p520 = scmp.eq.s32.totalorder %s519, 0
      %s522 = sadd.s32 %s521, 1
      %s523 = scalar_select %p520, %s521, %s522
      %p526 = pneg %p520
      %p527 = scmp.eq.s32.totalorder %s31, 1
      %p528 = por %p526, %p527
      %p529 = scmp.ne.s32.totalorder %s521, %s524
      %p530 = scmp.eq.s32.totalorder %s31, 0
      %p531 = por %p529, %p530
      %p532 = scmp.ne.s32.totalorder %s521, %s524
      %p533 = scmp.eq.s32.totalorder %s36, 1
      %p534 = por %p532, %p533
      %p535 = scmp.ne.s32.totalorder %s524, %s525
      %p536 = scmp.eq.s32.totalorder %s36, 0
      %p537 = por %p535, %p536
      %p538 = scmp.ne.s32.totalorder %s524, %s525
      %p539 = scmp.eq.s32.totalorder %s37, 1
      %p540 = por %p538, %p539
      %p542 = scmp.ne.s32.totalorder %s525, %s541
      %p543 = scmp.eq.s32.totalorder %s37, 0
      %p544 = por %p542, %p543
      %s545 = ssub.s32 %s39, %s46
      %p546 = scmp.eq.s32.totalorder %s545, 0
      %s548 = sadd.s32 %s547, 1
      %s549 = scalar_select %p546, %s547, %s548
      %p552 = pneg %p546
      %p553 = scmp.eq.s32.totalorder %s31, 1
      %p554 = por %p552, %p553
      %p555 = scmp.ne.s32.totalorder %s547, %s550
      %p556 = scmp.eq.s32.totalorder %s31, 0
      %p557 = por %p555, %p556
      %p558 = scmp.ne.s32.totalorder %s547, %s550
      %p559 = scmp.eq.s32.totalorder %s36, 1
      %p560 = por %p558, %p559
      %p561 = scmp.ne.s32.totalorder %s550, %s551
      %p562 = scmp.eq.s32.totalorder %s36, 0
      %p563 = por %p561, %p562
      %p564 = scmp.ne.s32.totalorder %s550, %s551
      %p565 = scmp.eq.s32.totalorder %s37, 1
      %p566 = por %p564, %p565
      %p568 = scmp.ne.s32.totalorder %s551, %s567
      %p569 = scmp.eq.s32.totalorder %s37, 0
      %p570 = por %p568, %p569
      %s571 = ssub.s32 %s39, %s46
      %p572 = scmp.eq.s32.totalorder %s571, 0
      %s574 = sadd.s32 %s573, 1
      %s575 = scalar_select %p572, %s573, %s574
      %p578 = pneg %p572
      %p579 = scmp.eq.s32.totalorder %s31, 1
      %p580 = por %p578, %p579
      %p581 = scmp.ne.s32.totalorder %s573, %s576
      %p582 = scmp.eq.s32.totalorder %s31, 0
      %p583 = por %p581, %p582
      %p584 = scmp.ne.s32.totalorder %s573, %s576
      %p585 = scmp.eq.s32.totalorder %s36, 1
      %p586 = por %p584, %p585
      %p587 = scmp.ne.s32.totalorder %s576, %s577
      %p588 = scmp.eq.s32.totalorder %s36, 0
      %p589 = por %p587, %p588
      %p590 = scmp.ne.s32.totalorder %s576, %s577
      %p591 = scmp.eq.s32.totalorder %s37, 1
      %p592 = por %p590, %p591
      %p594 = scmp.ne.s32.totalorder %s577, %s593
      %p595 = scmp.eq.s32.totalorder %s37, 0
      %p596 = por %p594, %p595
      %s597 = ssub.s32 %s39, %s46
      %p598 = scmp.eq.s32.totalorder %s597, 0
      %s600 = sadd.s32 %s599, 1
      %s601 = scalar_select %p598, %s599, %s600
      %p604 = pneg %p598
      %p605 = scmp.eq.s32.totalorder %s31, 1
      %p606 = por %p604, %p605
      %p607 = scmp.ne.s32.totalorder %s599, %s602
      %p608 = scmp.eq.s32.totalorder %s31, 0
      %p609 = por %p607, %p608
      %p610 = scmp.ne.s32.totalorder %s599, %s602
      %p611 = scmp.eq.s32.totalorder %s36, 1
      %p612 = por %p610, %p611
      %p613 = scmp.ne.s32.totalorder %s602, %s603
      %p614 = scmp.eq.s32.totalorder %s36, 0
      %p615 = por %p613, %p614
      %p616 = scmp.ne.s32.totalorder %s602, %s603
      %p617 = scmp.eq.s32.totalorder %s37, 1
      %p618 = por %p616, %p617
      %p620 = scmp.ne.s32.totalorder %s603, %s619
      %p621 = scmp.eq.s32.totalorder %s37, 0
      %p622 = por %p620, %p621
      %s623 = ssub.s32 %s38, %s50
      %p624 = scmp.eq.s32.totalorder %s623, 0
      %s626 = sadd.s32 %s625, 1
      %s627 = scalar_select %p624, %s625, %s626
      %p630 = pneg %p624
      %p631 = scmp.eq.s32.totalorder %s31, 1
      %p632 = por %p630, %p631
      %p633 = scmp.ne.s32.totalorder %s625, %s628
      %p634 = scmp.eq.s32.totalorder %s31, 0
      %p635 = por %p633, %p634
      %p636 = scmp.ne.s32.totalorder %s625, %s628
      %p637 = scmp.eq.s32.totalorder %s36, 1
      %p638 = por %p636, %p637
      %p639 = scmp.ne.s32.totalorder %s628, %s629
      %p640 = scmp.eq.s32.totalorder %s36, 0
      %p641 = por %p639, %p640
      %p642 = scmp.ne.s32.totalorder %s628, %s629
      %p643 = scmp.eq.s32.totalorder %s37, 1
      %p644 = por %p642, %p643
      %p646 = scmp.ne.s32.totalorder %s629, %s645
      %p647 = scmp.eq.s32.totalorder %s37, 0
      %p648 = por %p646, %p647
      %p649 = scmp.le.s32.totalorder 1, %s31
      %p650 = scmp.lt.s32.totalorder %s31, 3
      %p651 = pnand %p649, %p650
      %p652 = pneg %p651
      // Predicated region
      $region9: #{tpu_custom_call.1} parent=5 // pred_check
        _
      $region10: #{tpu_custom_call.1} parent=5 // pred_check_branch
        %654 = sbr.rel (%p651) target = $region12
      $region11: #{tpu_custom_call.1} parent=5 // pred_region
        %s655 = ssub.s32 %s31, 1
        // Predicated region
        $region13: #{tpu_custom_call.1} parent=11 // pred_check
          %p656 = pneg %p69
        $region14: #{tpu_custom_call.1} parent=11 // pred_check_branch
          %658 = sbr.rel (%p656) target = $region16
        $region15: #{tpu_custom_call.1} parent=11 // pred_region
          %660 = vsyncadd [#allocation3], 0
          %s661 = smul.addr %s40, 8
          %s662 = scalar_lea.hbm %s0, %s661
          %s664 = sshll.u32 %s662, 4
          %s665 = int_to_ptr.hbm [resolvable:$true] %s664
          %s666 = sshll.u32 [#allocation2], 4
          %s667 = int_to_ptr.vmem [resolvable:$true] %s666
          %669 = dma.hbm_to_vmem [thread:$0]  %s665, 128, %s667, [#allocation3]
        $region16: #{tpu_custom_call.1} parent=11 // pred_fallthru
          _
        // Predicated region
        $region17: #{tpu_custom_call.1} parent=11 // pred_check
          %p670 = pneg %p95
        $region18: #{tpu_custom_call.1} parent=11 // pred_check_branch
          %672 = sbr.rel (%p670) target = $region20
        $region19: #{tpu_custom_call.1} parent=11 // pred_region
          %s673 = smul.u32 2, %s40
          %675 = vsyncadd [#allocation6], 0
          %s676 = smul.addr %s673, 8
          %s677 = scalar_lea.hbm %s1, %s676
          %s678 = sshll.u32 %s677, 4
          %s679 = int_to_ptr.hbm [resolvable:$true] %s678
          %s680 = sshll.u32 [#allocation5], 4
          %s681 = int_to_ptr.vmem [resolvable:$true] %s680
          %686 = dma.hbm_to_vmem [thread:$0]  %s679, 256, %s681, [#allocation6], 128, 128, 8
        $region20: #{tpu_custom_call.1} parent=11 // pred_fallthru
          _
      $region12: #{tpu_custom_call.1} parent=5 // pred_fallthru
        _
      %p687 = scmp.lt.s32.totalorder %s31, 2
      // Predicated region
      $region21: #{tpu_custom_call.1} parent=5 // pred_check
        %p688 = pneg %p687
      $region22: #{tpu_custom_call.1} parent=5 // pred_check_branch
        %690 = sbr.rel (%p688) target = $region24
      $region23: #{tpu_custom_call.1} parent=5 // pred_region
        // Predicated region
        $region25: #{tpu_custom_call.1} parent=23 // pred_check
          %p691 = pneg %p115
        $region26: #{tpu_custom_call.1} parent=23 // pred_check_branch
          %693 = sbr.rel (%p691) target = $region28
        $region27: #{tpu_custom_call.1} parent=23 // pred_region
          %p694 = scmp.lt.s32.totalorder %s39, 1
          %s695 = scalar_select %p694, %s39, 1
          %s696 = smul.addr %s695, 4
          %s697 = smul.addr %s696, 8
          %s698 = scalar_lea.vmem %s2, %s697
        $region28: #{tpu_custom_call.1} parent=23 // pred_fallthru
          _
        // Predicated region
        $region29: #{tpu_custom_call.1} parent=23 // pred_check
          %p699 = pneg %p141
        $region30: #{tpu_custom_call.1} parent=23 // pred_check_branch
          %701 = sbr.rel (%p699) target = $region32
        $region31: #{tpu_custom_call.1} parent=23 // pred_region
          %p702 = scmp.lt.s32.totalorder %s39, 1
          %s703 = scalar_select %p702, %s39, 1
          %s704 = scalar_lea.vmem %s3, %s703
        $region32: #{tpu_custom_call.1} parent=23 // pred_fallthru
          _
        // Predicated region
        $region33: #{tpu_custom_call.1} parent=23 // pred_check
          %p705 = pneg %p167
        $region34: #{tpu_custom_call.1} parent=23 // pred_check_branch
          %707 = sbr.rel (%p705) target = $region36
        $region35: #{tpu_custom_call.1} parent=23 // pred_region
          %p708 = scmp.lt.s32.totalorder %s39, 1
          %s709 = scalar_select %p708, %s39, 1
          %s710 = smul.addr %s709, 4
          %s711 = smul.addr %s710, 8
          %s712 = scalar_lea.vmem %s4, %s711
        $region36: #{tpu_custom_call.1} parent=23 // pred_fallthru
          _
        // Predicated region
        $region37: #{tpu_custom_call.1} parent=23 // pred_check
          %p713 = pneg %p193
        $region38: #{tpu_custom_call.1} parent=23 // pred_check_branch
          %715 = sbr.rel (%p713) target = $region40
        $region39: #{tpu_custom_call.1} parent=23 // pred_region
          %s716 = sand.u32 %s31, 1
          %s717 = scalar_lea.sflag [#allocation3], %s716
          %s718 = sand.u32 %s183, 1
          %s719 = scalar_lea.vmem [#allocation7], %s718
          %721 = vsyncadd %s717, 0
          %s722 = scalar_lea.hbm %s5, %s39
          %s724 = sshll.u32 %s722, 4
          %s725 = int_to_ptr.hbm [resolvable:$true] %s724
          %s726 = sshll.u32 %s719, 4
          %s727 = int_to_ptr.vmem [resolvable:$true] %s726
          %729 = dma.hbm_to_vmem [thread:$0]  %s725, 16, %s727, %s717
        $region40: #{tpu_custom_call.1} parent=23 // pred_fallthru
          _
        // Predicated region
        $region41: #{tpu_custom_call.1} parent=23 // pred_check
          %p730 = pneg %p219
        $region42: #{tpu_custom_call.1} parent=23 // pred_check_branch
          %732 = sbr.rel (%p730) target = $region44
        $region43: #{tpu_custom_call.1} parent=23 // pred_region
          %p733 = scmp.lt.s32.totalorder %s39, 1
          %s734 = scalar_select %p733, %s39, 1
          %s735 = smul.addr %s734, 4
          %s736 = smul.addr %s735, 8
          %s737 = scalar_lea.vmem %s6, %s736
        $region44: #{tpu_custom_call.1} parent=23 // pred_fallthru
          _
        // Predicated region
        $region45: #{tpu_custom_call.1} parent=23 // pred_check
          %p738 = pneg %p245
        $region46: #{tpu_custom_call.1} parent=23 // pred_check_branch
          %740 = sbr.rel (%p738) target = $region48
        $region47: #{tpu_custom_call.1} parent=23 // pred_region
          %p741 = scmp.lt.s32.totalorder %s39, 1
          %s742 = scalar_select %p741, %s39, 1
          %s743 = scalar_lea.vmem %s7, %s742
        $region48: #{tpu_custom_call.1} parent=23 // pred_fallthru
          _
        // Predicated region
        $region49: #{tpu_custom_call.1} parent=23 // pred_check
          %p744 = pneg %p271
        $region50: #{tpu_custom_call.1} parent=23 // pred_check_branch
          %746 = sbr.rel (%p744) target = $region52
        $region51: #{tpu_custom_call.1} parent=23 // pred_region
          %s747 = sand.u32 %s31, 1
          %s748 = scalar_lea.sflag [#allocation3], %s747
          %s749 = sand.u32 %s261, 1
          %s750 = smul.addr %s749, 32
          %s751 = scalar_lea.vmem [#allocation8], %s750
          %753 = vsyncadd %s748, 0
          %s754 = smul.addr %s39, 4
          %s755 = smul.addr %s754, 8
          %s756 = scalar_lea.hbm %s8, %s755
          %s757 = sshll.u32 %s756, 4
          %s758 = int_to_ptr.hbm [resolvable:$true] %s757
          %s759 = sshll.u32 %s751, 4
          %s760 = int_to_ptr.vmem [resolvable:$true] %s759
          %765 = dma.hbm_to_vmem [thread:$0]  %s758, 512, %s760, %s748, 128, 128, 8
        $region52: #{tpu_custom_call.1} parent=23 // pred_fallthru
          _
        // Predicated region
        $region53: #{tpu_custom_call.1} parent=23 // pred_check
          %p766 = pneg %p297
        $region54: #{tpu_custom_call.1} parent=23 // pred_check_branch
          %768 = sbr.rel (%p766) target = $region56
        $region55: #{tpu_custom_call.1} parent=23 // pred_region
          %p769 = scmp.lt.s32.totalorder %s39, 1
          %s770 = scalar_select %p769, %s39, 1
          %s771 = scalar_lea.vmem %s9, %s770
        $region56: #{tpu_custom_call.1} parent=23 // pred_fallthru
          _
        // Predicated region
        $region57: #{tpu_custom_call.1} parent=23 // pred_check
          %p772 = pneg %p323
        $region58: #{tpu_custom_call.1} parent=23 // pred_check_branch
          %774 = sbr.rel (%p772) target = $region60
        $region59: #{tpu_custom_call.1} parent=23 // pred_region
          %s775 = sand.u32 %s31, 1
          %s776 = scalar_lea.sflag [#allocation3], %s775
          %s777 = sand.u32 %s313, 1
          %s778 = smul.addr %s777, 32
          %s779 = scalar_lea.vmem [#allocation9], %s778
          %781 = vsyncadd %s776, 0
          %s782 = smul.addr %s39, 4
          %s783 = smul.addr %s782, 8
          %s784 = scalar_lea.hbm %s10, %s783
          %s785 = sshll.u32 %s784, 4
          %s786 = int_to_ptr.hbm [resolvable:$true] %s785
          %s787 = sshll.u32 %s779, 4
          %s788 = int_to_ptr.vmem [resolvable:$true] %s787
          %793 = dma.hbm_to_vmem [thread:$0]  %s786, 512, %s788, %s776, 128, 128, 8
        $region60: #{tpu_custom_call.1} parent=23 // pred_fallthru
          _
        // Predicated region
        $region61: #{tpu_custom_call.1} parent=23 // pred_check
          %p794 = pneg %p349
        $region62: #{tpu_custom_call.1} parent=23 // pred_check_branch
          %796 = sbr.rel (%p794) target = $region64
        $region63: #{tpu_custom_call.1} parent=23 // pred_region
          %p797 = scmp.lt.s32.totalorder %s39, 1
          %s798 = scalar_select %p797, %s39, 1
          %s799 = scalar_lea.vmem %s11, %s798
        $region64: #{tpu_custom_call.1} parent=23 // pred_fallthru
          _
        // Predicated region
        $region65: #{tpu_custom_call.1} parent=23 // pred_check
          %p800 = pneg %p375
        $region66: #{tpu_custom_call.1} parent=23 // pred_check_branch
          %802 = sbr.rel (%p800) target = $region68
        $region67: #{tpu_custom_call.1} parent=23 // pred_region
          %p803 = scmp.lt.s32.totalorder %s39, 1
          %s804 = scalar_select %p803, %s39, 1
          %s805 = scalar_lea.vmem %s12, %s804
        $region68: #{tpu_custom_call.1} parent=23 // pred_fallthru
          _
        // Predicated region
        $region69: #{tpu_custom_call.1} parent=23 // pred_check
          %p806 = pneg %p401
        $region70: #{tpu_custom_call.1} parent=23 // pred_check_branch
          %808 = sbr.rel (%p806) target = $region72
        $region71: #{tpu_custom_call.1} parent=23 // pred_region
          %s809 = sand.u32 %s31, 1
          %s810 = scalar_lea.sflag [#allocation3], %s809
          %s811 = sand.u32 %s391, 1
          %s812 = scalar_lea.vmem [#allocation10], %s811
          %814 = vsyncadd %s810, 0
          %s815 = scalar_lea.hbm %s13, %s39
          %s817 = sshll.u32 %s815, 4
          %s818 = int_to_ptr.hbm [resolvable:$true] %s817
          %s819 = sshll.u32 %s812, 4
          %s820 = int_to_ptr.vmem [resolvable:$true] %s819
          %822 = dma.hbm_to_vmem [thread:$0]  %s818, 16, %s820, %s810
        $region72: #{tpu_custom_call.1} parent=23 // pred_fallthru
          _
        // Predicated region
        $region73: #{tpu_custom_call.1} parent=23 // pred_check
          %p823 = pneg %p427
        $region74: #{tpu_custom_call.1} parent=23 // pred_check_branch
          %825 = sbr.rel (%p823) target = $region76
        $region75: #{tpu_custom_call.1} parent=23 // pred_region
          %s826 = sand.u32 %s31, 1
          %s827 = scalar_lea.sflag [#allocation3], %s826
          %s828 = sand.u32 %s417, 1
          %s829 = scalar_lea.vmem [#allocation11], %s828
          %831 = vsyncadd %s827, 0
          %s832 = scalar_lea.hbm %s14, %s39
          %s834 = sshll.u32 %s832, 4
          %s835 = int_to_ptr.hbm [resolvable:$true] %s834
          %s836 = sshll.u32 %s829, 4
          %s837 = int_to_ptr.vmem [resolvable:$true] %s836
          %839 = dma.hbm_to_vmem [thread:$0]  %s835, 16, %s837, %s827
        $region76: #{tpu_custom_call.1} parent=23 // pred_fallthru
          _
        // Predicated region
        $region77: #{tpu_custom_call.1} parent=23 // pred_check
          %p840 = pneg %p453
        $region78: #{tpu_custom_call.1} parent=23 // pred_check_branch
          %842 = sbr.rel (%p840) target = $region80
        $region79: #{tpu_custom_call.1} parent=23 // pred_region
          %p843 = scmp.lt.s32.totalorder %s39, 1
          %s844 = scalar_select %p843, %s39, 1
          %s845 = scalar_lea.vmem %s15, %s844
        $region80: #{tpu_custom_call.1} parent=23 // pred_fallthru
          _
        // Predicated region
        $region81: #{tpu_custom_call.1} parent=23 // pred_check
          %p846 = pneg %p479
        $region82: #{tpu_custom_call.1} parent=23 // pred_check_branch
          %848 = sbr.rel (%p846) target = $region84
        $region83: #{tpu_custom_call.1} parent=23 // pred_region
          %p849 = scmp.lt.s32.totalorder %s39, 1
          %s850 = scalar_select %p849, %s39, 1
          %s851 = scalar_lea.vmem %s16, %s850
        $region84: #{tpu_custom_call.1} parent=23 // pred_fallthru
          _
        // Predicated region
        $region85: #{tpu_custom_call.1} parent=23 // pred_check
          %p852 = pneg %p505
        $region86: #{tpu_custom_call.1} parent=23 // pred_check_branch
          %854 = sbr.rel (%p852) target = $region88
        $region87: #{tpu_custom_call.1} parent=23 // pred_region
          %s855 = sand.u32 %s31, 1
          %s856 = scalar_lea.sflag [#allocation3], %s855
          %s857 = sand.u32 %s495, 1
          %s858 = scalar_lea.vmem [#allocation12], %s857
          %860 = vsyncadd %s856, 0
          %s861 = scalar_lea.hbm %s17, %s39
          %s863 = sshll.u32 %s861, 4
          %s864 = int_to_ptr.hbm [resolvable:$true] %s863
          %s865 = sshll.u32 %s858, 4
          %s866 = int_to_ptr.vmem [resolvable:$true] %s865
          %868 = dma.hbm_to_vmem [thread:$0]  %s864, 16, %s866, %s856
        $region88: #{tpu_custom_call.1} parent=23 // pred_fallthru
          _
        // Predicated region
        $region89: #{tpu_custom_call.1} parent=23 // pred_check
          %p869 = pneg %p531
        $region90: #{tpu_custom_call.1} parent=23 // pred_check_branch
          %871 = sbr.rel (%p869) target = $region92
        $region91: #{tpu_custom_call.1} parent=23 // pred_region
          %s872 = sand.u32 %s31, 1
          %s873 = scalar_lea.sflag [#allocation3], %s872
          %s874 = sand.u32 %s521, 1
          %s875 = smul.addr %s874, 32
          %s876 = scalar_lea.vmem [#allocation13], %s875
          %878 = vsyncadd %s873, 0
          %s879 = smul.addr %s39, 4
          %s880 = smul.addr %s879, 8
          %s881 = scalar_lea.hbm %s18, %s880
          %s882 = sshll.u32 %s881, 4
          %s883 = int_to_ptr.hbm [resolvable:$true] %s882
          %s884 = sshll.u32 %s876, 4
          %s885 = int_to_ptr.vmem [resolvable:$true] %s884
          %890 = dma.hbm_to_vmem [thread:$0]  %s883, 512, %s885, %s873, 128, 128, 8
        $region92: #{tpu_custom_call.1} parent=23 // pred_fallthru
          _
        // Predicated region
        $region93: #{tpu_custom_call.1} parent=23 // pred_check
          %p891 = pneg %p557
        $region94: #{tpu_custom_call.1} parent=23 // pred_check_branch
          %893 = sbr.rel (%p891) target = $region96
        $region95: #{tpu_custom_call.1} parent=23 // pred_region
          %p894 = scmp.lt.s32.totalorder %s39, 1
          %s895 = scalar_select %p894, %s39, 1
          %s896 = scalar_lea.vmem %s19, %s895
        $region96: #{tpu_custom_call.1} parent=23 // pred_fallthru
          _
        // Predicated region
        $region97: #{tpu_custom_call.1} parent=23 // pred_check
          %p897 = pneg %p583
        $region98: #{tpu_custom_call.1} parent=23 // pred_check_branch
          %899 = sbr.rel (%p897) target = $region100
        $region99: #{tpu_custom_call.1} parent=23 // pred_region
          %p900 = scmp.lt.s32.totalorder %s39, 1
          %s901 = scalar_select %p900, %s39, 1
          %s902 = smul.addr %s901, 8
          %s903 = smul.addr %s902, 8
          %s904 = scalar_lea.vmem %s20, %s903
        $region100: #{tpu_custom_call.1} parent=23 // pred_fallthru
          _
        // Predicated region
        $region101: #{tpu_custom_call.1} parent=23 // pred_check
          %p905 = pneg %p609
        $region102: #{tpu_custom_call.1} parent=23 // pred_check_branch
          %907 = sbr.rel (%p905) target = $region104
        $region103: #{tpu_custom_call.1} parent=23 // pred_region
          %p908 = scmp.lt.s32.totalorder %s39, 1
          %s909 = scalar_select %p908, %s39, 1
          %s910 = scalar_lea.vmem %s21, %s909
        $region104: #{tpu_custom_call.1} parent=23 // pred_fallthru
          _
      $region24: #{tpu_custom_call.1} parent=5 // pred_fallthru
        _
      %p911 = scmp.le.s32.totalorder 1, %s31
      %p912 = scmp.lt.s32.totalorder %s31, 3
      %p913 = pnand %p911, %p912
      %p914 = pneg %p913
      // Predicated region
      $region105: #{tpu_custom_call.1} parent=5 // pred_check
        _
      $region106: #{tpu_custom_call.1} parent=5 // pred_check_branch
        %916 = sbr.rel (%p913) target = $region108
      $region107: #{tpu_custom_call.1} parent=5 // pred_region
        %s917 = ssub.s32 %s31, 1
        // Predicated region
        $region109: #{tpu_custom_call.1} parent=107 // pred_check
          %p918 = pneg %p69
        $region110: #{tpu_custom_call.1} parent=107 // pred_check_branch
          %920 = sbr.rel (%p918) target = $region112
        $region111: #{tpu_custom_call.1} parent=107 // pred_region
          %922 = dma.done [#allocation3], 128
        $region112: #{tpu_custom_call.1} parent=107 // pred_fallthru
          _
        // Predicated region
        $region113: #{tpu_custom_call.1} parent=107 // pred_check
          %p923 = pneg %p95
        $region114: #{tpu_custom_call.1} parent=107 // pred_check_branch
          %925 = sbr.rel (%p923) target = $region116
        $region115: #{tpu_custom_call.1} parent=107 // pred_region
          %927 = dma.done [#allocation6], 256
        $region116: #{tpu_custom_call.1} parent=107 // pred_fallthru
          _
        %s928 = sand.u32 %s36, 1
        %s929 = scalar_lea.sflag [#allocation3], %s928
        %s930 = sand.u32 %s186, 1
        %s931 = scalar_lea.vmem [#allocation7], %s930
        // Predicated region
        $region117: #{tpu_custom_call.1} parent=107 // pred_check
          %p932 = pneg %p199
        $region118: #{tpu_custom_call.1} parent=107 // pred_check_branch
          %934 = sbr.rel (%p932) target = $region120
        $region119: #{tpu_custom_call.1} parent=107 // pred_region
          %936 = dma.done %s929, 16
        $region120: #{tpu_custom_call.1} parent=107 // pred_fallthru
          _
        %s937 = sand.u32 %s36, 1
        %s938 = scalar_lea.sflag [#allocation3], %s937
        %s939 = sand.u32 %s264, 1
        %s940 = smul.addr %s939, 32
        %s941 = scalar_lea.vmem [#allocation8], %s940
        // Predicated region
        $region121: #{tpu_custom_call.1} parent=107 // pred_check
          %p942 = pneg %p277
        $region122: #{tpu_custom_call.1} parent=107 // pred_check_branch
          %944 = sbr.rel (%p942) target = $region124
        $region123: #{tpu_custom_call.1} parent=107 // pred_region
          %946 = dma.done %s938, 512
        $region124: #{tpu_custom_call.1} parent=107 // pred_fallthru
          _
        %s947 = sand.u32 %s36, 1
        %s948 = scalar_lea.sflag [#allocation3], %s947
        %s949 = sand.u32 %s316, 1
        %s950 = smul.addr %s949, 32
        %s951 = scalar_lea.vmem [#allocation9], %s950
        // Predicated region
        $region125: #{tpu_custom_call.1} parent=107 // pred_check
          %p952 = pneg %p329
        $region126: #{tpu_custom_call.1} parent=107 // pred_check_branch
          %954 = sbr.rel (%p952) target = $region128
        $region127: #{tpu_custom_call.1} parent=107 // pred_region
          %956 = dma.done %s948, 512
        $region128: #{tpu_custom_call.1} parent=107 // pred_fallthru
          _
        %s957 = sand.u32 %s36, 1
        %s958 = scalar_lea.sflag [#allocation3], %s957
        %s959 = sand.u32 %s394, 1
        %s960 = scalar_lea.vmem [#allocation10], %s959
        // Predicated region
        $region129: #{tpu_custom_call.1} parent=107 // pred_check
          %p961 = pneg %p407
        $region130: #{tpu_custom_call.1} parent=107 // pred_check_branch
          %963 = sbr.rel (%p961) target = $region132
        $region131: #{tpu_custom_call.1} parent=107 // pred_region
          %965 = dma.done %s958, 16
        $region132: #{tpu_custom_call.1} parent=107 // pred_fallthru
          _
        %s966 = sand.u32 %s36, 1
        %s967 = scalar_lea.sflag [#allocation3], %s966
        %s968 = sand.u32 %s420, 1
        %s969 = scalar_lea.vmem [#allocation11], %s968
        // Predicated region
        $region133: #{tpu_custom_call.1} parent=107 // pred_check
          %p970 = pneg %p433
        $region134: #{tpu_custom_call.1} parent=107 // pred_check_branch
          %972 = sbr.rel (%p970) target = $region136
        $region135: #{tpu_custom_call.1} parent=107 // pred_region
          %974 = dma.done %s967, 16
        $region136: #{tpu_custom_call.1} parent=107 // pred_fallthru
          _
        %s975 = sand.u32 %s36, 1
        %s976 = scalar_lea.sflag [#allocation3], %s975
        %s977 = sand.u32 %s498, 1
        %s978 = scalar_lea.vmem [#allocation12], %s977
        // Predicated region
        $region137: #{tpu_custom_call.1} parent=107 // pred_check
          %p979 = pneg %p511
        $region138: #{tpu_custom_call.1} parent=107 // pred_check_branch
          %981 = sbr.rel (%p979) target = $region140
        $region139: #{tpu_custom_call.1} parent=107 // pred_region
          %983 = dma.done %s976, 16
        $region140: #{tpu_custom_call.1} parent=107 // pred_fallthru
          _
        %s984 = sand.u32 %s36, 1
        %s985 = scalar_lea.sflag [#allocation3], %s984
        %s986 = sand.u32 %s524, 1
        %s987 = smul.addr %s986, 32
        %s988 = scalar_lea.vmem [#allocation13], %s987
        // Predicated region
        $region141: #{tpu_custom_call.1} parent=107 // pred_check
          %p989 = pneg %p537
        $region142: #{tpu_custom_call.1} parent=107 // pred_check_branch
          %991 = sbr.rel (%p989) target = $region144
        $region143: #{tpu_custom_call.1} parent=107 // pred_region
          %993 = dma.done %s985, 512
        $region144: #{tpu_custom_call.1} parent=107 // pred_fallthru
          _
        %p994 = pneg %p69
        %p995 = pneg %p66
        %p996 = pneg %p95
        %p997 = pneg %p92
        %p998 = scmp.lt.s32.totalorder %s41, 1
        %s999 = scalar_select %p998, %s41, 1
        %s1000 = smul.addr %s999, 4
        %s1001 = smul.addr %s1000, 8
        %s1002 = scalar_lea.vmem %s2, %s1001
        %p1003 = pneg %p121
        %p1004 = pneg %p118
        %p1005 = scmp.lt.s32.totalorder %s41, 1
        %s1006 = scalar_select %p1005, %s41, 1
        %s1007 = scalar_lea.vmem %s3, %s1006
        %p1008 = pneg %p147
        %p1009 = pneg %p144
        %p1010 = scmp.lt.s32.totalorder %s41, 1
        %s1011 = scalar_select %p1010, %s41, 1
        %s1012 = smul.addr %s1011, 4
        %s1013 = smul.addr %s1012, 8
        %s1014 = scalar_lea.vmem %s4, %s1013
        %p1015 = pneg %p173
        %p1016 = pneg %p170
        %s1017 = sand.u32 %s36, 1
        %s1018 = scalar_lea.sflag [#allocation3], %s1017
        %s1019 = sand.u32 %s186, 1
        %s1020 = scalar_lea.vmem [#allocation7], %s1019
        %p1021 = pneg %p199
        %p1022 = pneg %p196
        %p1023 = scmp.lt.s32.totalorder %s41, 1
        %s1024 = scalar_select %p1023, %s41, 1
        %s1025 = smul.addr %s1024, 4
        %s1026 = smul.addr %s1025, 8
        %s1027 = scalar_lea.vmem %s6, %s1026
        %p1028 = pneg %p225
        %p1029 = pneg %p222
        %p1030 = scmp.lt.s32.totalorder %s41, 1
        %s1031 = scalar_select %p1030, %s41, 1
        %s1032 = scalar_lea.vmem %s7, %s1031
        %p1033 = pneg %p251
        %p1034 = pneg %p248
        %s1035 = sand.u32 %s36, 1
        %s1036 = scalar_lea.sflag [#allocation3], %s1035
        %s1037 = sand.u32 %s264, 1
        %s1038 = smul.addr %s1037, 32
        %s1039 = scalar_lea.vmem [#allocation8], %s1038
        %p1040 = pneg %p277
        %p1041 = pneg %p274
        %p1042 = scmp.lt.s32.totalorder %s41, 1
        %s1043 = scalar_select %p1042, %s41, 1
        %s1044 = scalar_lea.vmem %s9, %s1043
        %p1045 = pneg %p303
        %p1046 = pneg %p300
        %s1047 = sand.u32 %s36, 1
        %s1048 = scalar_lea.sflag [#allocation3], %s1047
        %s1049 = sand.u32 %s316, 1
        %s1050 = smul.addr %s1049, 32
        %s1051 = scalar_lea.vmem [#allocation9], %s1050
        %p1052 = pneg %p329
        %p1053 = pneg %p326
        %p1054 = scmp.lt.s32.totalorder %s41, 1
        %s1055 = scalar_select %p1054, %s41, 1
        %s1056 = scalar_lea.vmem %s11, %s1055
        %p1057 = pneg %p355
        %p1058 = pneg %p352
        %p1059 = scmp.lt.s32.totalorder %s41, 1
        %s1060 = scalar_select %p1059, %s41, 1
        %s1061 = scalar_lea.vmem %s12, %s1060
        %p1062 = pneg %p381
        %p1063 = pneg %p378
        %s1064 = sand.u32 %s36, 1
        %s1065 = scalar_lea.sflag [#allocation3], %s1064
        %s1066 = sand.u32 %s394, 1
        %s1067 = scalar_lea.vmem [#allocation10], %s1066
        %p1068 = pneg %p407
        %p1069 = pneg %p404
        %s1070 = sand.u32 %s36, 1
        %s1071 = scalar_lea.sflag [#allocation3], %s1070
        %s1072 = sand.u32 %s420, 1
        %s1073 = scalar_lea.vmem [#allocation11], %s1072
        %p1074 = pneg %p433
        %p1075 = pneg %p430
        %p1076 = scmp.lt.s32.totalorder %s41, 1
        %s1077 = scalar_select %p1076, %s41, 1
        %s1078 = scalar_lea.vmem %s15, %s1077
        %p1079 = pneg %p459
        %p1080 = pneg %p456
        %p1081 = scmp.lt.s32.totalorder %s41, 1
        %s1082 = scalar_select %p1081, %s41, 1
        %s1083 = scalar_lea.vmem %s16, %s1082
        %p1084 = pneg %p485
        %p1085 = pneg %p482
        %s1086 = sand.u32 %s36, 1
        %s1087 = scalar_lea.sflag [#allocation3], %s1086
        %s1088 = sand.u32 %s498, 1
        %s1089 = scalar_lea.vmem [#allocation12], %s1088
        %p1090 = pneg %p511
        %p1091 = pneg %p508
        %s1092 = sand.u32 %s36, 1
        %s1093 = scalar_lea.sflag [#allocation3], %s1092
        %s1094 = sand.u32 %s524, 1
        %s1095 = smul.addr %s1094, 32
        %s1096 = scalar_lea.vmem [#allocation13], %s1095
        %p1097 = pneg %p537
        %p1098 = pneg %p534
        %p1099 = scmp.lt.s32.totalorder %s41, 1
        %s1100 = scalar_select %p1099, %s41, 1
        %s1101 = scalar_lea.vmem %s19, %s1100
        %p1102 = pneg %p563
        %p1103 = pneg %p560
        %p1104 = scmp.lt.s32.totalorder %s41, 1
        %s1105 = scalar_select %p1104, %s41, 1
        %s1106 = smul.addr %s1105, 8
        %s1107 = smul.addr %s1106, 8
        %s1108 = scalar_lea.vmem %s20, %s1107
        %p1109 = pneg %p589
        %p1110 = pneg %p586
        %p1111 = scmp.lt.s32.totalorder %s41, 1
        %s1112 = scalar_select %p1111, %s41, 1
        %s1113 = scalar_lea.vmem %s21, %s1112
        %p1114 = pneg %p615
        %p1115 = pneg %p612
        %p1116 = pneg %p641
        %p1117 = pneg %p638
        %s1118 = smul.u32 2, %s40
        %p1119 = scmp.lt.s32.totalorder %s41, 1
        %s1120 = scalar_select %p1119, %s41, 1
        %s1121 = smul.addr %s1120, 4
        %s1122 = smul.addr %s1121, 8
        %s1123 = scalar_lea.vmem %s2, %s1122
        %p1124 = scmp.lt.s32.totalorder %s41, 1
        %s1125 = scalar_select %p1124, %s41, 1
        %s1126 = scalar_lea.vmem %s3, %s1125
        %p1127 = scmp.lt.s32.totalorder %s41, 1
        %s1128 = scalar_select %p1127, %s41, 1
        %s1129 = smul.addr %s1128, 4
        %s1130 = smul.addr %s1129, 8
        %s1131 = scalar_lea.vmem %s4, %s1130
        %p1132 = scmp.lt.s32.totalorder %s41, 1
        %s1133 = scalar_select %p1132, %s41, 1
        %s1134 = smul.addr %s1133, 4
        %s1135 = smul.addr %s1134, 8
        %s1136 = scalar_lea.vmem %s6, %s1135
        %p1137 = scmp.lt.s32.totalorder %s41, 1
        %s1138 = scalar_select %p1137, %s41, 1
        %s1139 = scalar_lea.vmem %s7, %s1138
        %p1140 = scmp.lt.s32.totalorder %s41, 1
        %s1141 = scalar_select %p1140, %s41, 1
        %s1142 = scalar_lea.vmem %s9, %s1141
        %p1143 = scmp.lt.s32.totalorder %s41, 1
        %s1144 = scalar_select %p1143, %s41, 1
        %s1145 = scalar_lea.vmem %s11, %s1144
        %p1146 = scmp.lt.s32.totalorder %s41, 1
        %s1147 = scalar_select %p1146, %s41, 1
        %s1148 = scalar_lea.vmem %s12, %s1147
        %p1149 = scmp.lt.s32.totalorder %s41, 1
        %s1150 = scalar_select %p1149, %s41, 1
        %s1151 = scalar_lea.vmem %s15, %s1150
        %p1152 = scmp.lt.s32.totalorder %s41, 1
        %s1153 = scalar_select %p1152, %s41, 1
        %s1154 = scalar_lea.vmem %s16, %s1153
        %p1155 = scmp.lt.s32.totalorder %s41, 1
        %s1156 = scalar_select %p1155, %s41, 1
        %s1157 = scalar_lea.vmem %s19, %s1156
        %p1158 = scmp.lt.s32.totalorder %s41, 1
        %s1159 = scalar_select %p1158, %s41, 1
        %s1160 = smul.addr %s1159, 8
        %s1161 = smul.addr %s1160, 8
        %s1162 = scalar_lea.vmem %s20, %s1161
        %p1163 = scmp.lt.s32.totalorder %s41, 1
        %s1164 = scalar_select %p1163, %s41, 1
        %s1165 = scalar_lea.vmem %s21, %s1164
        %p1166 = scmp.eq.s32.totalorder %s41, 0
        // Predicated region
        $region145: #{tpu_custom_call.1} parent=107 // pred_check
          %p1167 = pneg %p1166
        $region146: #{tpu_custom_call.1} parent=107 // pred_check_branch
          %1169 = sbr.rel (%p1167) target = $region148
        $region147: #{tpu_custom_call.1} parent=107 // pred_region
          %v1170 = vld [vmem:[#allocation2] sm:$0x3f]
          %vm1171 = vcmask 259072
          %1172 = vst.msk [vmem:[#allocation14] sm:$0x3f] %vm1171, %v1170
        $region148: #{tpu_custom_call.1} parent=107 // pred_fallthru
          _
        %v1173 = vld [vmem:[#allocation14] sm:$0x3f]
        %v1174 = vld [vmem:[%s1123] sm:$0xff]
        %v1175 = vld [vmem:[%s1123 + $0x8] sm:$0xff]
        %v1176 = vld [vmem:[%s1123 + $0x10] sm:$0xff]
        %v1177 = vld [vmem:[%s1123 + $0x18] sm:$0xff]
        %v1178 = vld [vmem:[%s1126] sm:$0x1]
        %v1180 = vperm.slane %v1178, 0
        %vm1182 = vcmask 261120
        %v1184 = vsel %vm1182, %v1173, 0
        %1186 = vmatpush.msra.mxu0 0.0
        %1187 = vmatpush.msra.mxu0 0.0
        %1188 = vmatpush.msra.mxu0 0.0
        %1189 = vmatpush.msra.mxu0 0.0
        %1190 = vmatpush.msra.mxu0 0.0
        %1191 = vmatpush.msra.mxu0 0.0
        %1192 = vmatpush.msra.mxu0 0.0
        %1193 = vmatpush.msra.mxu0 0.0
        %1194 = vmatpush.msra.mxu0 0.0
        %1195 = vmatpush.msra.mxu0 0.0
        %1196 = vmatpush.msra.mxu0 0.0
        %1197 = vmatpush.msra.mxu0 0.0
        %1198 = vmatpush.msra.mxu0 %v1177
        %1199 = vmatpush.msra.mxu0 %v1176
        %1200 = vmatpush.msra.mxu0 %v1175
        %1201 = vmatpush.msra.mxu0 %v1174
        %1202 = vmatmul.f32.gmra.mxu0 %v1184
        %v1203 = vpop.f32.mrf.mxu0
        %v1204 = vadd.f32 %v1180, %v1203
        %1205 = vdwg.mxu0
        %1207 = vrot.lane.b32.xlu0 %v1204, 96
        %v1208 = vpop.permute.xlu0 %1207
        %vm1209 = vcmask 64512
        %v1210 = vsel %vm1209, %v1204, 0
        %v1212 = vsel %vm1209, %v1208, 0
        %1214 = vmatpush.xpose.msra.mxu0 0.0
        %1215 = vmatpush.xpose.msra.mxu0 0.0
        %1216 = vmatpush.xpose.msra.mxu0 0.0
        %1217 = vmatpush.xpose.msra.mxu0 0.0
        %1218 = vmatpush.xpose.msra.mxu0 0.0
        %1219 = vmatpush.xpose.msra.mxu0 0.0
        %1220 = vmatpush.xpose.msra.mxu0 0.0
        %1221 = vmatpush.xpose.msra.mxu0 0.0
        %1222 = vmatpush.xpose.msra.mxu0 0.0
        %1223 = vmatpush.xpose.msra.mxu0 0.0
        %1224 = vmatpush.xpose.msra.mxu0 0.0
        %1225 = vmatpush.xpose.msra.mxu0 0.0
        %1226 = vmatpush.xpose.msra.mxu0 0.0
        %1227 = vmatpush.xpose.msra.mxu0 0.0
        %1228 = vmatpush.xpose.msra.mxu0 0.0
        %1229 = vmatpush.xpose.msra.mxu0 %v1212
        %1230 = vmatmul.f32.gmra.mxu0 %v1210
        %v1231 = vpop.f32.mrf.mxu0
        %v1232 = vadd.f32 0.0, %v1231
        %1233 = vdwg.mxu0
        %v1234 = vmul.f32 %v1232, 0.35355338
        %vm1235 = vcmask 18432
        %v1236 = vsel %vm1235, %v1234, -inf
        %1237 = vmax.xlane.f32.xlu0 %v1236
        %v1238 = vpop.xlane.xlu0 %1237
        %v1239 = vsub.f32 %v1234, %v1238
        %v1240 = vmul.f32 %v1239, 1.442695
        %v1241 = vpow.pop %v1240
        %v1242 = vsel %vm1235, %v1241, 0.0
        %1243 = vadd.xlane.f32.xlu0 %v1242
        %v1244 = vpop.xlane.xlu0 %1243
        %v1245 = vrcp.pop %v1244
        %v1246 = vmul.f32 %v1241, %v1245
        %1247 = vrot.lane.b32.xlu0 %v1204, 64
        %v1248 = vpop.permute.xlu0 %1247
        %vm1249 = vcmask 23552
        %v1251 = vsel %vm1249, %v1246, 0
        %vm1253 = vcmask 1042432
        %v1254 = vsel %vm1253, %v1248, 0
        %1256 = vmatpush.msra.mxu0 0.0
        %1257 = vmatpush.msra.mxu0 0.0
        %1258 = vmatpush.msra.mxu0 0.0
        %1259 = vmatpush.msra.mxu0 0.0
        %1260 = vmatpush.msra.mxu0 0.0
        %1261 = vmatpush.msra.mxu0 0.0
        %1262 = vmatpush.msra.mxu0 0.0
        %1263 = vmatpush.msra.mxu0 0.0
        %1264 = vmatpush.msra.mxu0 0.0
        %1265 = vmatpush.msra.mxu0 0.0
        %1266 = vmatpush.msra.mxu0 0.0
        %1267 = vmatpush.msra.mxu0 0.0
        %1268 = vmatpush.msra.mxu0 0.0
        %1269 = vmatpush.msra.mxu0 0.0
        %1270 = vmatpush.msra.mxu0 0.0
        %1271 = vmatpush.msra.mxu0 %v1254
        %1272 = vmatmul.f32.gmra.mxu0 %v1251
        %v1273 = vpop.f32.mrf.mxu0
        %v1274 = vadd.f32 0.0, %v1273
        %1275 = vdwg.mxu0
        %1276 = vrot.lane.b32.xlu0 %v1204, 120
        %v1277 = vpop.permute.xlu0 %1276
        %1278 = vrot.lane.b32.xlu0 %v1204, 88
        %v1279 = vpop.permute.xlu0 %1278
        %v1280 = vsel %vm1209, %v1277, 0
        %v1282 = vsel %vm1209, %v1279, 0
        %1284 = vmatpush.xpose.msra.mxu0 0.0
        %1285 = vmatpush.xpose.msra.mxu0 0.0
        %1286 = vmatpush.xpose.msra.mxu0 0.0
        %1287 = vmatpush.xpose.msra.mxu0 0.0
        %1288 = vmatpush.xpose.msra.mxu0 0.0
        %1289 = vmatpush.xpose.msra.mxu0 0.0
        %1290 = vmatpush.xpose.msra.mxu0 0.0
        %1291 = vmatpush.xpose.msra.mxu0 0.0
        %1292 = vmatpush.xpose.msra.mxu0 0.0
        %1293 = vmatpush.xpose.msra.mxu0 0.0
        %1294 = vmatpush.xpose.msra.mxu0 0.0
        %1295 = vmatpush.xpose.msra.mxu0 0.0
        %1296 = vmatpush.xpose.msra.mxu0 0.0
        %1297 = vmatpush.xpose.msra.mxu0 0.0
        %1298 = vmatpush.xpose.msra.mxu0 0.0
        %1299 = vmatpush.xpose.msra.mxu0 %v1282
        %1300 = vmatmul.f32.gmra.mxu0 %v1280
        %v1301 = vpop.f32.mrf.mxu0
        %v1302 = vadd.f32 0.0, %v1301
        %1303 = vdwg.mxu0
        %v1304 = vmul.f32 %v1302, 0.35355338
        %v1305 = vsel %vm1235, %v1304, -inf
        %1306 = vmax.xlane.f32.xlu0 %v1305
        %v1307 = vpop.xlane.xlu0 %1306
        %v1308 = vsub.f32 %v1304, %v1307
        %v1309 = vmul.f32 %v1308, 1.442695
        %v1310 = vpow.pop %v1309
        %v1311 = vsel %vm1235, %v1310, 0.0
        %1312 = vadd.xlane.f32.xlu0 %v1311
        %v1313 = vpop.xlane.xlu0 %1312
        %v1314 = vrcp.pop %v1313
        %v1315 = vmul.f32 %v1310, %v1314
        %1316 = vrot.lane.b32.xlu0 %v1204, 56
        %v1317 = vpop.permute.xlu0 %1316
        %v1319 = vsel %vm1249, %v1315, 0
        %v1321 = vsel %vm1253, %v1317, 0
        %1323 = vmatpush.msra.mxu0 0.0
        %1324 = vmatpush.msra.mxu0 0.0
        %1325 = vmatpush.msra.mxu0 0.0
        %1326 = vmatpush.msra.mxu0 0.0
        %1327 = vmatpush.msra.mxu0 0.0
        %1328 = vmatpush.msra.mxu0 0.0
        %1329 = vmatpush.msra.mxu0 0.0
        %1330 = vmatpush.msra.mxu0 0.0
        %1331 = vmatpush.msra.mxu0 0.0
        %1332 = vmatpush.msra.mxu0 0.0
        %1333 = vmatpush.msra.mxu0 0.0
        %1334 = vmatpush.msra.mxu0 0.0
        %1335 = vmatpush.msra.mxu0 0.0
        %1336 = vmatpush.msra.mxu0 0.0
        %1337 = vmatpush.msra.mxu0 0.0
        %1338 = vmatpush.msra.mxu0 %v1321
        %1339 = vmatmul.f32.gmra.mxu0 %v1319
        %v1340 = vpop.f32.mrf.mxu0
        %v1341 = vadd.f32 0.0, %v1340
        %1342 = vdwg.mxu0
        %1343 = vrot.lane.b32.xlu0 %v1204, 112
        %v1344 = vpop.permute.xlu0 %1343
        %1345 = vrot.lane.b32.xlu0 %v1204, 80
        %v1346 = vpop.permute.xlu0 %1345
        %v1347 = vsel %vm1209, %v1344, 0
        %v1349 = vsel %vm1209, %v1346, 0
        %1351 = vmatpush.xpose.msra.mxu0 0.0
        %1352 = vmatpush.xpose.msra.mxu0 0.0
        %1353 = vmatpush.xpose.msra.mxu0 0.0
        %1354 = vmatpush.xpose.msra.mxu0 0.0
        %1355 = vmatpush.xpose.msra.mxu0 0.0
        %1356 = vmatpush.xpose.msra.mxu0 0.0
        %1357 = vmatpush.xpose.msra.mxu0 0.0
        %1358 = vmatpush.xpose.msra.mxu0 0.0
        %1359 = vmatpush.xpose.msra.mxu0 0.0
        %1360 = vmatpush.xpose.msra.mxu0 0.0
        %1361 = vmatpush.xpose.msra.mxu0 0.0
        %1362 = vmatpush.xpose.msra.mxu0 0.0
        %1363 = vmatpush.xpose.msra.mxu0 0.0
        %1364 = vmatpush.xpose.msra.mxu0 0.0
        %1365 = vmatpush.xpose.msra.mxu0 0.0
        %1366 = vmatpush.xpose.msra.mxu0 %v1349
        %1367 = vmatmul.f32.gmra.mxu0 %v1347
        %v1368 = vpop.f32.mrf.mxu0
        %v1369 = vadd.f32 0.0, %v1368
        %1370 = vdwg.mxu0
        %v1371 = vmul.f32 %v1369, 0.35355338
        %v1372 = vsel %vm1235, %v1371, -inf
        %1373 = vmax.xlane.f32.xlu0 %v1372
        %v1374 = vpop.xlane.xlu0 %1373
        %v1375 = vsub.f32 %v1371, %v1374
        %v1376 = vmul.f32 %v1375, 1.442695
        %v1377 = vpow.pop %v1376
        %v1378 = vsel %vm1235, %v1377, 0.0
        %1379 = vadd.xlane.f32.xlu0 %v1378
        %v1380 = vpop.xlane.xlu0 %1379
        %v1381 = vrcp.pop %v1380
        %v1382 = vmul.f32 %v1377, %v1381
        %1383 = vrot.lane.b32.xlu0 %v1204, 48
        %v1384 = vpop.permute.xlu0 %1383
        %v1386 = vsel %vm1249, %v1382, 0
        %v1388 = vsel %vm1253, %v1384, 0
        %1390 = vmatpush.msra.mxu0 0.0
        %1391 = vmatpush.msra.mxu0 0.0
        %1392 = vmatpush.msra.mxu0 0.0
        %1393 = vmatpush.msra.mxu0 0.0
        %1394 = vmatpush.msra.mxu0 0.0
        %1395 = vmatpush.msra.mxu0 0.0
        %1396 = vmatpush.msra.mxu0 0.0
        %1397 = vmatpush.msra.mxu0 0.0
        %1398 = vmatpush.msra.mxu0 0.0
        %1399 = vmatpush.msra.mxu0 0.0
        %1400 = vmatpush.msra.mxu0 0.0
        %1401 = vmatpush.msra.mxu0 0.0
        %1402 = vmatpush.msra.mxu0 0.0
        %1403 = vmatpush.msra.mxu0 0.0
        %1404 = vmatpush.msra.mxu0 0.0
        %1405 = vmatpush.msra.mxu0 %v1388
        %1406 = vmatmul.f32.gmra.mxu0 %v1386
        %v1407 = vpop.f32.mrf.mxu0
        %v1408 = vadd.f32 0.0, %v1407
        %1409 = vdwg.mxu0
        %1410 = vrot.lane.b32.xlu0 %v1204, 104
        %v1411 = vpop.permute.xlu0 %1410
        %1412 = vrot.lane.b32.xlu0 %v1204, 72
        %v1413 = vpop.permute.xlu0 %1412
        %v1414 = vsel %vm1209, %v1411, 0
        %v1416 = vsel %vm1209, %v1413, 0
        %1418 = vmatpush.xpose.msra.mxu0 0.0
        %1419 = vmatpush.xpose.msra.mxu0 0.0
        %1420 = vmatpush.xpose.msra.mxu0 0.0
        %1421 = vmatpush.xpose.msra.mxu0 0.0
        %1422 = vmatpush.xpose.msra.mxu0 0.0
        %1423 = vmatpush.xpose.msra.mxu0 0.0
        %1424 = vmatpush.xpose.msra.mxu0 0.0
        %1425 = vmatpush.xpose.msra.mxu0 0.0
        %1426 = vmatpush.xpose.msra.mxu0 0.0
        %1427 = vmatpush.xpose.msra.mxu0 0.0
        %1428 = vmatpush.xpose.msra.mxu0 0.0
        %1429 = vmatpush.xpose.msra.mxu0 0.0
        %1430 = vmatpush.xpose.msra.mxu0 0.0
        %1431 = vmatpush.xpose.msra.mxu0 0.0
        %1432 = vmatpush.xpose.msra.mxu0 0.0
        %1433 = vmatpush.xpose.msra.mxu0 %v1416
        %1434 = vmatmul.f32.gmra.mxu0 %v1414
        %v1435 = vpop.f32.mrf.mxu0
        %v1436 = vadd.f32 0.0, %v1435
        %1437 = vdwg.mxu0
        %v1438 = vmul.f32 %v1436, 0.35355338
        %v1439 = vsel %vm1235, %v1438, -inf
        %1440 = vmax.xlane.f32.xlu0 %v1439
        %v1441 = vpop.xlane.xlu0 %1440
        %v1442 = vsub.f32 %v1438, %v1441
        %v1443 = vmul.f32 %v1442, 1.442695
        %v1444 = vpow.pop %v1443
        %v1445 = vsel %vm1235, %v1444, 0.0
        %1446 = vadd.xlane.f32.xlu0 %v1445
        %v1447 = vpop.xlane.xlu0 %1446
        %v1448 = vrcp.pop %v1447
        %v1449 = vmul.f32 %v1444, %v1448
        %1450 = vrot.lane.b32.xlu0 %v1204, 40
        %v1451 = vpop.permute.xlu0 %1450
        %v1453 = vsel %vm1249, %v1449, 0
        %v1455 = vsel %vm1253, %v1451, 0
        %1457 = vmatpush.msra.mxu0 0.0
        %1458 = vmatpush.msra.mxu0 0.0
        %1459 = vmatpush.msra.mxu0 0.0
        %1460 = vmatpush.msra.mxu0 0.0
        %1461 = vmatpush.msra.mxu0 0.0
        %1462 = vmatpush.msra.mxu0 0.0
        %1463 = vmatpush.msra.mxu0 0.0
        %1464 = vmatpush.msra.mxu0 0.0
        %1465 = vmatpush.msra.mxu0 0.0
        %1466 = vmatpush.msra.mxu0 0.0
        %1467 = vmatpush.msra.mxu0 0.0
        %1468 = vmatpush.msra.mxu0 0.0
        %1469 = vmatpush.msra.mxu0 0.0
        %1470 = vmatpush.msra.mxu0 0.0
        %1471 = vmatpush.msra.mxu0 0.0
        %1472 = vmatpush.msra.mxu0 %v1455
        %1473 = vmatmul.f32.gmra.mxu0 %v1453
        %v1474 = vpop.f32.mrf.mxu0
        %v1475 = vadd.f32 0.0, %v1474
        %1476 = vdwg.mxu0
        %1478 = vrot.lane.b32.xlu0 %v1341, 8
        %v1479 = vpop.permute.xlu0 %1478
        %1482 = vrot.lane.b32.xlu0 %v1408, 16
        %v1483 = vpop.permute.xlu0 %1482
        %1486 = vrot.lane.b32.xlu0 %v1475, 24
        %v1487 = vpop.permute.xlu0 %1486
        %v1489 = vsel %vm1209, %v1274, %v1479
        %vm1490 = vcmask 130048
        %v1491 = vsel %vm1490, %v1489, %v1483
        %vm1492 = vcmask 195584
        %v1493 = vsel %vm1492, %v1491, %v1487
        %v1494 = vrot.slane %v1204, 3
        %1495 = vrot.lane.b32.xlu0 %v1494, 96
        %v1496 = vpop.permute.xlu0 %1495
        %v1497 = vsel %vm1209, %v1494, 0
        %v1499 = vsel %vm1209, %v1496, 0
        %1501 = vmatpush.xpose.msra.mxu0 0.0
        %1502 = vmatpush.xpose.msra.mxu0 0.0
        %1503 = vmatpush.xpose.msra.mxu0 0.0
        %1504 = vmatpush.xpose.msra.mxu0 0.0
        %1505 = vmatpush.xpose.msra.mxu0 0.0
        %1506 = vmatpush.xpose.msra.mxu0 0.0
        %1507 = vmatpush.xpose.msra.mxu0 0.0
        %1508 = vmatpush.xpose.msra.mxu0 0.0
        %1509 = vmatpush.xpose.msra.mxu0 0.0
        %1510 = vmatpush.xpose.msra.mxu0 0.0
        %1511 = vmatpush.xpose.msra.mxu0 0.0
        %1512 = vmatpush.xpose.msra.mxu0 0.0
        %1513 = vmatpush.xpose.msra.mxu0 0.0
        %1514 = vmatpush.xpose.msra.mxu0 0.0
        %1515 = vmatpush.xpose.msra.mxu0 0.0
        %1516 = vmatpush.xpose.msra.mxu0 %v1499
        %1517 = vmatmul.f32.gmra.mxu0 %v1497
        %v1518 = vpop.f32.mrf.mxu0
        %v1519 = vadd.f32 0.0, %v1518
        %1520 = vdwg.mxu0
        %v1521 = vmul.f32 %v1519, 0.35355338
        %v1522 = vsel %vm1235, %v1521, -inf
        %1523 = vmax.xlane.f32.xlu0 %v1522
        %v1524 = vpop.xlane.xlu0 %1523
        %v1525 = vsub.f32 %v1521, %v1524
        %v1526 = vmul.f32 %v1525, 1.442695
        %v1527 = vpow.pop %v1526
        %v1528 = vsel %vm1235, %v1527, 0.0
        %1529 = vadd.xlane.f32.xlu0 %v1528
        %v1530 = vpop.xlane.xlu0 %1529
        %v1531 = vrcp.pop %v1530
        %v1532 = vmul.f32 %v1527, %v1531
        %1533 = vrot.lane.b32.xlu0 %v1494, 64
        %v1534 = vpop.permute.xlu0 %1533
        %v1536 = vsel %vm1249, %v1532, 0
        %v1538 = vsel %vm1253, %v1534, 0
        %1540 = vmatpush.msra.mxu0 0.0
        %1541 = vmatpush.msra.mxu0 0.0
        %1542 = vmatpush.msra.mxu0 0.0
        %1543 = vmatpush.msra.mxu0 0.0
        %1544 = vmatpush.msra.mxu0 0.0
        %1545 = vmatpush.msra.mxu0 0.0
        %1546 = vmatpush.msra.mxu0 0.0
        %1547 = vmatpush.msra.mxu0 0.0
        %1548 = vmatpush.msra.mxu0 0.0
        %1549 = vmatpush.msra.mxu0 0.0
        %1550 = vmatpush.msra.mxu0 0.0
        %1551 = vmatpush.msra.mxu0 0.0
        %1552 = vmatpush.msra.mxu0 0.0
        %1553 = vmatpush.msra.mxu0 0.0
        %1554 = vmatpush.msra.mxu0 0.0
        %1555 = vmatpush.msra.mxu0 %v1538
        %1556 = vmatmul.f32.gmra.mxu0 %v1536
        %v1557 = vpop.f32.mrf.mxu0
        %v1558 = vadd.f32 0.0, %v1557
        %1559 = vdwg.mxu0
        %1560 = vrot.lane.b32.xlu0 %v1494, 120
        %v1561 = vpop.permute.xlu0 %1560
        %1562 = vrot.lane.b32.xlu0 %v1494, 88
        %v1563 = vpop.permute.xlu0 %1562
        %v1564 = vsel %vm1209, %v1561, 0
        %v1566 = vsel %vm1209, %v1563, 0
        %1568 = vmatpush.xpose.msra.mxu0 0.0
        %1569 = vmatpush.xpose.msra.mxu0 0.0
        %1570 = vmatpush.xpose.msra.mxu0 0.0
        %1571 = vmatpush.xpose.msra.mxu0 0.0
        %1572 = vmatpush.xpose.msra.mxu0 0.0
        %1573 = vmatpush.xpose.msra.mxu0 0.0
        %1574 = vmatpush.xpose.msra.mxu0 0.0
        %1575 = vmatpush.xpose.msra.mxu0 0.0
        %1576 = vmatpush.xpose.msra.mxu0 0.0
        %1577 = vmatpush.xpose.msra.mxu0 0.0
        %1578 = vmatpush.xpose.msra.mxu0 0.0
        %1579 = vmatpush.xpose.msra.mxu0 0.0
        %1580 = vmatpush.xpose.msra.mxu0 0.0
        %1581 = vmatpush.xpose.msra.mxu0 0.0
        %1582 = vmatpush.xpose.msra.mxu0 0.0
        %1583 = vmatpush.xpose.msra.mxu0 %v1566
        %1584 = vmatmul.f32.gmra.mxu0 %v1564
        %v1585 = vpop.f32.mrf.mxu0
        %v1586 = vadd.f32 0.0, %v1585
        %1587 = vdwg.mxu0
        %v1588 = vmul.f32 %v1586, 0.35355338
        %v1589 = vsel %vm1235, %v1588, -inf
        %1590 = vmax.xlane.f32.xlu0 %v1589
        %v1591 = vpop.xlane.xlu0 %1590
        %v1592 = vsub.f32 %v1588, %v1591
        %v1593 = vmul.f32 %v1592, 1.442695
        %v1594 = vpow.pop %v1593
        %v1595 = vsel %vm1235, %v1594, 0.0
        %1596 = vadd.xlane.f32.xlu0 %v1595
        %v1597 = vpop.xlane.xlu0 %1596
        %v1598 = vrcp.pop %v1597
        %v1599 = vmul.f32 %v1594, %v1598
        %1600 = vrot.lane.b32.xlu0 %v1494, 56
        %v1601 = vpop.permute.xlu0 %1600
        %v1603 = vsel %vm1249, %v1599, 0
        %v1605 = vsel %vm1253, %v1601, 0
        %1607 = vmatpush.msra.mxu0 0.0
        %1608 = vmatpush.msra.mxu0 0.0
        %1609 = vmatpush.msra.mxu0 0.0
        %1610 = vmatpush.msra.mxu0 0.0
        %1611 = vmatpush.msra.mxu0 0.0
        %1612 = vmatpush.msra.mxu0 0.0
        %1613 = vmatpush.msra.mxu0 0.0
        %1614 = vmatpush.msra.mxu0 0.0
        %1615 = vmatpush.msra.mxu0 0.0
        %1616 = vmatpush.msra.mxu0 0.0
        %1617 = vmatpush.msra.mxu0 0.0
        %1618 = vmatpush.msra.mxu0 0.0
        %1619 = vmatpush.msra.mxu0 0.0
        %1620 = vmatpush.msra.mxu0 0.0
        %1621 = vmatpush.msra.mxu0 0.0
        %1622 = vmatpush.msra.mxu0 %v1605
        %1623 = vmatmul.f32.gmra.mxu0 %v1603
        %v1624 = vpop.f32.mrf.mxu0
        %v1625 = vadd.f32 0.0, %v1624
        %1626 = vdwg.mxu0
        %1627 = vrot.lane.b32.xlu0 %v1494, 112
        %v1628 = vpop.permute.xlu0 %1627
        %1629 = vrot.lane.b32.xlu0 %v1494, 80
        %v1630 = vpop.permute.xlu0 %1629
        %v1631 = vsel %vm1209, %v1628, 0
        %v1633 = vsel %vm1209, %v1630, 0
        %1635 = vmatpush.xpose.msra.mxu0 0.0
        %1636 = vmatpush.xpose.msra.mxu0 0.0
        %1637 = vmatpush.xpose.msra.mxu0 0.0
        %1638 = vmatpush.xpose.msra.mxu0 0.0
        %1639 = vmatpush.xpose.msra.mxu0 0.0
        %1640 = vmatpush.xpose.msra.mxu0 0.0
        %1641 = vmatpush.xpose.msra.mxu0 0.0
        %1642 = vmatpush.xpose.msra.mxu0 0.0
        %1643 = vmatpush.xpose.msra.mxu0 0.0
        %1644 = vmatpush.xpose.msra.mxu0 0.0
        %1645 = vmatpush.xpose.msra.mxu0 0.0
        %1646 = vmatpush.xpose.msra.mxu0 0.0
        %1647 = vmatpush.xpose.msra.mxu0 0.0
        %1648 = vmatpush.xpose.msra.mxu0 0.0
        %1649 = vmatpush.xpose.msra.mxu0 0.0
        %1650 = vmatpush.xpose.msra.mxu0 %v1633
        %1651 = vmatmul.f32.gmra.mxu0 %v1631
        %v1652 = vpop.f32.mrf.mxu0
        %v1653 = vadd.f32 0.0, %v1652
        %1654 = vdwg.mxu0
        %v1655 = vmul.f32 %v1653, 0.35355338
        %v1656 = vsel %vm1235, %v1655, -inf
        %1657 = vmax.xlane.f32.xlu0 %v1656
        %v1658 = vpop.xlane.xlu0 %1657
        %v1659 = vsub.f32 %v1655, %v1658
        %v1660 = vmul.f32 %v1659, 1.442695
        %v1661 = vpow.pop %v1660
        %v1662 = vsel %vm1235, %v1661, 0.0
        %1663 = vadd.xlane.f32.xlu0 %v1662
        %v1664 = vpop.xlane.xlu0 %1663
        %v1665 = vrcp.pop %v1664
        %v1666 = vmul.f32 %v1661, %v1665
        %1667 = vrot.lane.b32.xlu0 %v1494, 48
        %v1668 = vpop.permute.xlu0 %1667
        %v1670 = vsel %vm1249, %v1666, 0
        %v1672 = vsel %vm1253, %v1668, 0
        %1674 = vmatpush.msra.mxu0 0.0
        %1675 = vmatpush.msra.mxu0 0.0
        %1676 = vmatpush.msra.mxu0 0.0
        %1677 = vmatpush.msra.mxu0 0.0
        %1678 = vmatpush.msra.mxu0 0.0
        %1679 = vmatpush.msra.mxu0 0.0
        %1680 = vmatpush.msra.mxu0 0.0
        %1681 = vmatpush.msra.mxu0 0.0
        %1682 = vmatpush.msra.mxu0 0.0
        %1683 = vmatpush.msra.mxu0 0.0
        %1684 = vmatpush.msra.mxu0 0.0
        %1685 = vmatpush.msra.mxu0 0.0
        %1686 = vmatpush.msra.mxu0 0.0
        %1687 = vmatpush.msra.mxu0 0.0
        %1688 = vmatpush.msra.mxu0 0.0
        %1689 = vmatpush.msra.mxu0 %v1672
        %1690 = vmatmul.f32.gmra.mxu0 %v1670
        %v1691 = vpop.f32.mrf.mxu0
        %v1692 = vadd.f32 0.0, %v1691
        %1693 = vdwg.mxu0
        %1694 = vrot.lane.b32.xlu0 %v1494, 104
        %v1695 = vpop.permute.xlu0 %1694
        %1696 = vrot.lane.b32.xlu0 %v1494, 72
        %v1697 = vpop.permute.xlu0 %1696
        %v1698 = vsel %vm1209, %v1695, 0
        %v1700 = vsel %vm1209, %v1697, 0
        %1702 = vmatpush.xpose.msra.mxu0 0.0
        %1703 = vmatpush.xpose.msra.mxu0 0.0
        %1704 = vmatpush.xpose.msra.mxu0 0.0
        %1705 = vmatpush.xpose.msra.mxu0 0.0
        %1706 = vmatpush.xpose.msra.mxu0 0.0
        %1707 = vmatpush.xpose.msra.mxu0 0.0
        %1708 = vmatpush.xpose.msra.mxu0 0.0
        %1709 = vmatpush.xpose.msra.mxu0 0.0
        %1710 = vmatpush.xpose.msra.mxu0 0.0
        %1711 = vmatpush.xpose.msra.mxu0 0.0
        %1712 = vmatpush.xpose.msra.mxu0 0.0
        %1713 = vmatpush.xpose.msra.mxu0 0.0
        %1714 = vmatpush.xpose.msra.mxu0 0.0
        %1715 = vmatpush.xpose.msra.mxu0 0.0
        %1716 = vmatpush.xpose.msra.mxu0 0.0
        %1717 = vmatpush.xpose.msra.mxu0 %v1700
        %1718 = vmatmul.f32.gmra.mxu0 %v1698
        %v1719 = vpop.f32.mrf.mxu0
        %v1720 = vadd.f32 0.0, %v1719
        %1721 = vdwg.mxu0
        %v1722 = vmul.f32 %v1720, 0.35355338
        %v1723 = vsel %vm1235, %v1722, -inf
        %1724 = vmax.xlane.f32.xlu0 %v1723
        %v1725 = vpop.xlane.xlu0 %1724
        %v1726 = vsub.f32 %v1722, %v1725
        %v1727 = vmul.f32 %v1726, 1.442695
        %v1728 = vpow.pop %v1727
        %v1729 = vsel %vm1235, %v1728, 0.0
        %1730 = vadd.xlane.f32.xlu0 %v1729
        %v1731 = vpop.xlane.xlu0 %1730
        %v1732 = vrcp.pop %v1731
        %v1733 = vmul.f32 %v1728, %v1732
        %1734 = vrot.lane.b32.xlu0 %v1494, 40
        %v1735 = vpop.permute.xlu0 %1734
        %v1737 = vsel %vm1249, %v1733, 0
        %v1739 = vsel %vm1253, %v1735, 0
        %1741 = vmatpush.msra.mxu0 0.0
        %1742 = vmatpush.msra.mxu0 0.0
        %1743 = vmatpush.msra.mxu0 0.0
        %1744 = vmatpush.msra.mxu0 0.0
        %1745 = vmatpush.msra.mxu0 0.0
        %1746 = vmatpush.msra.mxu0 0.0
        %1747 = vmatpush.msra.mxu0 0.0
        %1748 = vmatpush.msra.mxu0 0.0
        %1749 = vmatpush.msra.mxu0 0.0
        %1750 = vmatpush.msra.mxu0 0.0
        %1751 = vmatpush.msra.mxu0 0.0
        %1752 = vmatpush.msra.mxu0 0.0
        %1753 = vmatpush.msra.mxu0 0.0
        %1754 = vmatpush.msra.mxu0 0.0
        %1755 = vmatpush.msra.mxu0 0.0
        %1756 = vmatpush.msra.mxu0 %v1739
        %1757 = vmatmul.f32.gmra.mxu0 %v1737
        %v1758 = vpop.f32.mrf.mxu0
        %v1759 = vadd.f32 0.0, %v1758
        %1760 = vdwg.mxu0
        %1762 = vrot.lane.b32.xlu0 %v1625, 8
        %v1763 = vpop.permute.xlu0 %1762
        %1766 = vrot.lane.b32.xlu0 %v1692, 16
        %v1767 = vpop.permute.xlu0 %1766
        %1770 = vrot.lane.b32.xlu0 %v1759, 24
        %v1771 = vpop.permute.xlu0 %1770
        %v1773 = vsel %vm1209, %v1558, %v1763
        %v1774 = vsel %vm1490, %v1773, %v1767
        %v1775 = vsel %vm1492, %v1774, %v1771
        %v1777 = vrot.slane %v1775, 5
        %v1779 = vsel %vm1253, %v1493, %v1777
        %v1780 = vld [vmem:[%s1131] sm:$0xff]
        %v1781 = vld [vmem:[%s1131 + $0x8] sm:$0xff]
        %v1782 = vld [vmem:[%s1131 + $0x10] sm:$0xff]
        %v1783 = vld [vmem:[%s1131 + $0x18] sm:$0xff]
        %v1784 = vld [vmem:[%s931] sm:$0x1]
        %v1786 = vperm.slane %v1784, 0
        %v1789 = vsel %vm1182, %v1779, 0
        %1791 = vmatpush.msra.mxu0 0.0
        %1792 = vmatpush.msra.mxu0 0.0
        %1793 = vmatpush.msra.mxu0 0.0
        %1794 = vmatpush.msra.mxu0 0.0
        %1795 = vmatpush.msra.mxu0 0.0
        %1796 = vmatpush.msra.mxu0 0.0
        %1797 = vmatpush.msra.mxu0 0.0
        %1798 = vmatpush.msra.mxu0 0.0
        %1799 = vmatpush.msra.mxu0 0.0
        %1800 = vmatpush.msra.mxu0 0.0
        %1801 = vmatpush.msra.mxu0 0.0
        %1802 = vmatpush.msra.mxu0 0.0
        %1803 = vmatpush.msra.mxu0 %v1783
        %1804 = vmatpush.msra.mxu0 %v1782
        %1805 = vmatpush.msra.mxu0 %v1781
        %1806 = vmatpush.msra.mxu0 %v1780
        %1807 = vmatmul.f32.gmra.mxu0 %v1789
        %v1808 = vpop.f32.mrf.mxu0
        %v1809 = vadd.f32 %v1786, %v1808
        %1810 = vdwg.mxu0
        %v1811 = vadd.f32 %v1173, %v1809
        %v1812 = vld [vmem:[%s1148] sm:$0x1]
        %v1813 = vld [vmem:[%s960] sm:$0x1]
        %vm1814 = vcmask 259072
        %v1815 = vsel %vm1814, %v1811, 0.0
        %1816 = vadd.xlane.f32.xlu0 %v1815
        %v1817 = vpop.xlane.xlu0 %1816
        %v1818 = vrcp.pop 32.0
        %v1819 = vmul.f32 32.0, %v1818
        %v1820 = vsub.f32 1.0, %v1819
        %v1821 = vmul.f32 %v1818, %v1820
        %v1822 = vadd.f32 %v1818, %v1821
        %vm1823 = vweird.f32 %v1818
        %v1824 = vsel %vm1823, %v1818, %v1822
        %v1825 = vmul.f32 %v1817, %v1824
        %v1826 = vsub.f32 %v1811, %v1825
        %v1827 = vmul.f32 %v1826, %v1826
        %v1828 = vsel %vm1814, %v1827, 0.0
        %1829 = vadd.xlane.f32.xlu0 %v1828
        %v1830 = vpop.xlane.xlu0 %1829
        %v1831 = vmul.f32 %v1830, %v1824
        %v1832 = vadd.f32 %v1831, 1e-05
        %v1833 = vrsqrt.pop %v1832
        %v1834 = vmul.f32 %v1833, %v1832
        %v1835 = vmul.f32 %v1834, %v1833
        %v1836 = vmul.f32 0.5, %v1835
        %v1837 = vsub.f32 1.5, %v1836
        %v1838 = vmul.f32 %v1833, %v1837
        %vm1839 = vweird.f32 %v1832
        %vm1840 = vweird.f32 %v1833
        %vm1841 = vmor %vm1839, %vm1840
        %v1842 = vsel %vm1841, %v1833, %v1838
        %v1843 = vmul.f32 %v1826, %v1842
        %v1845 = vperm.slane %v1812, 0
        %v1847 = vmul.f32 %v1843, %v1845
        %v1849 = vperm.slane %v1813, 0
        %v1851 = vadd.f32 %v1847, %v1849
        %v1853 = vrot.slane %v1851, 2
        %v1855 = vrot.slane %v1851, 4
        %vm1857 = vcmask 1040384
        %v1858 = vsel %vm1857, %v1853, %v1855
        %v1859 = vld [vmem:[%s1136] sm:$0xff]
        %v1860 = vld [vmem:[%s1136 + $0x8] sm:$0xff]
        %v1861 = vld [vmem:[%s1136 + $0x10] sm:$0xff]
        %v1862 = vld [vmem:[%s1136 + $0x18] sm:$0xff]
        %v1863 = vld [vmem:[%s1139] sm:$0x1]
        %v1865 = vperm.slane %v1863, 0
        %v1868 = vsel %vm1182, %v1858, 0
        %1870 = vmatpush.msra.mxu0 0.0
        %1871 = vmatpush.msra.mxu0 0.0
        %1872 = vmatpush.msra.mxu0 0.0
        %1873 = vmatpush.msra.mxu0 0.0
        %1874 = vmatpush.msra.mxu0 0.0
        %1875 = vmatpush.msra.mxu0 0.0
        %1876 = vmatpush.msra.mxu0 0.0
        %1877 = vmatpush.msra.mxu0 0.0
        %1878 = vmatpush.msra.mxu0 0.0
        %1879 = vmatpush.msra.mxu0 0.0
        %1880 = vmatpush.msra.mxu0 0.0
        %1881 = vmatpush.msra.mxu0 0.0
        %1882 = vmatpush.msra.mxu0 %v1862
        %1883 = vmatpush.msra.mxu0 %v1861
        %1884 = vmatpush.msra.mxu0 %v1860
        %1885 = vmatpush.msra.mxu0 %v1859
        %1886 = vmatmul.f32.gmra.mxu0 %v1868
        %v1887 = vpop.f32.mrf.mxu0
        %v1888 = vadd.f32 %v1865, %v1887
        %1889 = vdwg.mxu0
        %v1890 = vld [vmem:[#allocation5] sm:$0xff]
        %v1891 = vld [vmem:[#allocation5 + $0x8] sm:$0x3f]
        %v1892 = vld [vmem:[%s941] sm:$0xff]
        %v1893 = vld [vmem:[%s941 + $0x8] sm:$0xff]
        %v1894 = vld [vmem:[%s941 + $0x10] sm:$0xff]
        %v1895 = vld [vmem:[%s941 + $0x18] sm:$0xff]
        %v1896 = vld [vmem:[%s1142] sm:$0x1]
        %v1898 = vperm.slane %v1896, 0
        %v1901 = vsel %vm1182, %v1890, 0
        %v1904 = vsel %vm1182, %v1891, 0
        %1906 = vmatpush.msra.mxu0 0.0
        %1907 = vmatpush.msra.mxu0 0.0
        %1908 = vmatpush.msra.mxu0 0.0
        %1909 = vmatpush.msra.mxu0 0.0
        %1910 = vmatpush.msra.mxu0 0.0
        %1911 = vmatpush.msra.mxu0 0.0
        %1912 = vmatpush.msra.mxu0 0.0
        %1913 = vmatpush.msra.mxu0 0.0
        %1914 = vmatpush.msra.mxu0 0.0
        %1915 = vmatpush.msra.mxu0 0.0
        %1916 = vmatpush.msra.mxu0 0.0
        %1917 = vmatpush.msra.mxu0 0.0
        %1918 = vmatpush.msra.mxu0 %v1895
        %1919 = vmatpush.msra.mxu0 %v1894
        %1920 = vmatpush.msra.mxu0 %v1893
        %1921 = vmatpush.msra.mxu0 %v1892
        %1922 = vmatmul.f32.gmra.mxu0 %v1901
        %v1923 = vpop.f32.mrf.mxu0
        %v1924 = vadd.f32 %v1898, %v1923
        %1925 = vmatmul.f32.gmra.mxu0 %v1904
        %v1926 = vpop.f32.mrf.mxu0
        %v1927 = vadd.f32 %v1898, %v1926
        %1928 = vdwg.mxu0
        %v1930 = vsel %vm1209, %v1888, 0
        %v1933 = vsel %vm1209, %v1924, 0
        %1935 = vmatpush.xpose.msra.mxu0 0.0
        %1936 = vmatpush.xpose.msra.mxu0 0.0
        %1937 = vmatpush.xpose.msra.mxu0 0.0
        %1938 = vmatpush.xpose.msra.mxu0 0.0
        %1939 = vmatpush.xpose.msra.mxu0 0.0
        %1940 = vmatpush.xpose.msra.mxu0 0.0
        %1941 = vmatpush.xpose.msra.mxu0 0.0
        %1942 = vmatpush.xpose.msra.mxu0 0.0
        %1943 = vmatpush.xpose.msra.mxu0 0.0
        %1944 = vmatpush.xpose.msra.mxu0 0.0
        %1945 = vmatpush.xpose.msra.mxu0 0.0
        %1946 = vmatpush.xpose.msra.mxu0 0.0
        %1947 = vmatpush.xpose.msra.mxu0 0.0
        %1948 = vmatpush.xpose.msra.mxu0 0.0
        %1949 = vmatpush.xpose.msra.mxu0 0.0
        %1950 = vmatpush.xpose.msra.mxu0 %v1933
        %1951 = vmatmul.f32.gmra.mxu0 %v1930
        %v1952 = vpop.f32.mrf.mxu0
        %v1953 = vadd.f32 0.0, %v1952
        %1954 = vdwg.mxu0
        %v1955 = vmul.f32 %v1953, 0.35355338
        %vm1956 = vcmask 49152
        %v1957 = vsel %vm1956, %v1955, -inf
        %1958 = vmax.xlane.f32.xlu0 %v1957
        %v1959 = vpop.xlane.xlu0 %1958
        %v1960 = vsub.f32 %v1955, %v1959
        %v1961 = vmul.f32 %v1960, 1.442695
        %v1962 = vpow.pop %v1961
        %v1963 = vsel %vm1956, %v1962, 0.0
        %1964 = vadd.xlane.f32.xlu0 %v1963
        %v1965 = vpop.xlane.xlu0 %1964
        %v1966 = vrcp.pop %v1965
        %v1967 = vmul.f32 %v1962, %v1966
        %1968 = vrot.lane.b32.xlu0 %v1924, 96
        %v1969 = vpop.permute.xlu0 %1968
        %vm1970 = vcmask 56320
        %v1972 = vsel %vm1970, %v1967, 0
        %vm1974 = vcmask 1046528
        %v1975 = vsel %vm1974, %v1969, 0
        %1977 = vmatpush.msra.mxu0 0.0
        %1978 = vmatpush.msra.mxu0 0.0
        %1979 = vmatpush.msra.mxu0 0.0
        %1980 = vmatpush.msra.mxu0 0.0
        %1981 = vmatpush.msra.mxu0 0.0
        %1982 = vmatpush.msra.mxu0 0.0
        %1983 = vmatpush.msra.mxu0 0.0
        %1984 = vmatpush.msra.mxu0 0.0
        %1985 = vmatpush.msra.mxu0 0.0
        %1986 = vmatpush.msra.mxu0 0.0
        %1987 = vmatpush.msra.mxu0 0.0
        %1988 = vmatpush.msra.mxu0 0.0
        %1989 = vmatpush.msra.mxu0 0.0
        %1990 = vmatpush.msra.mxu0 0.0
        %1991 = vmatpush.msra.mxu0 0.0
        %1992 = vmatpush.msra.mxu0 %v1975
        %1993 = vmatmul.f32.gmra.mxu0 %v1972
        %v1994 = vpop.f32.mrf.mxu0
        %v1995 = vadd.f32 0.0, %v1994
        %1996 = vdwg.mxu0
        %1997 = vrot.lane.b32.xlu0 %v1888, 120
        %v1998 = vpop.permute.xlu0 %1997
        %1999 = vrot.lane.b32.xlu0 %v1924, 120
        %v2000 = vpop.permute.xlu0 %1999
        %v2001 = vsel %vm1209, %v1998, 0
        %v2003 = vsel %vm1209, %v2000, 0
        %2005 = vmatpush.xpose.msra.mxu0 0.0
        %2006 = vmatpush.xpose.msra.mxu0 0.0
        %2007 = vmatpush.xpose.msra.mxu0 0.0
        %2008 = vmatpush.xpose.msra.mxu0 0.0
        %2009 = vmatpush.xpose.msra.mxu0 0.0
        %2010 = vmatpush.xpose.msra.mxu0 0.0
        %2011 = vmatpush.xpose.msra.mxu0 0.0
        %2012 = vmatpush.xpose.msra.mxu0 0.0
        %2013 = vmatpush.xpose.msra.mxu0 0.0
        %2014 = vmatpush.xpose.msra.mxu0 0.0
        %2015 = vmatpush.xpose.msra.mxu0 0.0
        %2016 = vmatpush.xpose.msra.mxu0 0.0
        %2017 = vmatpush.xpose.msra.mxu0 0.0
        %2018 = vmatpush.xpose.msra.mxu0 0.0
        %2019 = vmatpush.xpose.msra.mxu0 0.0
        %2020 = vmatpush.xpose.msra.mxu0 %v2003
        %2021 = vmatmul.f32.gmra.mxu0 %v2001
        %v2022 = vpop.f32.mrf.mxu0
        %v2023 = vadd.f32 0.0, %v2022
        %2024 = vdwg.mxu0
        %v2025 = vmul.f32 %v2023, 0.35355338
        %v2026 = vsel %vm1956, %v2025, -inf
        %2027 = vmax.xlane.f32.xlu0 %v2026
        %v2028 = vpop.xlane.xlu0 %2027
        %v2029 = vsub.f32 %v2025, %v2028
        %v2030 = vmul.f32 %v2029, 1.442695
        %v2031 = vpow.pop %v2030
        %v2032 = vsel %vm1956, %v2031, 0.0
        %2033 = vadd.xlane.f32.xlu0 %v2032
        %v2034 = vpop.xlane.xlu0 %2033
        %v2035 = vrcp.pop %v2034
        %v2036 = vmul.f32 %v2031, %v2035
        %2037 = vrot.lane.b32.xlu0 %v1924, 88
        %v2038 = vpop.permute.xlu0 %2037
        %v2040 = vsel %vm1970, %v2036, 0
        %v2042 = vsel %vm1974, %v2038, 0
        %2044 = vmatpush.msra.mxu0 0.0
        %2045 = vmatpush.msra.mxu0 0.0
        %2046 = vmatpush.msra.mxu0 0.0
        %2047 = vmatpush.msra.mxu0 0.0
        %2048 = vmatpush.msra.mxu0 0.0
        %2049 = vmatpush.msra.mxu0 0.0
        %2050 = vmatpush.msra.mxu0 0.0
        %2051 = vmatpush.msra.mxu0 0.0
        %2052 = vmatpush.msra.mxu0 0.0
        %2053 = vmatpush.msra.mxu0 0.0
        %2054 = vmatpush.msra.mxu0 0.0
        %2055 = vmatpush.msra.mxu0 0.0
        %2056 = vmatpush.msra.mxu0 0.0
        %2057 = vmatpush.msra.mxu0 0.0
        %2058 = vmatpush.msra.mxu0 0.0
        %2059 = vmatpush.msra.mxu0 %v2042
        %2060 = vmatmul.f32.gmra.mxu0 %v2040
        %v2061 = vpop.f32.mrf.mxu0
        %v2062 = vadd.f32 0.0, %v2061
        %2063 = vdwg.mxu0
        %2064 = vrot.lane.b32.xlu0 %v1888, 112
        %v2065 = vpop.permute.xlu0 %2064
        %2066 = vrot.lane.b32.xlu0 %v1924, 112
        %v2067 = vpop.permute.xlu0 %2066
        %v2068 = vsel %vm1209, %v2065, 0
        %v2070 = vsel %vm1209, %v2067, 0
        %2072 = vmatpush.xpose.msra.mxu0 0.0
        %2073 = vmatpush.xpose.msra.mxu0 0.0
        %2074 = vmatpush.xpose.msra.mxu0 0.0
        %2075 = vmatpush.xpose.msra.mxu0 0.0
        %2076 = vmatpush.xpose.msra.mxu0 0.0
        %2077 = vmatpush.xpose.msra.mxu0 0.0
        %2078 = vmatpush.xpose.msra.mxu0 0.0
        %2079 = vmatpush.xpose.msra.mxu0 0.0
        %2080 = vmatpush.xpose.msra.mxu0 0.0
        %2081 = vmatpush.xpose.msra.mxu0 0.0
        %2082 = vmatpush.xpose.msra.mxu0 0.0
        %2083 = vmatpush.xpose.msra.mxu0 0.0
        %2084 = vmatpush.xpose.msra.mxu0 0.0
        %2085 = vmatpush.xpose.msra.mxu0 0.0
        %2086 = vmatpush.xpose.msra.mxu0 0.0
        %2087 = vmatpush.xpose.msra.mxu0 %v2070
        %2088 = vmatmul.f32.gmra.mxu0 %v2068
        %v2089 = vpop.f32.mrf.mxu0
        %v2090 = vadd.f32 0.0, %v2089
        %2091 = vdwg.mxu0
        %v2092 = vmul.f32 %v2090, 0.35355338
        %v2093 = vsel %vm1956, %v2092, -inf
        %2094 = vmax.xlane.f32.xlu0 %v2093
        %v2095 = vpop.xlane.xlu0 %2094
        %v2096 = vsub.f32 %v2092, %v2095
        %v2097 = vmul.f32 %v2096, 1.442695
        %v2098 = vpow.pop %v2097
        %v2099 = vsel %vm1956, %v2098, 0.0
        %2100 = vadd.xlane.f32.xlu0 %v2099
        %v2101 = vpop.xlane.xlu0 %2100
        %v2102 = vrcp.pop %v2101
        %v2103 = vmul.f32 %v2098, %v2102
        %2104 = vrot.lane.b32.xlu0 %v1924, 80
        %v2105 = vpop.permute.xlu0 %2104
        %v2107 = vsel %vm1970, %v2103, 0
        %v2109 = vsel %vm1974, %v2105, 0
        %2111 = vmatpush.msra.mxu0 0.0
        %2112 = vmatpush.msra.mxu0 0.0
        %2113 = vmatpush.msra.mxu0 0.0
        %2114 = vmatpush.msra.mxu0 0.0
        %2115 = vmatpush.msra.mxu0 0.0
        %2116 = vmatpush.msra.mxu0 0.0
        %2117 = vmatpush.msra.mxu0 0.0
        %2118 = vmatpush.msra.mxu0 0.0
        %2119 = vmatpush.msra.mxu0 0.0
        %2120 = vmatpush.msra.mxu0 0.0
        %2121 = vmatpush.msra.mxu0 0.0
        %2122 = vmatpush.msra.mxu0 0.0
        %2123 = vmatpush.msra.mxu0 0.0
        %2124 = vmatpush.msra.mxu0 0.0
        %2125 = vmatpush.msra.mxu0 0.0
        %2126 = vmatpush.msra.mxu0 %v2109
        %2127 = vmatmul.f32.gmra.mxu0 %v2107
        %v2128 = vpop.f32.mrf.mxu0
        %v2129 = vadd.f32 0.0, %v2128
        %2130 = vdwg.mxu0
        %2131 = vrot.lane.b32.xlu0 %v1888, 104
        %v2132 = vpop.permute.xlu0 %2131
        %2133 = vrot.lane.b32.xlu0 %v1924, 104
        %v2134 = vpop.permute.xlu0 %2133
        %v2135 = vsel %vm1209, %v2132, 0
        %v2137 = vsel %vm1209, %v2134, 0
        %2139 = vmatpush.xpose.msra.mxu0 0.0
        %2140 = vmatpush.xpose.msra.mxu0 0.0
        %2141 = vmatpush.xpose.msra.mxu0 0.0
        %2142 = vmatpush.xpose.msra.mxu0 0.0
        %2143 = vmatpush.xpose.msra.mxu0 0.0
        %2144 = vmatpush.xpose.msra.mxu0 0.0
        %2145 = vmatpush.xpose.msra.mxu0 0.0
        %2146 = vmatpush.xpose.msra.mxu0 0.0
        %2147 = vmatpush.xpose.msra.mxu0 0.0
        %2148 = vmatpush.xpose.msra.mxu0 0.0
        %2149 = vmatpush.xpose.msra.mxu0 0.0
        %2150 = vmatpush.xpose.msra.mxu0 0.0
        %2151 = vmatpush.xpose.msra.mxu0 0.0
        %2152 = vmatpush.xpose.msra.mxu0 0.0
        %2153 = vmatpush.xpose.msra.mxu0 0.0
        %2154 = vmatpush.xpose.msra.mxu0 %v2137
        %2155 = vmatmul.f32.gmra.mxu0 %v2135
        %v2156 = vpop.f32.mrf.mxu0
        %v2157 = vadd.f32 0.0, %v2156
        %2158 = vdwg.mxu0
        %v2159 = vmul.f32 %v2157, 0.35355338
        %v2160 = vsel %vm1956, %v2159, -inf
        %2161 = vmax.xlane.f32.xlu0 %v2160
        %v2162 = vpop.xlane.xlu0 %2161
        %v2163 = vsub.f32 %v2159, %v2162
        %v2164 = vmul.f32 %v2163, 1.442695
        %v2165 = vpow.pop %v2164
        %v2166 = vsel %vm1956, %v2165, 0.0
        %2167 = vadd.xlane.f32.xlu0 %v2166
        %v2168 = vpop.xlane.xlu0 %2167
        %v2169 = vrcp.pop %v2168
        %v2170 = vmul.f32 %v2165, %v2169
        %2171 = vrot.lane.b32.xlu0 %v1924, 72
        %v2172 = vpop.permute.xlu0 %2171
        %v2174 = vsel %vm1970, %v2170, 0
        %v2176 = vsel %vm1974, %v2172, 0
        %2178 = vmatpush.msra.mxu0 0.0
        %2179 = vmatpush.msra.mxu0 0.0
        %2180 = vmatpush.msra.mxu0 0.0
        %2181 = vmatpush.msra.mxu0 0.0
        %2182 = vmatpush.msra.mxu0 0.0
        %2183 = vmatpush.msra.mxu0 0.0
        %2184 = vmatpush.msra.mxu0 0.0
        %2185 = vmatpush.msra.mxu0 0.0
        %2186 = vmatpush.msra.mxu0 0.0
        %2187 = vmatpush.msra.mxu0 0.0
        %2188 = vmatpush.msra.mxu0 0.0
        %2189 = vmatpush.msra.mxu0 0.0
        %2190 = vmatpush.msra.mxu0 0.0
        %2191 = vmatpush.msra.mxu0 0.0
        %2192 = vmatpush.msra.mxu0 0.0
        %2193 = vmatpush.msra.mxu0 %v2176
        %2194 = vmatmul.f32.gmra.mxu0 %v2174
        %v2195 = vpop.f32.mrf.mxu0
        %v2196 = vadd.f32 0.0, %v2195
        %2197 = vdwg.mxu0
        %2199 = vrot.lane.b32.xlu0 %v2062, 8
        %v2200 = vpop.permute.xlu0 %2199
        %2203 = vrot.lane.b32.xlu0 %v2129, 16
        %v2204 = vpop.permute.xlu0 %2203
        %2207 = vrot.lane.b32.xlu0 %v2196, 24
        %v2208 = vpop.permute.xlu0 %2207
        %v2210 = vsel %vm1209, %v1995, %v2200
        %v2211 = vsel %vm1490, %v2210, %v2204
        %v2212 = vsel %vm1492, %v2211, %v2208
        %v2213 = vrot.slane %v1888, 1
        %v2215 = vrot.slane %v1924, 7
        %v2216 = vrot.slane %v1927, 7
        %v2217 = vsel %vm1857, %v2215, %v2216
        %v2218 = vsel %vm1209, %v2213, 0
        %v2220 = vsel %vm1209, %v2217, 0
        %2222 = vmatpush.xpose.msra.mxu0 0.0
        %2223 = vmatpush.xpose.msra.mxu0 0.0
        %2224 = vmatpush.xpose.msra.mxu0 0.0
        %2225 = vmatpush.xpose.msra.mxu0 0.0
        %2226 = vmatpush.xpose.msra.mxu0 0.0
        %2227 = vmatpush.xpose.msra.mxu0 0.0
        %2228 = vmatpush.xpose.msra.mxu0 0.0
        %2229 = vmatpush.xpose.msra.mxu0 0.0
        %2230 = vmatpush.xpose.msra.mxu0 0.0
        %2231 = vmatpush.xpose.msra.mxu0 0.0
        %2232 = vmatpush.xpose.msra.mxu0 0.0
        %2233 = vmatpush.xpose.msra.mxu0 0.0
        %2234 = vmatpush.xpose.msra.mxu0 0.0
        %2235 = vmatpush.xpose.msra.mxu0 0.0
        %2236 = vmatpush.xpose.msra.mxu0 0.0
        %2237 = vmatpush.xpose.msra.mxu0 %v2220
        %2238 = vmatmul.f32.gmra.mxu0 %v2218
        %v2239 = vpop.f32.mrf.mxu0
        %v2240 = vadd.f32 0.0, %v2239
        %2241 = vdwg.mxu0
        %v2242 = vmul.f32 %v2240, 0.35355338
        %v2243 = vsel %vm1956, %v2242, -inf
        %2244 = vmax.xlane.f32.xlu0 %v2243
        %v2245 = vpop.xlane.xlu0 %2244
        %v2246 = vsub.f32 %v2242, %v2245
        %v2247 = vmul.f32 %v2246, 1.442695
        %v2248 = vpow.pop %v2247
        %v2249 = vsel %vm1956, %v2248, 0.0
        %2250 = vadd.xlane.f32.xlu0 %v2249
        %v2251 = vpop.xlane.xlu0 %2250
        %v2252 = vrcp.pop %v2251
        %v2253 = vmul.f32 %v2248, %v2252
        %2254 = vrot.lane.b32.xlu0 %v2217, 96
        %v2255 = vpop.permute.xlu0 %2254
        %v2257 = vsel %vm1970, %v2253, 0
        %v2259 = vsel %vm1974, %v2255, 0
        %2261 = vmatpush.msra.mxu0 0.0
        %2262 = vmatpush.msra.mxu0 0.0
        %2263 = vmatpush.msra.mxu0 0.0
        %2264 = vmatpush.msra.mxu0 0.0
        %2265 = vmatpush.msra.mxu0 0.0
        %2266 = vmatpush.msra.mxu0 0.0
        %2267 = vmatpush.msra.mxu0 0.0
        %2268 = vmatpush.msra.mxu0 0.0
        %2269 = vmatpush.msra.mxu0 0.0
        %2270 = vmatpush.msra.mxu0 0.0
        %2271 = vmatpush.msra.mxu0 0.0
        %2272 = vmatpush.msra.mxu0 0.0
        %2273 = vmatpush.msra.mxu0 0.0
        %2274 = vmatpush.msra.mxu0 0.0
        %2275 = vmatpush.msra.mxu0 0.0
        %2276 = vmatpush.msra.mxu0 %v2259
        %2277 = vmatmul.f32.gmra.mxu0 %v2257
        %v2278 = vpop.f32.mrf.mxu0
        %v2279 = vadd.f32 0.0, %v2278
        %2280 = vdwg.mxu0
        %2281 = vrot.lane.b32.xlu0 %v2213, 120
        %v2282 = vpop.permute.xlu0 %2281
        %2283 = vrot.lane.b32.xlu0 %v2217, 120
        %v2284 = vpop.permute.xlu0 %2283
        %v2285 = vsel %vm1209, %v2282, 0
        %v2287 = vsel %vm1209, %v2284, 0
        %2289 = vmatpush.xpose.msra.mxu0 0.0
        %2290 = vmatpush.xpose.msra.mxu0 0.0
        %2291 = vmatpush.xpose.msra.mxu0 0.0
        %2292 = vmatpush.xpose.msra.mxu0 0.0
        %2293 = vmatpush.xpose.msra.mxu0 0.0
        %2294 = vmatpush.xpose.msra.mxu0 0.0
        %2295 = vmatpush.xpose.msra.mxu0 0.0
        %2296 = vmatpush.xpose.msra.mxu0 0.0
        %2297 = vmatpush.xpose.msra.mxu0 0.0
        %2298 = vmatpush.xpose.msra.mxu0 0.0
        %2299 = vmatpush.xpose.msra.mxu0 0.0
        %2300 = vmatpush.xpose.msra.mxu0 0.0
        %2301 = vmatpush.xpose.msra.mxu0 0.0
        %2302 = vmatpush.xpose.msra.mxu0 0.0
        %2303 = vmatpush.xpose.msra.mxu0 0.0
        %2304 = vmatpush.xpose.msra.mxu0 %v2287
        %2305 = vmatmul.f32.gmra.mxu0 %v2285
        %v2306 = vpop.f32.mrf.mxu0
        %v2307 = vadd.f32 0.0, %v2306
        %2308 = vdwg.mxu0
        %v2309 = vmul.f32 %v2307, 0.35355338
        %v2310 = vsel %vm1956, %v2309, -inf
        %2311 = vmax.xlane.f32.xlu0 %v2310
        %v2312 = vpop.xlane.xlu0 %2311
        %v2313 = vsub.f32 %v2309, %v2312
        %v2314 = vmul.f32 %v2313, 1.442695
        %v2315 = vpow.pop %v2314
        %v2316 = vsel %vm1956, %v2315, 0.0
        %2317 = vadd.xlane.f32.xlu0 %v2316
        %v2318 = vpop.xlane.xlu0 %2317
        %v2319 = vrcp.pop %v2318
        %v2320 = vmul.f32 %v2315, %v2319
        %2321 = vrot.lane.b32.xlu0 %v2217, 88
        %v2322 = vpop.permute.xlu0 %2321
        %v2324 = vsel %vm1970, %v2320, 0
        %v2326 = vsel %vm1974, %v2322, 0
        %2328 = vmatpush.msra.mxu0 0.0
        %2329 = vmatpush.msra.mxu0 0.0
        %2330 = vmatpush.msra.mxu0 0.0
        %2331 = vmatpush.msra.mxu0 0.0
        %2332 = vmatpush.msra.mxu0 0.0
        %2333 = vmatpush.msra.mxu0 0.0
        %2334 = vmatpush.msra.mxu0 0.0
        %2335 = vmatpush.msra.mxu0 0.0
        %2336 = vmatpush.msra.mxu0 0.0
        %2337 = vmatpush.msra.mxu0 0.0
        %2338 = vmatpush.msra.mxu0 0.0
        %2339 = vmatpush.msra.mxu0 0.0
        %2340 = vmatpush.msra.mxu0 0.0
        %2341 = vmatpush.msra.mxu0 0.0
        %2342 = vmatpush.msra.mxu0 0.0
        %2343 = vmatpush.msra.mxu0 %v2326
        %2344 = vmatmul.f32.gmra.mxu0 %v2324
        %v2345 = vpop.f32.mrf.mxu0
        %v2346 = vadd.f32 0.0, %v2345
        %2347 = vdwg.mxu0
        %2348 = vrot.lane.b32.xlu0 %v2213, 112
        %v2349 = vpop.permute.xlu0 %2348
        %2350 = vrot.lane.b32.xlu0 %v2217, 112
        %v2351 = vpop.permute.xlu0 %2350
        %v2352 = vsel %vm1209, %v2349, 0
        %v2354 = vsel %vm1209, %v2351, 0
        %2356 = vmatpush.xpose.msra.mxu0 0.0
        %2357 = vmatpush.xpose.msra.mxu0 0.0
        %2358 = vmatpush.xpose.msra.mxu0 0.0
        %2359 = vmatpush.xpose.msra.mxu0 0.0
        %2360 = vmatpush.xpose.msra.mxu0 0.0
        %2361 = vmatpush.xpose.msra.mxu0 0.0
        %2362 = vmatpush.xpose.msra.mxu0 0.0
        %2363 = vmatpush.xpose.msra.mxu0 0.0
        %2364 = vmatpush.xpose.msra.mxu0 0.0
        %2365 = vmatpush.xpose.msra.mxu0 0.0
        %2366 = vmatpush.xpose.msra.mxu0 0.0
        %2367 = vmatpush.xpose.msra.mxu0 0.0
        %2368 = vmatpush.xpose.msra.mxu0 0.0
        %2369 = vmatpush.xpose.msra.mxu0 0.0
        %2370 = vmatpush.xpose.msra.mxu0 0.0
        %2371 = vmatpush.xpose.msra.mxu0 %v2354
        %2372 = vmatmul.f32.gmra.mxu0 %v2352
        %v2373 = vpop.f32.mrf.mxu0
        %v2374 = vadd.f32 0.0, %v2373
        %2375 = vdwg.mxu0
        %v2376 = vmul.f32 %v2374, 0.35355338
        %v2377 = vsel %vm1956, %v2376, -inf
        %2378 = vmax.xlane.f32.xlu0 %v2377
        %v2379 = vpop.xlane.xlu0 %2378
        %v2380 = vsub.f32 %v2376, %v2379
        %v2381 = vmul.f32 %v2380, 1.442695
        %v2382 = vpow.pop %v2381
        %v2383 = vsel %vm1956, %v2382, 0.0
        %2384 = vadd.xlane.f32.xlu0 %v2383
        %v2385 = vpop.xlane.xlu0 %2384
        %v2386 = vrcp.pop %v2385
        %v2387 = vmul.f32 %v2382, %v2386
        %2388 = vrot.lane.b32.xlu0 %v2217, 80
        %v2389 = vpop.permute.xlu0 %2388
        %v2391 = vsel %vm1970, %v2387, 0
        %v2393 = vsel %vm1974, %v2389, 0
        %2395 = vmatpush.msra.mxu0 0.0
        %2396 = vmatpush.msra.mxu0 0.0
        %2397 = vmatpush.msra.mxu0 0.0
        %2398 = vmatpush.msra.mxu0 0.0
        %2399 = vmatpush.msra.mxu0 0.0
        %2400 = vmatpush.msra.mxu0 0.0
        %2401 = vmatpush.msra.mxu0 0.0
        %2402 = vmatpush.msra.mxu0 0.0
        %2403 = vmatpush.msra.mxu0 0.0
        %2404 = vmatpush.msra.mxu0 0.0
        %2405 = vmatpush.msra.mxu0 0.0
        %2406 = vmatpush.msra.mxu0 0.0
        %2407 = vmatpush.msra.mxu0 0.0
        %2408 = vmatpush.msra.mxu0 0.0
        %2409 = vmatpush.msra.mxu0 0.0
        %2410 = vmatpush.msra.mxu0 %v2393
        %2411 = vmatmul.f32.gmra.mxu0 %v2391
        %v2412 = vpop.f32.mrf.mxu0
        %v2413 = vadd.f32 0.0, %v2412
        %2414 = vdwg.mxu0
        %2415 = vrot.lane.b32.xlu0 %v2213, 104
        %v2416 = vpop.permute.xlu0 %2415
        %2417 = vrot.lane.b32.xlu0 %v2217, 104
        %v2418 = vpop.permute.xlu0 %2417
        %v2419 = vsel %vm1209, %v2416, 0
        %v2421 = vsel %vm1209, %v2418, 0
        %2423 = vmatpush.xpose.msra.mxu0 0.0
        %2424 = vmatpush.xpose.msra.mxu0 0.0
        %2425 = vmatpush.xpose.msra.mxu0 0.0
        %2426 = vmatpush.xpose.msra.mxu0 0.0
        %2427 = vmatpush.xpose.msra.mxu0 0.0
        %2428 = vmatpush.xpose.msra.mxu0 0.0
        %2429 = vmatpush.xpose.msra.mxu0 0.0
        %2430 = vmatpush.xpose.msra.mxu0 0.0
        %2431 = vmatpush.xpose.msra.mxu0 0.0
        %2432 = vmatpush.xpose.msra.mxu0 0.0
        %2433 = vmatpush.xpose.msra.mxu0 0.0
        %2434 = vmatpush.xpose.msra.mxu0 0.0
        %2435 = vmatpush.xpose.msra.mxu0 0.0
        %2436 = vmatpush.xpose.msra.mxu0 0.0
        %2437 = vmatpush.xpose.msra.mxu0 0.0
        %2438 = vmatpush.xpose.msra.mxu0 %v2421
        %2439 = vmatmul.f32.gmra.mxu0 %v2419
        %v2440 = vpop.f32.mrf.mxu0
        %v2441 = vadd.f32 0.0, %v2440
        %2442 = vdwg.mxu0
        %v2443 = vmul.f32 %v2441, 0.35355338
        %v2444 = vsel %vm1956, %v2443, -inf
        %2445 = vmax.xlane.f32.xlu0 %v2444
        %v2446 = vpop.xlane.xlu0 %2445
        %v2447 = vsub.f32 %v2443, %v2446
        %v2448 = vmul.f32 %v2447, 1.442695
        %v2449 = vpow.pop %v2448
        %v2450 = vsel %vm1956, %v2449, 0.0
        %2451 = vadd.xlane.f32.xlu0 %v2450
        %v2452 = vpop.xlane.xlu0 %2451
        %v2453 = vrcp.pop %v2452
        %v2454 = vmul.f32 %v2449, %v2453
        %2455 = vrot.lane.b32.xlu0 %v2217, 72
        %v2456 = vpop.permute.xlu0 %2455
        %v2458 = vsel %vm1970, %v2454, 0
        %v2460 = vsel %vm1974, %v2456, 0
        %2462 = vmatpush.msra.mxu0 0.0
        %2463 = vmatpush.msra.mxu0 0.0
        %2464 = vmatpush.msra.mxu0 0.0
        %2465 = vmatpush.msra.mxu0 0.0
        %2466 = vmatpush.msra.mxu0 0.0
        %2467 = vmatpush.msra.mxu0 0.0
        %2468 = vmatpush.msra.mxu0 0.0
        %2469 = vmatpush.msra.mxu0 0.0
        %2470 = vmatpush.msra.mxu0 0.0
        %2471 = vmatpush.msra.mxu0 0.0
        %2472 = vmatpush.msra.mxu0 0.0
        %2473 = vmatpush.msra.mxu0 0.0
        %2474 = vmatpush.msra.mxu0 0.0
        %2475 = vmatpush.msra.mxu0 0.0
        %2476 = vmatpush.msra.mxu0 0.0
        %2477 = vmatpush.msra.mxu0 %v2460
        %2478 = vmatmul.f32.gmra.mxu0 %v2458
        %v2479 = vpop.f32.mrf.mxu0
        %v2480 = vadd.f32 0.0, %v2479
        %2481 = vdwg.mxu0
        %2483 = vrot.lane.b32.xlu0 %v2346, 8
        %v2484 = vpop.permute.xlu0 %2483
        %2487 = vrot.lane.b32.xlu0 %v2413, 16
        %v2488 = vpop.permute.xlu0 %2487
        %2491 = vrot.lane.b32.xlu0 %v2480, 24
        %v2492 = vpop.permute.xlu0 %2491
        %v2494 = vsel %vm1209, %v2279, %v2484
        %v2495 = vsel %vm1490, %v2494, %v2488
        %v2496 = vsel %vm1492, %v2495, %v2492
        %v2498 = vrot.slane %v2496, 7
        %v2500 = vsel %vm1857, %v2212, %v2498
        %v2501 = vld [vmem:[%s951] sm:$0xff]
        %v2502 = vld [vmem:[%s951 + $0x8] sm:$0xff]
        %v2503 = vld [vmem:[%s951 + $0x10] sm:$0xff]
        %v2504 = vld [vmem:[%s951 + $0x18] sm:$0xff]
        %v2505 = vld [vmem:[%s1145] sm:$0x1]
        %v2507 = vperm.slane %v2505, 0
        %v2510 = vsel %vm1182, %v2500, 0
        %2512 = vmatpush.msra.mxu0 0.0
        %2513 = vmatpush.msra.mxu0 0.0
        %2514 = vmatpush.msra.mxu0 0.0
        %2515 = vmatpush.msra.mxu0 0.0
        %2516 = vmatpush.msra.mxu0 0.0
        %2517 = vmatpush.msra.mxu0 0.0
        %2518 = vmatpush.msra.mxu0 0.0
        %2519 = vmatpush.msra.mxu0 0.0
        %2520 = vmatpush.msra.mxu0 0.0
        %2521 = vmatpush.msra.mxu0 0.0
        %2522 = vmatpush.msra.mxu0 0.0
        %2523 = vmatpush.msra.mxu0 0.0
        %2524 = vmatpush.msra.mxu0 %v2504
        %2525 = vmatpush.msra.mxu0 %v2503
        %2526 = vmatpush.msra.mxu0 %v2502
        %2527 = vmatpush.msra.mxu0 %v2501
        %2528 = vmatmul.f32.gmra.mxu0 %v2510
        %v2529 = vpop.f32.mrf.mxu0
        %v2530 = vadd.f32 %v2507, %v2529
        %2531 = vdwg.mxu0
        %v2532 = vadd.f32 %v1858, %v2530
        %v2533 = vlaneseq
        %v2534 = vshrl.u32 %v2533, 7
        %vm2535 = vcmp.eq.s32.totalorder %v2534, 2
        %v2536 = vperm.slane %v2532, 0
        %v2537 = vsel %vm2535, %v2536, %v1851
        %vm2538 = vcmp.eq.s32.totalorder %v2534, 5
        %v2539 = vperm.slane %v2532, 1
        %v2540 = vsel %vm2538, %v2539, %v2537
        %v2541 = vld [vmem:[%s969] sm:$0x1]
        %v2542 = vld [vmem:[%s1151] sm:$0x1]
        %v2543 = vsel %vm1814, %v2540, 0.0
        %2544 = vadd.xlane.f32.xlu0 %v2543
        %v2545 = vpop.xlane.xlu0 %2544
        %v2546 = vmul.f32 %v2545, %v1824
        %v2547 = vsub.f32 %v2540, %v2546
        %v2548 = vmul.f32 %v2547, %v2547
        %v2549 = vsel %vm1814, %v2548, 0.0
        %2550 = vadd.xlane.f32.xlu0 %v2549
        %v2551 = vpop.xlane.xlu0 %2550
        %v2552 = vmul.f32 %v2551, %v1824
        %v2553 = vadd.f32 %v2552, 1e-05
        %v2554 = vrsqrt.pop %v2553
        %v2555 = vmul.f32 %v2554, %v2553
        %v2556 = vmul.f32 %v2555, %v2554
        %v2557 = vmul.f32 0.5, %v2556
        %v2558 = vsub.f32 1.5, %v2557
        %v2559 = vmul.f32 %v2554, %v2558
        %vm2560 = vweird.f32 %v2553
        %vm2561 = vweird.f32 %v2554
        %vm2562 = vmor %vm2560, %vm2561
        %v2563 = vsel %vm2562, %v2554, %v2559
        %v2564 = vmul.f32 %v2547, %v2563
        %v2566 = vperm.slane %v2541, 0
        %v2568 = vmul.f32 %v2564, %v2566
        %v2570 = vperm.slane %v2542, 0
        %v2572 = vadd.f32 %v2568, %v2570
        %v2573 = vld [vmem:[%s988] sm:$0xff]
        %v2574 = vld [vmem:[%s988 + $0x8] sm:$0xff]
        %v2575 = vld [vmem:[%s988 + $0x10] sm:$0xff]
        %v2576 = vld [vmem:[%s988 + $0x18] sm:$0xff]
        %v2577 = vld [vmem:[%s1157] sm:$0x1]
        %v2579 = vperm.slane %v2577, 0
        %v2582 = vsel %vm1182, %v2572, 0
        %2584 = vmatpush.msra.mxu0 0.0
        %2585 = vmatpush.msra.mxu0 0.0
        %2586 = vmatpush.msra.mxu0 0.0
        %2587 = vmatpush.msra.mxu0 0.0
        %2588 = vmatpush.msra.mxu0 0.0
        %2589 = vmatpush.msra.mxu0 0.0
        %2590 = vmatpush.msra.mxu0 0.0
        %2591 = vmatpush.msra.mxu0 0.0
        %2592 = vmatpush.msra.mxu0 0.0
        %2593 = vmatpush.msra.mxu0 0.0
        %2594 = vmatpush.msra.mxu0 0.0
        %2595 = vmatpush.msra.mxu0 0.0
        %2596 = vmatpush.msra.mxu0 %v2576
        %2597 = vmatpush.msra.mxu0 %v2575
        %2598 = vmatpush.msra.mxu0 %v2574
        %2599 = vmatpush.msra.mxu0 %v2573
        %2600 = vmatmul.f32.gmra.mxu0 %v2582
        %v2601 = vpop.f32.mrf.mxu0
        %v2602 = vadd.f32 %v2579, %v2601
        %2603 = vdwg.mxu0
        %v2604 = vmul.f32 %v2602, 0.5
        %v2605 = vmul.f32 %v2602, 0.044715
        %v2606 = vmul.f32 %v2605, %v2602
        %v2607 = vmul.f32 %v2606, %v2602
        %v2608 = vadd.f32 %v2602, %v2607
        %v2609 = vmul.f32 %v2608, 0.7978846
        %v2610 = vtanh.pop %v2609
        %v2611 = vadd.f32 %v2610, 1.0
        %v2612 = vmul.f32 %v2604, %v2611
        %v2613 = vld [vmem:[%s1162] sm:$0xff]
        %v2614 = vld [vmem:[%s1162 + $0x8] sm:$0xff]
        %v2615 = vld [vmem:[%s1162 + $0x10] sm:$0xff]
        %v2616 = vld [vmem:[%s1162 + $0x18] sm:$0xff]
        %v2617 = vld [vmem:[%s1162 + $0x20] sm:$0xff]
        %v2618 = vld [vmem:[%s1162 + $0x28] sm:$0xff]
        %v2619 = vld [vmem:[%s1162 + $0x30] sm:$0xff]
        %v2620 = vld [vmem:[%s1162 + $0x38] sm:$0xff]
        %v2621 = vld [vmem:[%s1165] sm:$0x1]
        %v2623 = vperm.slane %v2621, 0
        %vm2625 = vcmask 523264
        %v2627 = vsel %vm2625, %v2612, 0
        %2629 = vmatpush.msra.mxu0 0.0
        %2630 = vmatpush.msra.mxu0 0.0
        %2631 = vmatpush.msra.mxu0 0.0
        %2632 = vmatpush.msra.mxu0 0.0
        %2633 = vmatpush.msra.mxu0 0.0
        %2634 = vmatpush.msra.mxu0 0.0
        %2635 = vmatpush.msra.mxu0 0.0
        %2636 = vmatpush.msra.mxu0 0.0
        %2637 = vmatpush.msra.mxu0 %v2620
        %2638 = vmatpush.msra.mxu0 %v2619
        %2639 = vmatpush.msra.mxu0 %v2618
        %2640 = vmatpush.msra.mxu0 %v2617
        %2641 = vmatpush.msra.mxu0 %v2616
        %2642 = vmatpush.msra.mxu0 %v2615
        %2643 = vmatpush.msra.mxu0 %v2614
        %2644 = vmatpush.msra.mxu0 %v2613
        %2645 = vmatmul.f32.gmra.mxu0 %v2627
        %v2646 = vpop.f32.mrf.mxu0
        %v2647 = vadd.f32 %v2623, %v2646
        %2648 = vdwg.mxu0
        %v2649 = vadd.f32 %v2572, %v2647
        %v2650 = vld [vmem:[%s1154] sm:$0x1]
        %v2651 = vld [vmem:[%s978] sm:$0x1]
        %v2652 = vsel %vm1814, %v2649, 0.0
        %2653 = vadd.xlane.f32.xlu0 %v2652
        %v2654 = vpop.xlane.xlu0 %2653
        %v2655 = vmul.f32 %v2654, %v1824
        %v2656 = vsub.f32 %v2649, %v2655
        %v2657 = vmul.f32 %v2656, %v2656
        %v2658 = vsel %vm1814, %v2657, 0.0
        %2659 = vadd.xlane.f32.xlu0 %v2658
        %v2660 = vpop.xlane.xlu0 %2659
        %v2661 = vmul.f32 %v2660, %v1824
        %v2662 = vadd.f32 %v2661, 1e-05
        %v2663 = vrsqrt.pop %v2662
        %v2664 = vmul.f32 %v2663, %v2662
        %v2665 = vmul.f32 %v2664, %v2663
        %v2666 = vmul.f32 0.5, %v2665
        %v2667 = vsub.f32 1.5, %v2666
        %v2668 = vmul.f32 %v2663, %v2667
        %vm2669 = vweird.f32 %v2662
        %vm2670 = vweird.f32 %v2663
        %vm2671 = vmor %vm2669, %vm2670
        %v2672 = vsel %vm2671, %v2663, %v2668
        %v2673 = vmul.f32 %v2656, %v2672
        %v2675 = vperm.slane %v2650, 0
        %v2677 = vmul.f32 %v2673, %v2675
        %v2679 = vperm.slane %v2651, 0
        %v2681 = vadd.f32 %v2677, %v2679
        %2682 = vst.msk [vmem:[#allocation14] sm:$0x3f] %vm1814, %v2681
        // Predicated region
        $region149: #{tpu_custom_call.1} parent=107 // pred_check
          %p2683 = pneg %p638
        $region150: #{tpu_custom_call.1} parent=107 // pred_check_branch
          %2685 = sbr.rel (%p2683) target = $region152
        $region151: #{tpu_custom_call.1} parent=107 // pred_region
          %2687 = vsyncadd [#allocation4], 0
          %s2688 = smul.addr %s40, 8
          %s2689 = scalar_lea.hbm %s22, %s2688
          %s2691 = sshll.u32 [#allocation14], 4
          %s2692 = int_to_ptr.vmem [resolvable:$true] %s2691
          %s2693 = sshll.u32 %s2689, 4
          %s2694 = int_to_ptr.hbm [resolvable:$true] %s2693
          %2696 = dma.vmem_to_hbm [thread:$0]  %s2692, 128, %s2694, [#allocation4]
        $region152: #{tpu_custom_call.1} parent=107 // pred_fallthru
          _
        // Predicated region
        $region153: #{tpu_custom_call.1} parent=107 // pred_check
          %p2697 = pneg %p638
        $region154: #{tpu_custom_call.1} parent=107 // pred_check_branch
          %2699 = sbr.rel (%p2697) target = $region156
        $region155: #{tpu_custom_call.1} parent=107 // pred_region
          %2701 = dma.done [#allocation4], 128
        $region156: #{tpu_custom_call.1} parent=107 // pred_fallthru
          _
      $region108: #{tpu_custom_call.1} parent=5 // pred_fallthru
        _
      %p2702 = scmp.le.s32.totalorder 2, %s31
      // Predicated region
      $region157: #{tpu_custom_call.1} parent=5 // pred_check
        %p2703 = pneg %p2702
      $region158: #{tpu_custom_call.1} parent=5 // pred_check_branch
        %2705 = sbr.rel (%p2703) target = $region160
      $region159: #{tpu_custom_call.1} parent=5 // pred_region
        %s2706 = ssub.s32 %s31, 2
      $region160: #{tpu_custom_call.1} parent=5 // pred_fallthru
        _
    $region6: #{tpu_custom_call.1} parent=1 // loop_footer
      %s35 = sadd.s32 1, %s31
    $region7: #{tpu_custom_call.1} parent=1 // loop_footer_branch
      %30 = sbr.rel target = $region3
    $region8: #{tpu_custom_call.1} parent=1 // loop_exit
      _
    %2707 = vsyncpa [#allocation3], 1
    %s2708 = scalar_lea.sflag [#allocation3], 1
    %2709 = vsyncpa %s2708, 1
    %2710 = vsyncpa [#allocation6], 1
    %2711 = vsyncpa [#allocation4], 1
    %s2712 = scalar_lea.sflag [#allocation4], 1
    %2713 = vsyncpa %s2712, 1

</llo_original>
